<compile_context>
chip_gen: v5e
topology: v5e:2x2
jax: 0.10.0
libtpu: 0.0.40
codegen_flags: <defaults>
</compile_context>

<pallas_src>
import numpy as np

import jax
import jax.numpy as jnp
from jax.experimental import pallas as pl
from jax.experimental.pallas import tpu as pltpu


# --------------------------- fused forward kernel --------------------------- #

def _cnn_fused_kernel(x_ref,
                      a1, b1, a2, b2, a3, b3,      # banded conv weights + bias rows
                      w1, c1, w2, c2, w3, c3,      # fc1 / fc2 / fc3 (lane padded)
                      o_ref,
                      p2, p3, p4,                  # bf16 activation scratch
                      acc1, acc2, acc3):           # f32 conv accumulators
    f32, bf16 = jnp.float32, jnp.bfloat16
    Bt = o_ref.shape[0]                            # images per grid step

    def conv_pool(src_ref, a_ref, brow_ref, acc_ref, dst_ref, dst_off,
                  H, Wo, Cout):
        """3x3 conv (pad=1) + bias + ReLU + 2x2 maxpool for Bt images at once.

        src_ref : ((H+2)*Bt, K) bf16, row index = padded_row * Bt + image.
        a_ref   : (3, K, 2*Wo*Cout) bf16 banded weights; output columns are
                  permuted so even-w pixels fill [:Wo*Cout] and odd-w the rest.
        dst_ref : bf16 destination; pooled row u of image b is written to
                  row dst_off + u*Bt + b, columns [0, Wo*Cout).
        """
        # Conv: 3 accumulating MXU matmuls, M = H*Bt (batch folded into rows).
        for kh in range(3):
            op = src_ref[kh * Bt:(kh + H) * Bt, :]          # padded rows h+kh
            r = jnp.dot(op, a_ref[kh], preferred_element_type=f32)
            if kh == 0:
                acc_ref[...] = r
            else:
                acc_ref[...] += r
        # Pool + bias + ReLU (bias/ReLU commute with max); one Bt-row block per
        # pooled output row, every load/store below lane-dense.
        half = Wo * Cout
        brow = brow_ref[...]                                # (1, half) f32
        for u in range(H // 2):
            ye = acc_ref[(2 * u) * Bt:(2 * u + 1) * Bt, :]
            yo = acc_ref[(2 * u + 1) * Bt:(2 * u + 2) * Bt, :]
            y = jnp.maximum(ye, yo)                         # 2x1 pool over height
            y = jnp.maximum(y[:, :half], y[:, half:])       # 1x2 pool over width
            y = jnp.maximum(y + brow, 0.0)                  # bias + ReLU
            dst_ref[dst_off + u * Bt:dst_off + (u + 1) * Bt, :] = y.astype(bf16)

    # Zero only the border row-blocks of the padded buffers (interiors are
    # fully overwritten every step; cheap and safe under "parallel" semantics).
    p2[0:Bt, :] = jnp.zeros((Bt, p2.shape[1]), bf16)
    p2[9 * Bt:10 * Bt, :] = jnp.zeros((Bt, p2.shape[1]), bf16)
    p3[0:Bt, :] = jnp.zeros((Bt, p3.shape[1]), bf16)
    p3[5 * Bt:6 * Bt, :] = jnp.zeros((Bt, p3.shape[1]), bf16)

    # stage 1: 16x16x3 -> 8x8x16  (input already padded + bf16 from the host)
    conv_pool(x_ref, a1, b1, acc1, p2, Bt, H=16, Wo=8, Cout=16)
    # stage 2: 8x8x16  -> 4x4x64
    conv_pool(p2, a2, b2, acc2, p3, Bt, H=8, Wo=4, Cout=64)
    # stage 3: 4x4x64  -> 2x2x128
    conv_pool(p3, a3, b3, acc3, p4, 0, H=4, Wo=2, Cout=128)

    # fc1: 512 -> 256.  Per-image features = [h=0 row | h=1 row] (512 lanes);
    # PyTorch's NCHW flatten order is baked into w1 on the host.
    feat = jnp.concatenate([p4[0:Bt, :], p4[Bt:2 * Bt, :]], axis=1)   # (Bt, 512) bf16
    f = jnp.dot(feat, w1[...], preferred_element_type=f32) + c1[...]
    f = jnp.maximum(f, 0.0)
    # fc2: 256 -> 64 (padded to 128 output lanes)
    f = jnp.dot(f.astype(bf16), w2[...], preferred_element_type=f32) + c2[...]
    f = jnp.maximum(f, 0.0)
    # fc3: 64 -> num_classes (padded to 128 lanes) + sigmoid (EUP exp + rcp)
    logit = jnp.dot(f.astype(bf16), w3[...], preferred_element_type=f32) + c3[...]
    o_ref[...] = pl.reciprocal(1.0 + jnp.exp(-logit), approx=True)


# --------------------------- parameter preparation -------------------------- #

def init_params(key, in_channels=3, num_classes=1):
    """Synthetic parameters in the PyTorch layouts of the reference module."""
    ks = jax.random.split(key, 12)

    def conv(kw, kb, cin, cout):
        w = jax.random.normal(kw, (cout, cin, 3, 3), jnp.float32) / np.sqrt(cin * 9)
        b = jax.random.normal(kb, (cout,), jnp.float32) * 0.01
        return w, b

    def linear(kw, kb, dout, din):
        w = jax.random.normal(kw, (dout, din), jnp.float32) / np.sqrt(din)
        b = jax.random.normal(kb, (dout,), jnp.float32) * 0.01
        return w, b

    return {
        "conv1": conv(ks[0], ks[1], in_channels, 16),
        "conv2": conv(ks[2], ks[3], 16, 64),
        "conv3": conv(ks[4], ks[5], 64, 128),
        "fc1": linear(ks[6], ks[7], 256, 512),
        "fc2": linear(ks[8], ks[9], 64, 256),
        "fc3": linear(ks[10], ks[11], num_classes, 64),
    }


def pack_params(params, num_classes=1):
    """Host-side one-time repack into the kernel's banded / permuted layouts."""

    def conv_pack(name, cin, cout, width, k_pad):
        wgt = np.asarray(params[name][0], np.float32)         # (cout, cin, 3, 3)
        bias = np.asarray(params[name][1], np.float32)        # (cout,)
        wo = width // 2
        # A[kh, w_in*cin + ci, colmap(w_out, co)] = wgt[co, ci, kh, kw]
        # with w_in = w_out + kw - 1; width padding handled by omitted taps.
        A = np.zeros((3, k_pad, width * cout), np.float32)
        for kh in range(3):
            for w_out in range(width):
                col0 = (w_out % 2) * (wo * cout) + (w_out // 2) * cout
                for kw in range(3):
                    w_in = w_out + kw - 1
                    if 0 <= w_in < width:
                        A[kh, w_in * cin:(w_in + 1) * cin, col0:col0 + cout] = (
                            wgt[:, :, kh, kw].T)
        brow = np.tile(bias, wo).reshape(1, wo * cout)
        return jnp.asarray(A, jnp.bfloat16), jnp.asarray(brow, jnp.float32)

    a1, b1 = conv_pack("conv1", 3, 16, 16, 128)    # K: 48 zero-padded to 128
    a2, b2 = conv_pack("conv2", 16, 64, 8, 128)    # K = 128 exactly
    a3, b3 = conv_pack("conv3", 64, 128, 4, 256)   # K = 256 exactly

    # fc1: PyTorch flattens NCHW (c, h, w) over (128, 2, 2); kernel features are
    # ordered f = h*256 + w*128 + c.
    wfc1 = np.asarray(params["fc1"][0], np.float32)           # (256, 512)
    bfc1 = np.asarray(params["fc1"][1], np.float32)
    w1 = np.zeros((512, 256), np.float32)
    cidx = np.arange(128)
    for h in range(2):
        for w in range(2):
            w1[h * 256 + w * 128:h * 256 + (w + 1) * 128, :] = (
                wfc1[:, cidx * 4 + h * 2 + w].T)
    c1 = bfc1.reshape(1, 256)

    wfc2 = np.asarray(params["fc2"][0], np.float32)           # (64, 256)
    bfc2 = np.asarray(params["fc2"][1], np.float32)
    w2 = np.zeros((256, 128), np.float32)
    w2[:, :64] = wfc2.T
    c2 = np.zeros((1, 128), np.float32)
    c2[0, :64] = bfc2

    wfc3 = np.asarray(params["fc3"][0], np.float32)           # (nc, 64)
    bfc3 = np.asarray(params["fc3"][1], np.float32)
    w3 = np.zeros((128, 128), np.float32)
    w3[:64, :num_classes] = wfc3.T
    c3 = np.zeros((1, 128), np.float32)
    c3[0, :num_classes] = bfc3

    return dict(
        a1=a1, b1=b1, a2=a2, b2=b2, a3=a3, b3=b3,
        w1=jnp.asarray(w1, jnp.bfloat16), c1=jnp.asarray(c1, jnp.float32),
        w2=jnp.asarray(w2, jnp.bfloat16), c2=jnp.asarray(c2, jnp.float32),
        w3=jnp.asarray(w3, jnp.bfloat16), c3=jnp.asarray(c3, jnp.float32),
    )


# --------------------------------- forward ---------------------------------- #

def cnn_forward(x_nchw, kp, num_classes=1, block_b=8):
    """Matches CNN.forward on (B, 3, 16, 16) NCHW inputs (sigmoid probs).

    block_b: images per grid step (multiple of 8; sweep 8-32, larger on v6e).
    """
    B = x_nchw.shape[0]
    Bt = block_b
    nblk = -(-B // Bt)
    Bp = nblk * Bt
    f32, bf16 = jnp.float32, jnp.bfloat16

    # Host pre-pad into the stage-1 layout: row = padded image row p (0..17,
    # rows 0/17 zero) * Bt + image-in-block; 48 data lanes zero-padded to 128.
    x2 = jnp.transpose(x_nchw, (0, 2, 3, 1)).reshape(B, 16, 48)   # (B, h, w*3+c)
    xp = jnp.zeros((Bp, 18, 128), f32).at[:B, 1:17, :48].set(x2)
    xk = (xp.reshape(nblk, Bt, 18, 128).transpose(0, 2, 1, 3)
            .reshape(nblk * 18 * Bt, 128).astype(bf16))

    def resident(a):                       # whole array, same block every step
        z = (0,) * a.ndim
        return pl.BlockSpec(a.shape, lambda i, _z=z: _z)

    names = ("a1", "b1", "a2", "b2", "a3", "b3", "w1", "c1", "w2", "c2", "w3", "c3")
    weights = [kp[n] for n in names]

    out = pl.pallas_call(
        _cnn_fused_kernel,
        out_shape=jax.ShapeDtypeStruct((Bp, 128), jnp.float32),
        grid_spec=pltpu.PrefetchScalarGridSpec(
            num_scalar_prefetch=0,
            grid=(nblk,),
            in_specs=[pl.BlockSpec((18 * Bt, 128), lambda i: (i, 0))]
                     + [resident(a) for a in weights],
            out_specs=pl.BlockSpec((Bt, 128), lambda i: (i, 0)),
            scratch_shapes=[
                pltpu.VMEM((10 * Bt, 128), bf16),        # p2: padded 8x8x16 rows
                pltpu.VMEM((6 * Bt, 256), bf16),         # p3: padded 4x4x64 rows
                pltpu.VMEM((2 * Bt, 256), bf16),         # p4: 2x2x128 rows
                pltpu.VMEM((16 * Bt, 256), jnp.float32),  # acc1
                pltpu.VMEM((8 * Bt, 512), jnp.float32),   # acc2
                pltpu.VMEM((4 * Bt, 512), jnp.float32),   # acc3
            ]),
        compiler_params=pltpu.CompilerParams(
            dimension_semantics=("parallel",)),           # batch blocks -> megacore
    )(xk, *weights)

    return out[:B, :num_classes]


# ----------------------------------- main ------------------------------------ #

if __name__ == "__main__":
    key = jax.random.PRNGKey(0)
    k_params, k_x = jax.random.split(key)

    params = init_params(k_params, in_channels=3, num_classes=1)
    kparams = pack_params(params, num_classes=1)

    # Spatial size 16x16 so that 128 * (16/8)^2 = 512 matches fc1's input, as in
    # the original module.  Input is NCHW like PyTorch.
    x = jax.random.normal(k_x, (2, 3, 16, 16), jnp.float32)

    fwd = jax.jit(cnn_forward)
    out = jax.block_until_ready(fwd(x, kparams))

    assert out.shape == (2, 1)
    assert bool(jnp.all(jnp.isfinite(out)))
    # sigmoid range (tiny slack for the approximate EUP reciprocal)
    assert bool(jnp.all((out >= 0.0) & (out <= 1.0 + 1e-3)))
    print("KERNEL_OK")
</pallas_src>

<mosaic_0001>
module attributes {stable_mosaic.version = 11 : i64} {
  func.func @_cnn_fused_kernel(%arg0: i32, %arg1: memref<144x128xbf16, #tpu.memory_space<vmem>>, %arg2: memref<3x128x256xbf16, #tpu.memory_space<vmem>>, %arg3: memref<1x128xf32, #tpu.memory_space<vmem>>, %arg4: memref<3x128x512xbf16, #tpu.memory_space<vmem>>, %arg5: memref<1x256xf32, #tpu.memory_space<vmem>>, %arg6: memref<3x256x512xbf16, #tpu.memory_space<vmem>>, %arg7: memref<1x256xf32, #tpu.memory_space<vmem>>, %arg8: memref<512x256xbf16, #tpu.memory_space<vmem>>, %arg9: memref<1x256xf32, #tpu.memory_space<vmem>>, %arg10: memref<256x128xbf16, #tpu.memory_space<vmem>>, %arg11: memref<1x128xf32, #tpu.memory_space<vmem>>, %arg12: memref<128x128xbf16, #tpu.memory_space<vmem>>, %arg13: memref<1x128xf32, #tpu.memory_space<vmem>>, %arg14: memref<8x128xf32, #tpu.memory_space<vmem>>, %arg15: memref<80x128xbf16, #tpu.memory_space<vmem>>, %arg16: memref<48x256xbf16, #tpu.memory_space<vmem>>, %arg17: memref<16x256xbf16, #tpu.memory_space<vmem>>, %arg18: memref<128x256xf32, #tpu.memory_space<vmem>>, %arg19: memref<64x512xf32, #tpu.memory_space<vmem>>, %arg20: memref<32x512xf32, #tpu.memory_space<vmem>>) attributes {dimension_semantics = [#tpu.dimension_semantics<parallel>], iteration_bounds = array<i64: 1>, scalar_prefetch = 0 : i64, scratch_operands = 6 : i64, tpu.core_type = #tpu.core_type<tc>, window_params = [{transform_indices = @transform_0, window_bounds = array<i64: 144, 128>}, {pipeline_mode = #tpu.pipeline_mode<synchronous>, transform_indices = @transform_1, window_bounds = array<i64: 3, 128, 256>}, {pipeline_mode = #tpu.pipeline_mode<synchronous>, transform_indices = @transform_2, window_bounds = array<i64: 1, 128>}, {pipeline_mode = #tpu.pipeline_mode<synchronous>, transform_indices = @transform_3, window_bounds = array<i64: 3, 128, 512>}, {pipeline_mode = #tpu.pipeline_mode<synchronous>, transform_indices = @transform_4, window_bounds = array<i64: 1, 256>}, {pipeline_mode = #tpu.pipeline_mode<synchronous>, transform_indices = @transform_5, window_bounds = array<i64: 3, 256, 512>}, {pipeline_mode = #tpu.pipeline_mode<synchronous>, transform_indices = @transform_6, window_bounds = array<i64: 1, 256>}, {pipeline_mode = #tpu.pipeline_mode<synchronous>, transform_indices = @transform_7, window_bounds = array<i64: 512, 256>}, {pipeline_mode = #tpu.pipeline_mode<synchronous>, transform_indices = @transform_8, window_bounds = array<i64: 1, 256>}, {pipeline_mode = #tpu.pipeline_mode<synchronous>, transform_indices = @transform_9, window_bounds = array<i64: 256, 128>}, {pipeline_mode = #tpu.pipeline_mode<synchronous>, transform_indices = @transform_10, window_bounds = array<i64: 1, 128>}, {pipeline_mode = #tpu.pipeline_mode<synchronous>, transform_indices = @transform_11, window_bounds = array<i64: 128, 128>}, {pipeline_mode = #tpu.pipeline_mode<synchronous>, transform_indices = @transform_12, window_bounds = array<i64: 1, 128>}, {transform_indices = @transform_13, window_bounds = array<i64: 8, 128>}]} {
    %cst = arith.constant 0.000000e+00 : bf16
    %0 = vector.broadcast %cst : bf16 to vector<8x128xbf16>
    %c0 = arith.constant 0 : index
    %c0_0 = arith.constant 0 : index
    %1 = vector.load %arg15[%c0, %c0_0] : memref<80x128xbf16, #tpu.memory_space<vmem>>, vector<8x128xbf16>
    tpu.vector_store %arg15[%c0, %c0_0], %0 {strides = array<i32>} : memref<80x128xbf16, #tpu.memory_space<vmem>>, vector<8x128xbf16>,
    %cst_1 = arith.constant 0.000000e+00 : bf16
    %2 = vector.broadcast %cst_1 : bf16 to vector<8x128xbf16>
    %c72 = arith.constant 72 : index
    %c0_2 = arith.constant 0 : index
    %3 = vector.load %arg15[%c72, %c0_2] : memref<80x128xbf16, #tpu.memory_space<vmem>>, vector<8x128xbf16>
    tpu.vector_store %arg15[%c72, %c0_2], %2 {strides = array<i32>} : memref<80x128xbf16, #tpu.memory_space<vmem>>, vector<8x128xbf16>,
    %cst_3 = arith.constant 0.000000e+00 : bf16
    %4 = vector.broadcast %cst_3 : bf16 to vector<8x256xbf16>
    %c0_4 = arith.constant 0 : index
    %c0_5 = arith.constant 0 : index
    %5 = vector.load %arg16[%c0_4, %c0_5] : memref<48x256xbf16, #tpu.memory_space<vmem>>, vector<8x256xbf16>
    tpu.vector_store %arg16[%c0_4, %c0_5], %4 {strides = array<i32>} : memref<48x256xbf16, #tpu.memory_space<vmem>>, vector<8x256xbf16>,
    %cst_6 = arith.constant 0.000000e+00 : bf16
    %6 = vector.broadcast %cst_6 : bf16 to vector<8x256xbf16>
    %c40 = arith.constant 40 : index
    %c0_7 = arith.constant 0 : index
    %7 = vector.load %arg16[%c40, %c0_7] : memref<48x256xbf16, #tpu.memory_space<vmem>>, vector<8x256xbf16>
    tpu.vector_store %arg16[%c40, %c0_7], %6 {strides = array<i32>} : memref<48x256xbf16, #tpu.memory_space<vmem>>, vector<8x256xbf16>,
    %c0_8 = arith.constant 0 : index
    %c0_9 = arith.constant 0 : index
    %8 = vector.load %arg1[%c0_8, %c0_9] : memref<144x128xbf16, #tpu.memory_space<vmem>>, vector<128x128xbf16>
    %c0_10 = arith.constant 0 : index
    %c0_11 = arith.constant 0 : index
    %c0_12 = arith.constant 0 : index
    %9 = vector.load %arg2[%c0_10, %c0_11, %c0_12] : memref<3x128x256xbf16, #tpu.memory_space<vmem>>, vector<1x128x256xbf16>
    %10 = vector.shape_cast %9 : vector<1x128x256xbf16> to vector<128x256xbf16>
    %cst_13 = arith.constant dense<0.000000e+00> : vector<128x256xf32>
    %11 = tpu.matmul %8, %10, %cst_13 {dimension_numbers = #tpu.dot_dimension_numbers<[1], [0], [0], [1], [0, 0, 1, 1], [], []>} : vector<128x128xbf16>, vector<128x256xbf16>, vector<128x256xf32> -> vector<128x256xf32>
    %c0_14 = arith.constant 0 : index
    %c0_15 = arith.constant 0 : index
    %12 = vector.load %arg18[%c0_14, %c0_15] : memref<128x256xf32, #tpu.memory_space<vmem>>, vector<128x256xf32>
    tpu.vector_store %arg18[%c0_14, %c0_15], %11 {strides = array<i32>} : memref<128x256xf32, #tpu.memory_space<vmem>>, vector<128x256xf32>,
    %c8 = arith.constant 8 : index
    %c0_16 = arith.constant 0 : index
    %13 = vector.load %arg1[%c8, %c0_16] : memref<144x128xbf16, #tpu.memory_space<vmem>>, vector<128x128xbf16>
    %c1 = arith.constant 1 : index
    %c0_17 = arith.constant 0 : index
    %c0_18 = arith.constant 0 : index
    %14 = vector.load %arg2[%c1, %c0_17, %c0_18] : memref<3x128x256xbf16, #tpu.memory_space<vmem>>, vector<1x128x256xbf16>
    %15 = vector.shape_cast %14 : vector<1x128x256xbf16> to vector<128x256xbf16>
    %cst_19 = arith.constant dense<0.000000e+00> : vector<128x256xf32>
    %16 = tpu.matmul %13, %15, %cst_19 {dimension_numbers = #tpu.dot_dimension_numbers<[1], [0], [0], [1], [0, 0, 1, 1], [], []>} : vector<128x128xbf16>, vector<128x256xbf16>, vector<128x256xf32> -> vector<128x256xf32>
    %c0_20 = arith.constant 0 : index
    %c0_21 = arith.constant 0 : index
    %17 = vector.load %arg18[%c0_20, %c0_21] : memref<128x256xf32, #tpu.memory_space<vmem>>, vector<128x256xf32>
    %18 = arith.addf %17, %16 : vector<128x256xf32>
    %c0_22 = arith.constant 0 : index
    %c0_23 = arith.constant 0 : index
    %19 = vector.load %arg18[%c0_22, %c0_23] : memref<128x256xf32, #tpu.memory_space<vmem>>, vector<128x256xf32>
    tpu.vector_store %arg18[%c0_22, %c0_23], %18 {strides = array<i32>} : memref<128x256xf32, #tpu.memory_space<vmem>>, vector<128x256xf32>,
    %c16 = arith.constant 16 : index
    %c0_24 = arith.constant 0 : index
    %20 = vector.load %arg1[%c16, %c0_24] : memref<144x128xbf16, #tpu.memory_space<vmem>>, vector<128x128xbf16>
    %c2 = arith.constant 2 : index
    %c0_25 = arith.constant 0 : index
    %c0_26 = arith.constant 0 : index
    %21 = vector.load %arg2[%c2, %c0_25, %c0_26] : memref<3x128x256xbf16, #tpu.memory_space<vmem>>, vector<1x128x256xbf16>
    %22 = vector.shape_cast %21 : vector<1x128x256xbf16> to vector<128x256xbf16>
    %cst_27 = arith.constant dense<0.000000e+00> : vector<128x256xf32>
    %23 = tpu.matmul %20, %22, %cst_27 {dimension_numbers = #tpu.dot_dimension_numbers<[1], [0], [0], [1], [0, 0, 1, 1], [], []>} : vector<128x128xbf16>, vector<128x256xbf16>, vector<128x256xf32> -> vector<128x256xf32>
    %c0_28 = arith.constant 0 : index
    %c0_29 = arith.constant 0 : index
    %24 = vector.load %arg18[%c0_28, %c0_29] : memref<128x256xf32, #tpu.memory_space<vmem>>, vector<128x256xf32>
    %25 = arith.addf %24, %23 : vector<128x256xf32>
    %c0_30 = arith.constant 0 : index
    %c0_31 = arith.constant 0 : index
    %26 = vector.load %arg18[%c0_30, %c0_31] : memref<128x256xf32, #tpu.memory_space<vmem>>, vector<128x256xf32>
    tpu.vector_store %arg18[%c0_30, %c0_31], %25 {strides = array<i32>} : memref<128x256xf32, #tpu.memory_space<vmem>>, vector<128x256xf32>,
    %c0_32 = arith.constant 0 : index
    %c0_33 = arith.constant 0 : index
    %27 = vector.load %arg3[%c0_32, %c0_33] : memref<1x128xf32, #tpu.memory_space<vmem>>, vector<1x128xf32>
    %c0_34 = arith.constant 0 : index
    %c0_35 = arith.constant 0 : index
    %28 = vector.load %arg18[%c0_34, %c0_35] : memref<128x256xf32, #tpu.memory_space<vmem>>, vector<8x256xf32>
    %c8_36 = arith.constant 8 : index
    %c0_37 = arith.constant 0 : index
    %29 = vector.load %arg18[%c8_36, %c0_37] : memref<128x256xf32, #tpu.memory_space<vmem>>, vector<8x256xf32>
    %30 = arith.maximumf %28, %29 : vector<8x256xf32>
    %31 = vector.extract_strided_slice %30 {offsets = [0, 0], sizes = [8, 128], strides = [1, 1]} : vector<8x256xf32> to vector<8x128xf32>
    %32 = vector.extract_strided_slice %30 {offsets = [0, 128], sizes = [8, 128], strides = [1, 1]} : vector<8x256xf32> to vector<8x128xf32>
    %33 = arith.maximumf %31, %32 : vector<8x128xf32>
    %34 = vector.broadcast %27 : vector<1x128xf32> to vector<8x128xf32>
    %35 = arith.addf %33, %34 : vector<8x128xf32>
    %cst_38 = arith.constant 0.000000e+00 : f32
    %36 = vector.broadcast %cst_38 : f32 to vector<8x128xf32>
    %37 = arith.maximumf %35, %36 : vector<8x128xf32>
    %38 = arith.truncf %37 : vector<8x128xf32> to vector<8x128xbf16>
    %c8_39 = arith.constant 8 : index
    %c0_40 = arith.constant 0 : index
    %39 = vector.load %arg15[%c8_39, %c0_40] : memref<80x128xbf16, #tpu.memory_space<vmem>>, vector<8x128xbf16>
    tpu.vector_store %arg15[%c8_39, %c0_40], %38 {strides = array<i32>} : memref<80x128xbf16, #tpu.memory_space<vmem>>, vector<8x128xbf16>,
    %c16_41 = arith.constant 16 : index
    %c0_42 = arith.constant 0 : index
    %40 = vector.load %arg18[%c16_41, %c0_42] : memref<128x256xf32, #tpu.memory_space<vmem>>, vector<8x256xf32>
    %c24 = arith.constant 24 : index
    %c0_43 = arith.constant 0 : index
    %41 = vector.load %arg18[%c24, %c0_43] : memref<128x256xf32, #tpu.memory_space<vmem>>, vector<8x256xf32>
    %42 = arith.maximumf %40, %41 : vector<8x256xf32>
    %43 = vector.extract_strided_slice %42 {offsets = [0, 0], sizes = [8, 128], strides = [1, 1]} : vector<8x256xf32> to vector<8x128xf32>
    %44 = vector.extract_strided_slice %42 {offsets = [0, 128], sizes = [8, 128], strides = [1, 1]} : vector<8x256xf32> to vector<8x128xf32>
    %45 = arith.maximumf %43, %44 : vector<8x128xf32>
    %46 = vector.broadcast %27 : vector<1x128xf32> to vector<8x128xf32>
    %47 = arith.addf %45, %46 : vector<8x128xf32>
    %cst_44 = arith.constant 0.000000e+00 : f32
    %48 = vector.broadcast %cst_44 : f32 to vector<8x128xf32>
    %49 = arith.maximumf %47, %48 : vector<8x128xf32>
    %50 = arith.truncf %49 : vector<8x128xf32> to vector<8x128xbf16>
    %c16_45 = arith.constant 16 : index
    %c0_46 = arith.constant 0 : index
    %51 = vector.load %arg15[%c16_45, %c0_46] : memref<80x128xbf16, #tpu.memory_space<vmem>>, vector<8x128xbf16>
    tpu.vector_store %arg15[%c16_45, %c0_46], %50 {strides = array<i32>} : memref<80x128xbf16, #tpu.memory_space<vmem>>, vector<8x128xbf16>,
    %c32 = arith.constant 32 : index
    %c0_47 = arith.constant 0 : index
    %52 = vector.load %arg18[%c32, %c0_47] : memref<128x256xf32, #tpu.memory_space<vmem>>, vector<8x256xf32>
    %c40_48 = arith.constant 40 : index
    %c0_49 = arith.constant 0 : index
    %53 = vector.load %arg18[%c40_48, %c0_49] : memref<128x256xf32, #tpu.memory_space<vmem>>, vector<8x256xf32>
    %54 = arith.maximumf %52, %53 : vector<8x256xf32>
    %55 = vector.extract_strided_slice %54 {offsets = [0, 0], sizes = [8, 128], strides = [1, 1]} : vector<8x256xf32> to vector<8x128xf32>
    %56 = vector.extract_strided_slice %54 {offsets = [0, 128], sizes = [8, 128], strides = [1, 1]} : vector<8x256xf32> to vector<8x128xf32>
    %57 = arith.maximumf %55, %56 : vector<8x128xf32>
    %58 = vector.broadcast %27 : vector<1x128xf32> to vector<8x128xf32>
    %59 = arith.addf %57, %58 : vector<8x128xf32>
    %cst_50 = arith.constant 0.000000e+00 : f32
    %60 = vector.broadcast %cst_50 : f32 to vector<8x128xf32>
    %61 = arith.maximumf %59, %60 : vector<8x128xf32>
    %62 = arith.truncf %61 : vector<8x128xf32> to vector<8x128xbf16>
    %c24_51 = arith.constant 24 : index
    %c0_52 = arith.constant 0 : index
    %63 = vector.load %arg15[%c24_51, %c0_52] : memref<80x128xbf16, #tpu.memory_space<vmem>>, vector<8x128xbf16>
    tpu.vector_store %arg15[%c24_51, %c0_52], %62 {strides = array<i32>} : memref<80x128xbf16, #tpu.memory_space<vmem>>, vector<8x128xbf16>,
    %c48 = arith.constant 48 : index
    %c0_53 = arith.constant 0 : index
    %64 = vector.load %arg18[%c48, %c0_53] : memref<128x256xf32, #tpu.memory_space<vmem>>, vector<8x256xf32>
    %c56 = arith.constant 56 : index
    %c0_54 = arith.constant 0 : index
    %65 = vector.load %arg18[%c56, %c0_54] : memref<128x256xf32, #tpu.memory_space<vmem>>, vector<8x256xf32>
    %66 = arith.maximumf %64, %65 : vector<8x256xf32>
    %67 = vector.extract_strided_slice %66 {offsets = [0, 0], sizes = [8, 128], strides = [1, 1]} : vector<8x256xf32> to vector<8x128xf32>
    %68 = vector.extract_strided_slice %66 {offsets = [0, 128], sizes = [8, 128], strides = [1, 1]} : vector<8x256xf32> to vector<8x128xf32>
    %69 = arith.maximumf %67, %68 : vector<8x128xf32>
    %70 = vector.broadcast %27 : vector<1x128xf32> to vector<8x128xf32>
    %71 = arith.addf %69, %70 : vector<8x128xf32>
    %cst_55 = arith.constant 0.000000e+00 : f32
    %72 = vector.broadcast %cst_55 : f32 to vector<8x128xf32>
    %73 = arith.maximumf %71, %72 : vector<8x128xf32>
    %74 = arith.truncf %73 : vector<8x128xf32> to vector<8x128xbf16>
    %c32_56 = arith.constant 32 : index
    %c0_57 = arith.constant 0 : index
    %75 = vector.load %arg15[%c32_56, %c0_57] : memref<80x128xbf16, #tpu.memory_space<vmem>>, vector<8x128xbf16>
    tpu.vector_store %arg15[%c32_56, %c0_57], %74 {strides = array<i32>} : memref<80x128xbf16, #tpu.memory_space<vmem>>, vector<8x128xbf16>,
    %c64 = arith.constant 64 : index
    %c0_58 = arith.constant 0 : index
    %76 = vector.load %arg18[%c64, %c0_58] : memref<128x256xf32, #tpu.memory_space<vmem>>, vector<8x256xf32>
    %c72_59 = arith.constant 72 : index
    %c0_60 = arith.constant 0 : index
    %77 = vector.load %arg18[%c72_59, %c0_60] : memref<128x256xf32, #tpu.memory_space<vmem>>, vector<8x256xf32>
    %78 = arith.maximumf %76, %77 : vector<8x256xf32>
    %79 = vector.extract_strided_slice %78 {offsets = [0, 0], sizes = [8, 128], strides = [1, 1]} : vector<8x256xf32> to vector<8x128xf32>
    %80 = vector.extract_strided_slice %78 {offsets = [0, 128], sizes = [8, 128], strides = [1, 1]} : vector<8x256xf32> to vector<8x128xf32>
    %81 = arith.maximumf %79, %80 : vector<8x128xf32>
    %82 = vector.broadcast %27 : vector<1x128xf32> to vector<8x128xf32>
    %83 = arith.addf %81, %82 : vector<8x128xf32>
    %cst_61 = arith.constant 0.000000e+00 : f32
    %84 = vector.broadcast %cst_61 : f32 to vector<8x128xf32>
    %85 = arith.maximumf %83, %84 : vector<8x128xf32>
    %86 = arith.truncf %85 : vector<8x128xf32> to vector<8x128xbf16>
    %c40_62 = arith.constant 40 : index
    %c0_63 = arith.constant 0 : index
    %87 = vector.load %arg15[%c40_62, %c0_63] : memref<80x128xbf16, #tpu.memory_space<vmem>>, vector<8x128xbf16>
    tpu.vector_store %arg15[%c40_62, %c0_63], %86 {strides = array<i32>} : memref<80x128xbf16, #tpu.memory_space<vmem>>, vector<8x128xbf16>,
    %c80 = arith.constant 80 : index
    %c0_64 = arith.constant 0 : index
    %88 = vector.load %arg18[%c80, %c0_64] : memref<128x256xf32, #tpu.memory_space<vmem>>, vector<8x256xf32>
    %c88 = arith.constant 88 : index
    %c0_65 = arith.constant 0 : index
    %89 = vector.load %arg18[%c88, %c0_65] : memref<128x256xf32, #tpu.memory_space<vmem>>, vector<8x256xf32>
    %90 = arith.maximumf %88, %89 : vector<8x256xf32>
    %91 = vector.extract_strided_slice %90 {offsets = [0, 0], sizes = [8, 128], strides = [1, 1]} : vector<8x256xf32> to vector<8x128xf32>
    %92 = vector.extract_strided_slice %90 {offsets = [0, 128], sizes = [8, 128], strides = [1, 1]} : vector<8x256xf32> to vector<8x128xf32>
    %93 = arith.maximumf %91, %92 : vector<8x128xf32>
    %94 = vector.broadcast %27 : vector<1x128xf32> to vector<8x128xf32>
    %95 = arith.addf %93, %94 : vector<8x128xf32>
    %cst_66 = arith.constant 0.000000e+00 : f32
    %96 = vector.broadcast %cst_66 : f32 to vector<8x128xf32>
    %97 = arith.maximumf %95, %96 : vector<8x128xf32>
    %98 = arith.truncf %97 : vector<8x128xf32> to vector<8x128xbf16>
    %c48_67 = arith.constant 48 : index
    %c0_68 = arith.constant 0 : index
    %99 = vector.load %arg15[%c48_67, %c0_68] : memref<80x128xbf16, #tpu.memory_space<vmem>>, vector<8x128xbf16>
    tpu.vector_store %arg15[%c48_67, %c0_68], %98 {strides = array<i32>} : memref<80x128xbf16, #tpu.memory_space<vmem>>, vector<8x128xbf16>,
    %c96 = arith.constant 96 : index
    %c0_69 = arith.constant 0 : index
    %100 = vector.load %arg18[%c96, %c0_69] : memref<128x256xf32, #tpu.memory_space<vmem>>, vector<8x256xf32>
    %c104 = arith.constant 104 : index
    %c0_70 = arith.constant 0 : index
    %101 = vector.load %arg18[%c104, %c0_70] : memref<128x256xf32, #tpu.memory_space<vmem>>, vector<8x256xf32>
    %102 = arith.maximumf %100, %101 : vector<8x256xf32>
    %103 = vector.extract_strided_slice %102 {offsets = [0, 0], sizes = [8, 128], strides = [1, 1]} : vector<8x256xf32> to vector<8x128xf32>
    %104 = vector.extract_strided_slice %102 {offsets = [0, 128], sizes = [8, 128], strides = [1, 1]} : vector<8x256xf32> to vector<8x128xf32>
    %105 = arith.maximumf %103, %104 : vector<8x128xf32>
    %106 = vector.broadcast %27 : vector<1x128xf32> to vector<8x128xf32>
    %107 = arith.addf %105, %106 : vector<8x128xf32>
    %cst_71 = arith.constant 0.000000e+00 : f32
    %108 = vector.broadcast %cst_71 : f32 to vector<8x128xf32>
    %109 = arith.maximumf %107, %108 : vector<8x128xf32>
    %110 = arith.truncf %109 : vector<8x128xf32> to vector<8x128xbf16>
    %c56_72 = arith.constant 56 : index
    %c0_73 = arith.constant 0 : index
    %111 = vector.load %arg15[%c56_72, %c0_73] : memref<80x128xbf16, #tpu.memory_space<vmem>>, vector<8x128xbf16>
    tpu.vector_store %arg15[%c56_72, %c0_73], %110 {strides = array<i32>} : memref<80x128xbf16, #tpu.memory_space<vmem>>, vector<8x128xbf16>,
    %c112 = arith.constant 112 : index
    %c0_74 = arith.constant 0 : index
    %112 = vector.load %arg18[%c112, %c0_74] : memref<128x256xf32, #tpu.memory_space<vmem>>, vector<8x256xf32>
    %c120 = arith.constant 120 : index
    %c0_75 = arith.constant 0 : index
    %113 = vector.load %arg18[%c120, %c0_75] : memref<128x256xf32, #tpu.memory_space<vmem>>, vector<8x256xf32>
    %114 = arith.maximumf %112, %113 : vector<8x256xf32>
    %115 = vector.extract_strided_slice %114 {offsets = [0, 0], sizes = [8, 128], strides = [1, 1]} : vector<8x256xf32> to vector<8x128xf32>
    %116 = vector.extract_strided_slice %114 {offsets = [0, 128], sizes = [8, 128], strides = [1, 1]} : vector<8x256xf32> to vector<8x128xf32>
    %117 = arith.maximumf %115, %116 : vector<8x128xf32>
    %118 = vector.broadcast %27 : vector<1x128xf32> to vector<8x128xf32>
    %119 = arith.addf %117, %118 : vector<8x128xf32>
    %cst_76 = arith.constant 0.000000e+00 : f32
    %120 = vector.broadcast %cst_76 : f32 to vector<8x128xf32>
    %121 = arith.maximumf %119, %120 : vector<8x128xf32>
    %122 = arith.truncf %121 : vector<8x128xf32> to vector<8x128xbf16>
    %c64_77 = arith.constant 64 : index
    %c0_78 = arith.constant 0 : index
    %123 = vector.load %arg15[%c64_77, %c0_78] : memref<80x128xbf16, #tpu.memory_space<vmem>>, vector<8x128xbf16>
    tpu.vector_store %arg15[%c64_77, %c0_78], %122 {strides = array<i32>} : memref<80x128xbf16, #tpu.memory_space<vmem>>, vector<8x128xbf16>,
    %c0_79 = arith.constant 0 : index
    %c0_80 = arith.constant 0 : index
    %124 = vector.load %arg15[%c0_79, %c0_80] : memref<80x128xbf16, #tpu.memory_space<vmem>>, vector<64x128xbf16>
    %c0_81 = arith.constant 0 : index
    %c0_82 = arith.constant 0 : index
    %c0_83 = arith.constant 0 : index
    %125 = vector.load %arg4[%c0_81, %c0_82, %c0_83] : memref<3x128x512xbf16, #tpu.memory_space<vmem>>, vector<1x128x512xbf16>
    %126 = vector.shape_cast %125 : vector<1x128x512xbf16> to vector<128x512xbf16>
    %cst_84 = arith.constant dense<0.000000e+00> : vector<64x512xf32>
    %127 = tpu.matmul %124, %126, %cst_84 {dimension_numbers = #tpu.dot_dimension_numbers<[1], [0], [0], [1], [0, 0, 1, 1], [], []>} : vector<64x128xbf16>, vector<128x512xbf16>, vector<64x512xf32> -> vector<64x512xf32>
    %c0_85 = arith.constant 0 : index
    %c0_86 = arith.constant 0 : index
    %128 = vector.load %arg19[%c0_85, %c0_86] : memref<64x512xf32, #tpu.memory_space<vmem>>, vector<64x512xf32>
    tpu.vector_store %arg19[%c0_85, %c0_86], %127 {strides = array<i32>} : memref<64x512xf32, #tpu.memory_space<vmem>>, vector<64x512xf32>,
    %c8_87 = arith.constant 8 : index
    %c0_88 = arith.constant 0 : index
    %129 = vector.load %arg15[%c8_87, %c0_88] : memref<80x128xbf16, #tpu.memory_space<vmem>>, vector<64x128xbf16>
    %c1_89 = arith.constant 1 : index
    %c0_90 = arith.constant 0 : index
    %c0_91 = arith.constant 0 : index
    %130 = vector.load %arg4[%c1_89, %c0_90, %c0_91] : memref<3x128x512xbf16, #tpu.memory_space<vmem>>, vector<1x128x512xbf16>
    %131 = vector.shape_cast %130 : vector<1x128x512xbf16> to vector<128x512xbf16>
    %cst_92 = arith.constant dense<0.000000e+00> : vector<64x512xf32>
    %132 = tpu.matmul %129, %131, %cst_92 {dimension_numbers = #tpu.dot_dimension_numbers<[1], [0], [0], [1], [0, 0, 1, 1], [], []>} : vector<64x128xbf16>, vector<128x512xbf16>, vector<64x512xf32> -> vector<64x512xf32>
    %c0_93 = arith.constant 0 : index
    %c0_94 = arith.constant 0 : index
    %133 = vector.load %arg19[%c0_93, %c0_94] : memref<64x512xf32, #tpu.memory_space<vmem>>, vector<64x512xf32>
    %134 = arith.addf %133, %132 : vector<64x512xf32>
    %c0_95 = arith.constant 0 : index
    %c0_96 = arith.constant 0 : index
    %135 = vector.load %arg19[%c0_95, %c0_96] : memref<64x512xf32, #tpu.memory_space<vmem>>, vector<64x512xf32>
    tpu.vector_store %arg19[%c0_95, %c0_96], %134 {strides = array<i32>} : memref<64x512xf32, #tpu.memory_space<vmem>>, vector<64x512xf32>,
    %c16_97 = arith.constant 16 : index
    %c0_98 = arith.constant 0 : index
    %136 = vector.load %arg15[%c16_97, %c0_98] : memref<80x128xbf16, #tpu.memory_space<vmem>>, vector<64x128xbf16>
    %c2_99 = arith.constant 2 : index
    %c0_100 = arith.constant 0 : index
    %c0_101 = arith.constant 0 : index
    %137 = vector.load %arg4[%c2_99, %c0_100, %c0_101] : memref<3x128x512xbf16, #tpu.memory_space<vmem>>, vector<1x128x512xbf16>
    %138 = vector.shape_cast %137 : vector<1x128x512xbf16> to vector<128x512xbf16>
    %cst_102 = arith.constant dense<0.000000e+00> : vector<64x512xf32>
    %139 = tpu.matmul %136, %138, %cst_102 {dimension_numbers = #tpu.dot_dimension_numbers<[1], [0], [0], [1], [0, 0, 1, 1], [], []>} : vector<64x128xbf16>, vector<128x512xbf16>, vector<64x512xf32> -> vector<64x512xf32>
    %c0_103 = arith.constant 0 : index
    %c0_104 = arith.constant 0 : index
    %140 = vector.load %arg19[%c0_103, %c0_104] : memref<64x512xf32, #tpu.memory_space<vmem>>, vector<64x512xf32>
    %141 = arith.addf %140, %139 : vector<64x512xf32>
    %c0_105 = arith.constant 0 : index
    %c0_106 = arith.constant 0 : index
    %142 = vector.load %arg19[%c0_105, %c0_106] : memref<64x512xf32, #tpu.memory_space<vmem>>, vector<64x512xf32>
    tpu.vector_store %arg19[%c0_105, %c0_106], %141 {strides = array<i32>} : memref<64x512xf32, #tpu.memory_space<vmem>>, vector<64x512xf32>,
    %c0_107 = arith.constant 0 : index
    %c0_108 = arith.constant 0 : index
    %143 = vector.load %arg5[%c0_107, %c0_108] : memref<1x256xf32, #tpu.memory_space<vmem>>, vector<1x256xf32>
    %c0_109 = arith.constant 0 : index
    %c0_110 = arith.constant 0 : index
    %144 = vector.load %arg19[%c0_109, %c0_110] : memref<64x512xf32, #tpu.memory_space<vmem>>, vector<8x512xf32>
    %c8_111 = arith.constant 8 : index
    %c0_112 = arith.constant 0 : index
    %145 = vector.load %arg19[%c8_111, %c0_112] : memref<64x512xf32, #tpu.memory_space<vmem>>, vector<8x512xf32>
    %146 = arith.maximumf %144, %145 : vector<8x512xf32>
    %147 = vector.extract_strided_slice %146 {offsets = [0, 0], sizes = [8, 256], strides = [1, 1]} : vector<8x512xf32> to vector<8x256xf32>
    %148 = vector.extract_strided_slice %146 {offsets = [0, 256], sizes = [8, 256], strides = [1, 1]} : vector<8x512xf32> to vector<8x256xf32>
    %149 = arith.maximumf %147, %148 : vector<8x256xf32>
    %150 = vector.broadcast %143 : vector<1x256xf32> to vector<8x256xf32>
    %151 = arith.addf %149, %150 : vector<8x256xf32>
    %cst_113 = arith.constant 0.000000e+00 : f32
    %152 = vector.broadcast %cst_113 : f32 to vector<8x256xf32>
    %153 = arith.maximumf %151, %152 : vector<8x256xf32>
    %154 = arith.truncf %153 : vector<8x256xf32> to vector<8x256xbf16>
    %c8_114 = arith.constant 8 : index
    %c0_115 = arith.constant 0 : index
    %155 = vector.load %arg16[%c8_114, %c0_115] : memref<48x256xbf16, #tpu.memory_space<vmem>>, vector<8x256xbf16>
    tpu.vector_store %arg16[%c8_114, %c0_115], %154 {strides = array<i32>} : memref<48x256xbf16, #tpu.memory_space<vmem>>, vector<8x256xbf16>,
    %c16_116 = arith.constant 16 : index
    %c0_117 = arith.constant 0 : index
    %156 = vector.load %arg19[%c16_116, %c0_117] : memref<64x512xf32, #tpu.memory_space<vmem>>, vector<8x512xf32>
    %c24_118 = arith.constant 24 : index
    %c0_119 = arith.constant 0 : index
    %157 = vector.load %arg19[%c24_118, %c0_119] : memref<64x512xf32, #tpu.memory_space<vmem>>, vector<8x512xf32>
    %158 = arith.maximumf %156, %157 : vector<8x512xf32>
    %159 = vector.extract_strided_slice %158 {offsets = [0, 0], sizes = [8, 256], strides = [1, 1]} : vector<8x512xf32> to vector<8x256xf32>
    %160 = vector.extract_strided_slice %158 {offsets = [0, 256], sizes = [8, 256], strides = [1, 1]} : vector<8x512xf32> to vector<8x256xf32>
    %161 = arith.maximumf %159, %160 : vector<8x256xf32>
    %162 = vector.broadcast %143 : vector<1x256xf32> to vector<8x256xf32>
    %163 = arith.addf %161, %162 : vector<8x256xf32>
    %cst_120 = arith.constant 0.000000e+00 : f32
    %164 = vector.broadcast %cst_120 : f32 to vector<8x256xf32>
    %165 = arith.maximumf %163, %164 : vector<8x256xf32>
    %166 = arith.truncf %165 : vector<8x256xf32> to vector<8x256xbf16>
    %c16_121 = arith.constant 16 : index
    %c0_122 = arith.constant 0 : index
    %167 = vector.load %arg16[%c16_121, %c0_122] : memref<48x256xbf16, #tpu.memory_space<vmem>>, vector<8x256xbf16>
    tpu.vector_store %arg16[%c16_121, %c0_122], %166 {strides = array<i32>} : memref<48x256xbf16, #tpu.memory_space<vmem>>, vector<8x256xbf16>,
    %c32_123 = arith.constant 32 : index
    %c0_124 = arith.constant 0 : index
    %168 = vector.load %arg19[%c32_123, %c0_124] : memref<64x512xf32, #tpu.memory_space<vmem>>, vector<8x512xf32>
    %c40_125 = arith.constant 40 : index
    %c0_126 = arith.constant 0 : index
    %169 = vector.load %arg19[%c40_125, %c0_126] : memref<64x512xf32, #tpu.memory_space<vmem>>, vector<8x512xf32>
    %170 = arith.maximumf %168, %169 : vector<8x512xf32>
    %171 = vector.extract_strided_slice %170 {offsets = [0, 0], sizes = [8, 256], strides = [1, 1]} : vector<8x512xf32> to vector<8x256xf32>
    %172 = vector.extract_strided_slice %170 {offsets = [0, 256], sizes = [8, 256], strides = [1, 1]} : vector<8x512xf32> to vector<8x256xf32>
    %173 = arith.maximumf %171, %172 : vector<8x256xf32>
    %174 = vector.broadcast %143 : vector<1x256xf32> to vector<8x256xf32>
    %175 = arith.addf %173, %174 : vector<8x256xf32>
    %cst_127 = arith.constant 0.000000e+00 : f32
    %176 = vector.broadcast %cst_127 : f32 to vector<8x256xf32>
    %177 = arith.maximumf %175, %176 : vector<8x256xf32>
    %178 = arith.truncf %177 : vector<8x256xf32> to vector<8x256xbf16>
    %c24_128 = arith.constant 24 : index
    %c0_129 = arith.constant 0 : index
    %179 = vector.load %arg16[%c24_128, %c0_129] : memref<48x256xbf16, #tpu.memory_space<vmem>>, vector<8x256xbf16>
    tpu.vector_store %arg16[%c24_128, %c0_129], %178 {strides = array<i32>} : memref<48x256xbf16, #tpu.memory_space<vmem>>, vector<8x256xbf16>,
    %c48_130 = arith.constant 48 : index
    %c0_131 = arith.constant 0 : index
    %180 = vector.load %arg19[%c48_130, %c0_131] : memref<64x512xf32, #tpu.memory_space<vmem>>, vector<8x512xf32>
    %c56_132 = arith.constant 56 : index
    %c0_133 = arith.constant 0 : index
    %181 = vector.load %arg19[%c56_132, %c0_133] : memref<64x512xf32, #tpu.memory_space<vmem>>, vector<8x512xf32>
    %182 = arith.maximumf %180, %181 : vector<8x512xf32>
    %183 = vector.extract_strided_slice %182 {offsets = [0, 0], sizes = [8, 256], strides = [1, 1]} : vector<8x512xf32> to vector<8x256xf32>
    %184 = vector.extract_strided_slice %182 {offsets = [0, 256], sizes = [8, 256], strides = [1, 1]} : vector<8x512xf32> to vector<8x256xf32>
    %185 = arith.maximumf %183, %184 : vector<8x256xf32>
    %186 = vector.broadcast %143 : vector<1x256xf32> to vector<8x256xf32>
    %187 = arith.addf %185, %186 : vector<8x256xf32>
    %cst_134 = arith.constant 0.000000e+00 : f32
    %188 = vector.broadcast %cst_134 : f32 to vector<8x256xf32>
    %189 = arith.maximumf %187, %188 : vector<8x256xf32>
    %190 = arith.truncf %189 : vector<8x256xf32> to vector<8x256xbf16>
    %c32_135 = arith.constant 32 : index
    %c0_136 = arith.constant 0 : index
    %191 = vector.load %arg16[%c32_135, %c0_136] : memref<48x256xbf16, #tpu.memory_space<vmem>>, vector<8x256xbf16>
    tpu.vector_store %arg16[%c32_135, %c0_136], %190 {strides = array<i32>} : memref<48x256xbf16, #tpu.memory_space<vmem>>, vector<8x256xbf16>,
    %c0_137 = arith.constant 0 : index
    %c0_138 = arith.constant 0 : index
    %192 = vector.load %arg16[%c0_137, %c0_138] : memref<48x256xbf16, #tpu.memory_space<vmem>>, vector<32x256xbf16>
    %c0_139 = arith.constant 0 : index
    %c0_140 = arith.constant 0 : index
    %c0_141 = arith.constant 0 : index
    %193 = vector.load %arg6[%c0_139, %c0_140, %c0_141] : memref<3x256x512xbf16, #tpu.memory_space<vmem>>, vector<1x256x512xbf16>
    %194 = vector.shape_cast %193 : vector<1x256x512xbf16> to vector<256x512xbf16>
    %cst_142 = arith.constant dense<0.000000e+00> : vector<32x512xf32>
    %195 = tpu.matmul %192, %194, %cst_142 {dimension_numbers = #tpu.dot_dimension_numbers<[1], [0], [0], [1], [0, 0, 1, 1], [], []>} : vector<32x256xbf16>, vector<256x512xbf16>, vector<32x512xf32> -> vector<32x512xf32>
    %c0_143 = arith.constant 0 : index
    %c0_144 = arith.constant 0 : index
    %196 = vector.load %arg20[%c0_143, %c0_144] : memref<32x512xf32, #tpu.memory_space<vmem>>, vector<32x512xf32>
    tpu.vector_store %arg20[%c0_143, %c0_144], %195 {strides = array<i32>} : memref<32x512xf32, #tpu.memory_space<vmem>>, vector<32x512xf32>,
    %c8_145 = arith.constant 8 : index
    %c0_146 = arith.constant 0 : index
    %197 = vector.load %arg16[%c8_145, %c0_146] : memref<48x256xbf16, #tpu.memory_space<vmem>>, vector<32x256xbf16>
    %c1_147 = arith.constant 1 : index
    %c0_148 = arith.constant 0 : index
    %c0_149 = arith.constant 0 : index
    %198 = vector.load %arg6[%c1_147, %c0_148, %c0_149] : memref<3x256x512xbf16, #tpu.memory_space<vmem>>, vector<1x256x512xbf16>
    %199 = vector.shape_cast %198 : vector<1x256x512xbf16> to vector<256x512xbf16>
    %cst_150 = arith.constant dense<0.000000e+00> : vector<32x512xf32>
    %200 = tpu.matmul %197, %199, %cst_150 {dimension_numbers = #tpu.dot_dimension_numbers<[1], [0], [0], [1], [0, 0, 1, 1], [], []>} : vector<32x256xbf16>, vector<256x512xbf16>, vector<32x512xf32> -> vector<32x512xf32>
    %c0_151 = arith.constant 0 : index
    %c0_152 = arith.constant 0 : index
    %201 = vector.load %arg20[%c0_151, %c0_152] : memref<32x512xf32, #tpu.memory_space<vmem>>, vector<32x512xf32>
    %202 = arith.addf %201, %200 : vector<32x512xf32>
    %c0_153 = arith.constant 0 : index
    %c0_154 = arith.constant 0 : index
    %203 = vector.load %arg20[%c0_153, %c0_154] : memref<32x512xf32, #tpu.memory_space<vmem>>, vector<32x512xf32>
    tpu.vector_store %arg20[%c0_153, %c0_154], %202 {strides = array<i32>} : memref<32x512xf32, #tpu.memory_space<vmem>>, vector<32x512xf32>,
    %c16_155 = arith.constant 16 : index
    %c0_156 = arith.constant 0 : index
    %204 = vector.load %arg16[%c16_155, %c0_156] : memref<48x256xbf16, #tpu.memory_space<vmem>>, vector<32x256xbf16>
    %c2_157 = arith.constant 2 : index
    %c0_158 = arith.constant 0 : index
    %c0_159 = arith.constant 0 : index
    %205 = vector.load %arg6[%c2_157, %c0_158, %c0_159] : memref<3x256x512xbf16, #tpu.memory_space<vmem>>, vector<1x256x512xbf16>
    %206 = vector.shape_cast %205 : vector<1x256x512xbf16> to vector<256x512xbf16>
    %cst_160 = arith.constant dense<0.000000e+00> : vector<32x512xf32>
    %207 = tpu.matmul %204, %206, %cst_160 {dimension_numbers = #tpu.dot_dimension_numbers<[1], [0], [0], [1], [0, 0, 1, 1], [], []>} : vector<32x256xbf16>, vector<256x512xbf16>, vector<32x512xf32> -> vector<32x512xf32>
    %c0_161 = arith.constant 0 : index
    %c0_162 = arith.constant 0 : index
    %208 = vector.load %arg20[%c0_161, %c0_162] : memref<32x512xf32, #tpu.memory_space<vmem>>, vector<32x512xf32>
    %209 = arith.addf %208, %207 : vector<32x512xf32>
    %c0_163 = arith.constant 0 : index
    %c0_164 = arith.constant 0 : index
    %210 = vector.load %arg20[%c0_163, %c0_164] : memref<32x512xf32, #tpu.memory_space<vmem>>, vector<32x512xf32>
    tpu.vector_store %arg20[%c0_163, %c0_164], %209 {strides = array<i32>} : memref<32x512xf32, #tpu.memory_space<vmem>>, vector<32x512xf32>,
    %c0_165 = arith.constant 0 : index
    %c0_166 = arith.constant 0 : index
    %211 = vector.load %arg7[%c0_165, %c0_166] : memref<1x256xf32, #tpu.memory_space<vmem>>, vector<1x256xf32>
    %c0_167 = arith.constant 0 : index
    %c0_168 = arith.constant 0 : index
    %212 = vector.load %arg20[%c0_167, %c0_168] : memref<32x512xf32, #tpu.memory_space<vmem>>, vector<8x512xf32>
    %c8_169 = arith.constant 8 : index
    %c0_170 = arith.constant 0 : index
    %213 = vector.load %arg20[%c8_169, %c0_170] : memref<32x512xf32, #tpu.memory_space<vmem>>, vector<8x512xf32>
    %214 = arith.maximumf %212, %213 : vector<8x512xf32>
    %215 = vector.extract_strided_slice %214 {offsets = [0, 0], sizes = [8, 256], strides = [1, 1]} : vector<8x512xf32> to vector<8x256xf32>
    %216 = vector.extract_strided_slice %214 {offsets = [0, 256], sizes = [8, 256], strides = [1, 1]} : vector<8x512xf32> to vector<8x256xf32>
    %217 = arith.maximumf %215, %216 : vector<8x256xf32>
    %218 = vector.broadcast %211 : vector<1x256xf32> to vector<8x256xf32>
    %219 = arith.addf %217, %218 : vector<8x256xf32>
    %cst_171 = arith.constant 0.000000e+00 : f32
    %220 = vector.broadcast %cst_171 : f32 to vector<8x256xf32>
    %221 = arith.maximumf %219, %220 : vector<8x256xf32>
    %222 = arith.truncf %221 : vector<8x256xf32> to vector<8x256xbf16>
    %c0_172 = arith.constant 0 : index
    %c0_173 = arith.constant 0 : index
    %223 = vector.load %arg17[%c0_172, %c0_173] : memref<16x256xbf16, #tpu.memory_space<vmem>>, vector<8x256xbf16>
    tpu.vector_store %arg17[%c0_172, %c0_173], %222 {strides = array<i32>} : memref<16x256xbf16, #tpu.memory_space<vmem>>, vector<8x256xbf16>,
    %c16_174 = arith.constant 16 : index
    %c0_175 = arith.constant 0 : index
    %224 = vector.load %arg20[%c16_174, %c0_175] : memref<32x512xf32, #tpu.memory_space<vmem>>, vector<8x512xf32>
    %c24_176 = arith.constant 24 : index
    %c0_177 = arith.constant 0 : index
    %225 = vector.load %arg20[%c24_176, %c0_177] : memref<32x512xf32, #tpu.memory_space<vmem>>, vector<8x512xf32>
    %226 = arith.maximumf %224, %225 : vector<8x512xf32>
    %227 = vector.extract_strided_slice %226 {offsets = [0, 0], sizes = [8, 256], strides = [1, 1]} : vector<8x512xf32> to vector<8x256xf32>
    %228 = vector.extract_strided_slice %226 {offsets = [0, 256], sizes = [8, 256], strides = [1, 1]} : vector<8x512xf32> to vector<8x256xf32>
    %229 = arith.maximumf %227, %228 : vector<8x256xf32>
    %230 = vector.broadcast %211 : vector<1x256xf32> to vector<8x256xf32>
    %231 = arith.addf %229, %230 : vector<8x256xf32>
    %cst_178 = arith.constant 0.000000e+00 : f32
    %232 = vector.broadcast %cst_178 : f32 to vector<8x256xf32>
    %233 = arith.maximumf %231, %232 : vector<8x256xf32>
    %234 = arith.truncf %233 : vector<8x256xf32> to vector<8x256xbf16>
    %c8_179 = arith.constant 8 : index
    %c0_180 = arith.constant 0 : index
    %235 = vector.load %arg17[%c8_179, %c0_180] : memref<16x256xbf16, #tpu.memory_space<vmem>>, vector<8x256xbf16>
    tpu.vector_store %arg17[%c8_179, %c0_180], %234 {strides = array<i32>} : memref<16x256xbf16, #tpu.memory_space<vmem>>, vector<8x256xbf16>,
    %c0_181 = arith.constant 0 : index
    %c0_182 = arith.constant 0 : index
    %236 = vector.load %arg17[%c0_181, %c0_182] : memref<16x256xbf16, #tpu.memory_space<vmem>>, vector<8x256xbf16>
    %c8_183 = arith.constant 8 : index
    %c0_184 = arith.constant 0 : index
    %237 = vector.load %arg17[%c8_183, %c0_184] : memref<16x256xbf16, #tpu.memory_space<vmem>>, vector<8x256xbf16>
    %238 = tpu.concatenate %236, %237 in 1 : vector<8x256xbf16>, vector<8x256xbf16> -> vector<8x512xbf16>
    %c0_185 = arith.constant 0 : index
    %c0_186 = arith.constant 0 : index
    %239 = vector.load %arg8[%c0_185, %c0_186] : memref<512x256xbf16, #tpu.memory_space<vmem>>, vector<512x256xbf16>
    %cst_187 = arith.constant dense<0.000000e+00> : vector<8x256xf32>
    %240 = tpu.matmul %238, %239, %cst_187 {dimension_numbers = #tpu.dot_dimension_numbers<[1], [0], [0], [1], [0, 0, 1, 1], [], []>} : vector<8x512xbf16>, vector<512x256xbf16>, vector<8x256xf32> -> vector<8x256xf32>
    %c0_188 = arith.constant 0 : index
    %c0_189 = arith.constant 0 : index
    %241 = vector.load %arg9[%c0_188, %c0_189] : memref<1x256xf32, #tpu.memory_space<vmem>>, vector<1x256xf32>
    %242 = vector.broadcast %241 : vector<1x256xf32> to vector<8x256xf32>
    %243 = arith.addf %240, %242 : vector<8x256xf32>
    %cst_190 = arith.constant 0.000000e+00 : f32
    %244 = vector.broadcast %cst_190 : f32 to vector<8x256xf32>
    %245 = arith.maximumf %243, %244 : vector<8x256xf32>
    %246 = arith.truncf %245 : vector<8x256xf32> to vector<8x256xbf16>
    %c0_191 = arith.constant 0 : index
    %c0_192 = arith.constant 0 : index
    %247 = vector.load %arg10[%c0_191, %c0_192] : memref<256x128xbf16, #tpu.memory_space<vmem>>, vector<256x128xbf16>
    %cst_193 = arith.constant dense<0.000000e+00> : vector<8x128xf32>
    %248 = tpu.matmul %246, %247, %cst_193 {dimension_numbers = #tpu.dot_dimension_numbers<[1], [0], [0], [1], [0, 0, 1, 1], [], []>} : vector<8x256xbf16>, vector<256x128xbf16>, vector<8x128xf32> -> vector<8x128xf32>
    %c0_194 = arith.constant 0 : index
    %c0_195 = arith.constant 0 : index
    %249 = vector.load %arg11[%c0_194, %c0_195] : memref<1x128xf32, #tpu.memory_space<vmem>>, vector<1x128xf32>
    %250 = vector.broadcast %249 : vector<1x128xf32> to vector<8x128xf32>
    %251 = arith.addf %248, %250 : vector<8x128xf32>
    %cst_196 = arith.constant 0.000000e+00 : f32
    %252 = vector.broadcast %cst_196 : f32 to vector<8x128xf32>
    %253 = arith.maximumf %251, %252 : vector<8x128xf32>
    %254 = arith.truncf %253 : vector<8x128xf32> to vector<8x128xbf16>
    %c0_197 = arith.constant 0 : index
    %c0_198 = arith.constant 0 : index
    %255 = vector.load %arg12[%c0_197, %c0_198] : memref<128x128xbf16, #tpu.memory_space<vmem>>, vector<128x128xbf16>
    %cst_199 = arith.constant dense<0.000000e+00> : vector<8x128xf32>
    %256 = tpu.matmul %254, %255, %cst_199 {dimension_numbers = #tpu.dot_dimension_numbers<[1], [0], [0], [1], [0, 0, 1, 1], [], []>} : vector<8x128xbf16>, vector<128x128xbf16>, vector<8x128xf32> -> vector<8x128xf32>
    %c0_200 = arith.constant 0 : index
    %c0_201 = arith.constant 0 : index
    %257 = vector.load %arg13[%c0_200, %c0_201] : memref<1x128xf32, #tpu.memory_space<vmem>>, vector<1x128xf32>
    %258 = vector.broadcast %257 : vector<1x128xf32> to vector<8x128xf32>
    %259 = arith.addf %256, %258 : vector<8x128xf32>
    %cst_202 = arith.constant 0.000000e+00 : f32
    %260 = vector.broadcast %cst_202 : f32 to vector<8x128xf32>
    %261 = arith.subf %260, %259 : vector<8x128xf32>
    %262 = math.exp %261 : vector<8x128xf32>
    %cst_203 = arith.constant 1.000000e+00 : f32
    %263 = vector.broadcast %cst_203 : f32 to vector<8x128xf32>
    %264 = arith.addf %263, %262 : vector<8x128xf32>
    %265 = tpu.reciprocal %264 {approx = true} : vector<8x128xf32> -> vector<8x128xf32>
    %c0_204 = arith.constant 0 : index
    %c0_205 = arith.constant 0 : index
    %266 = vector.load %arg14[%c0_204, %c0_205] : memref<8x128xf32, #tpu.memory_space<vmem>>, vector<8x128xf32>
    tpu.vector_store %arg14[%c0_204, %c0_205], %265 {strides = array<i32>} : memref<8x128xf32, #tpu.memory_space<vmem>>, vector<8x128xf32>,
    return
  }
  func.func @transform_0(%arg0: i32) -> (i32, i32) {
    %c0_i32 = arith.constant 0 : i32
    %c0_i32_0 = arith.constant 0 : i32
    return %arg0, %c0_i32 : i32, i32
  }
  func.func @transform_1(%arg0: i32) -> (i32, i32, i32) {
    %c0_i32 = arith.constant 0 : i32
    %c0_i32_0 = arith.constant 0 : i32
    %c0_i32_1 = arith.constant 0 : i32
    %c0_i32_2 = arith.constant 0 : i32
    return %c0_i32, %c0_i32_0, %c0_i32_1 : i32, i32, i32
  }
  func.func @transform_2(%arg0: i32) -> (i32, i32) {
    %c0_i32 = arith.constant 0 : i32
    %c0_i32_0 = arith.constant 0 : i32
    %c0_i32_1 = arith.constant 0 : i32
    return %c0_i32, %c0_i32_0 : i32, i32
  }
  func.func @transform_3(%arg0: i32) -> (i32, i32, i32) {
    %c0_i32 = arith.constant 0 : i32
    %c0_i32_0 = arith.constant 0 : i32
    %c0_i32_1 = arith.constant 0 : i32
    %c0_i32_2 = arith.constant 0 : i32
    return %c0_i32, %c0_i32_0, %c0_i32_1 : i32, i32, i32
  }
  func.func @transform_4(%arg0: i32) -> (i32, i32) {
    %c0_i32 = arith.constant 0 : i32
    %c0_i32_0 = arith.constant 0 : i32
    %c0_i32_1 = arith.constant 0 : i32
    return %c0_i32, %c0_i32_0 : i32, i32
  }
  func.func @transform_5(%arg0: i32) -> (i32, i32, i32) {
    %c0_i32 = arith.constant 0 : i32
    %c0_i32_0 = arith.constant 0 : i32
    %c0_i32_1 = arith.constant 0 : i32
    %c0_i32_2 = arith.constant 0 : i32
    return %c0_i32, %c0_i32_0, %c0_i32_1 : i32, i32, i32
  }
  func.func @transform_6(%arg0: i32) -> (i32, i32) {
    %c0_i32 = arith.constant 0 : i32
    %c0_i32_0 = arith.constant 0 : i32
    %c0_i32_1 = arith.constant 0 : i32
    return %c0_i32, %c0_i32_0 : i32, i32
  }
  func.func @transform_7(%arg0: i32) -> (i32, i32) {
    %c0_i32 = arith.constant 0 : i32
    %c0_i32_0 = arith.constant 0 : i32
    %c0_i32_1 = arith.constant 0 : i32
    return %c0_i32, %c0_i32_0 : i32, i32
  }
  func.func @transform_8(%arg0: i32) -> (i32, i32) {
    %c0_i32 = arith.constant 0 : i32
    %c0_i32_0 = arith.constant 0 : i32
    %c0_i32_1 = arith.constant 0 : i32
    return %c0_i32, %c0_i32_0 : i32, i32
  }
  func.func @transform_9(%arg0: i32) -> (i32, i32) {
    %c0_i32 = arith.constant 0 : i32
    %c0_i32_0 = arith.constant 0 : i32
    %c0_i32_1 = arith.constant 0 : i32
    return %c0_i32, %c0_i32_0 : i32, i32
  }
  func.func @transform_10(%arg0: i32) -> (i32, i32) {
    %c0_i32 = arith.constant 0 : i32
    %c0_i32_0 = arith.constant 0 : i32
    %c0_i32_1 = arith.constant 0 : i32
    return %c0_i32, %c0_i32_0 : i32, i32
  }
  func.func @transform_11(%arg0: i32) -> (i32, i32) {
    %c0_i32 = arith.constant 0 : i32
    %c0_i32_0 = arith.constant 0 : i32
    %c0_i32_1 = arith.constant 0 : i32
    return %c0_i32, %c0_i32_0 : i32, i32
  }
  func.func @transform_12(%arg0: i32) -> (i32, i32) {
    %c0_i32 = arith.constant 0 : i32
    %c0_i32_0 = arith.constant 0 : i32
    %c0_i32_1 = arith.constant 0 : i32
    return %c0_i32, %c0_i32_0 : i32, i32
  }
  func.func @transform_13(%arg0: i32) -> (i32, i32) {
    %c0_i32 = arith.constant 0 : i32
    %c0_i32_0 = arith.constant 0 : i32
    return %arg0, %c0_i32 : i32, i32
  }
}

</mosaic_0001>

<llo_original>
// kernel: cnn_forward.1
$region0: #{cnn_forward.1}
  #allocation0 [shape = 'u32[]', space=smem, size = 0x4, offset = 0x4, fixed_abs, tag = 'smem constant byte address 0x4 - core index']
  #allocation1 [shape = 'u32[72,128]{1,0:T(1,128)}', space=vmem, size = 0x9000, scoped, tag = 'internal scratch']
  #allocation2 [shape = 'bf16[80,128]{1,0:T(8,128)(2,1)}', space=vmem, size = 0x5000, scoped, tag = 'scratch operand']
  #allocation3 [shape = 'bf16[48,256]{1,0:T(8,128)(2,1)}', space=vmem, size = 0x6000, scoped, tag = 'scratch operand']
  #allocation4 [shape = 'bf16[16,256]{1,0:T(8,128)(2,1)}', space=vmem, size = 0x2000, scoped, tag = 'scratch operand']
  #allocation5 [shape = 'f32[128,256]{1,0:T(8,128)}', space=vmem, size = 0x20000, scoped, tag = 'scratch operand']
  #allocation6 [shape = 'f32[64,512]{1,0:T(8,128)}', space=vmem, size = 0x20000, scoped, tag = 'scratch operand']
  #allocation7 [shape = 'f32[32,512]{1,0:T(8,128)}', space=vmem, size = 0x10000, scoped, tag = 'scratch operand']
  %s0 = inlined_call_operand.vmem [shape: bf16[144,128], index: 0, kind: input, shape index: {}]
  %s1 = inlined_call_operand.hbm [shape: bf16[3,128,256], index: 1, kind: input, shape index: {}]
  %s2 = inlined_call_operand.vmem [shape: f32[1,128], index: 2, kind: input, shape index: {}]
  %s3 = inlined_call_operand.vmem [shape: bf16[3,128,512], index: 3, kind: input, shape index: {}]
  %s4 = inlined_call_operand.vmem [shape: f32[1,256], index: 4, kind: input, shape index: {}]
  %s5 = inlined_call_operand.hbm [shape: bf16[3,256,512], index: 5, kind: input, shape index: {}]
  %s6 = inlined_call_operand.vmem [shape: f32[1,256], index: 6, kind: input, shape index: {}]
  %s7 = inlined_call_operand.vmem [shape: bf16[512,256], index: 7, kind: input, shape index: {}]
  %s8 = inlined_call_operand.vmem [shape: f32[1,256], index: 8, kind: input, shape index: {}]
  %s9 = inlined_call_operand.hbm [shape: bf16[256,128], index: 9, kind: input, shape index: {}]
  %s10 = inlined_call_operand.vmem [shape: f32[1,128], index: 10, kind: input, shape index: {}]
  %s11 = inlined_call_operand.vmem [shape: bf16[128,128], index: 11, kind: input, shape index: {}]
  %s12 = inlined_call_operand.vmem [shape: f32[1,128], index: 12, kind: input, shape index: {}]
  %s13 = inlined_call_operand.vmem [shape: f32[8,128], index: 13, kind: output, shape index: {}]
  %s14 = sld [smem:[#allocation0]]
  $region74: #{cnn_forward.1} parent=0
    _
  %s16 = ssub.s32 1, %s14
  %s17 = scalar_select 0, %s16, %s14
  $region1: #{cnn_forward.1} parent=0
    #allocation8 [shape = 'u8[196608]{0}', space=vmem, size = 0x30000, scoped, tag = 'input window, operand 1, single buffered']
    #allocation9 [shape = 's32[1]{0}', space=sflag, size = 0x4, scoped, tag = 'scoped memory for cnn_forward.1']
    #allocation10 [shape = 'u8[786432]{0}', space=vmem, size = 0xc0000, scoped, tag = 'input window, operand 5, single buffered']
    #allocation11 [shape = 's32[1]{0}', space=sflag, size = 0x4, scoped, tag = 'scoped memory for cnn_forward.1']
    #allocation12 [shape = 'u8[65536]{0}', space=vmem, size = 0x10000, scoped, tag = 'input window, operand 9, single buffered']
    %18 = vsyncpa [#allocation9], 0
    %19 = vsyncpa [#allocation11], 0
    // Predicated region
    $region2: #{cnn_forward.1} parent=1 // pred_check
      _
    $region3: #{cnn_forward.1} parent=1 // pred_check_branch
      %21 = sbr.rel (0) target = $region5
    $region4: #{cnn_forward.1} parent=1 // pred_region
      _
    $region5: #{cnn_forward.1} parent=1 // pred_fallthru
      _
    // Predicated region
    $region6: #{cnn_forward.1} parent=1 // pred_check
      _
    $region7: #{cnn_forward.1} parent=1 // pred_check_branch
      %23 = sbr.rel (0) target = $region9
    $region8: #{cnn_forward.1} parent=1 // pred_region
      %25 = vsyncadd [#allocation9], 0
      %s26 = sshll.u32 %s1, 4
      %s27 = int_to_ptr.hbm [resolvable:$true] %s26
      %s28 = sshll.u32 [#allocation8], 4
      %s29 = int_to_ptr.vmem [resolvable:$true] %s28
      %34 = dma.hbm_to_vmem [thread:$0]  %s27, 6144, %s29, [#allocation9], 128, 128, 8
    $region9: #{cnn_forward.1} parent=1 // pred_fallthru
      _
    // Predicated region
    $region10: #{cnn_forward.1} parent=1 // pred_check
      _
    $region11: #{cnn_forward.1} parent=1 // pred_check_branch
      %36 = sbr.rel (0) target = $region13
    $region12: #{cnn_forward.1} parent=1 // pred_region
      _
    $region13: #{cnn_forward.1} parent=1 // pred_fallthru
      _
    // Predicated region
    $region14: #{cnn_forward.1} parent=1 // pred_check
      _
    $region15: #{cnn_forward.1} parent=1 // pred_check_branch
      %38 = sbr.rel (0) target = $region17
    $region16: #{cnn_forward.1} parent=1 // pred_region
      _
    $region17: #{cnn_forward.1} parent=1 // pred_fallthru
      _
    // Predicated region
    $region18: #{cnn_forward.1} parent=1 // pred_check
      _
    $region19: #{cnn_forward.1} parent=1 // pred_check_branch
      %40 = sbr.rel (0) target = $region21
    $region20: #{cnn_forward.1} parent=1 // pred_region
      _
    $region21: #{cnn_forward.1} parent=1 // pred_fallthru
      _
    // Predicated region
    $region22: #{cnn_forward.1} parent=1 // pred_check
      _
    $region23: #{cnn_forward.1} parent=1 // pred_check_branch
      %42 = sbr.rel (0) target = $region25
    $region24: #{cnn_forward.1} parent=1 // pred_region
      %44 = vsyncadd [#allocation11], 0
      %s45 = sshll.u32 %s5, 4
      %s46 = int_to_ptr.hbm [resolvable:$true] %s45
      %s47 = sshll.u32 [#allocation10], 4
      %s48 = int_to_ptr.vmem [resolvable:$true] %s47
      %53 = dma.hbm_to_vmem [thread:$0]  %s46, 24576, %s48, [#allocation11], 256, 256, 16
    $region25: #{cnn_forward.1} parent=1 // pred_fallthru
      _
    // Predicated region
    $region26: #{cnn_forward.1} parent=1 // pred_check
      _
    $region27: #{cnn_forward.1} parent=1 // pred_check_branch
      %55 = sbr.rel (0) target = $region29
    $region28: #{cnn_forward.1} parent=1 // pred_region
      _
    $region29: #{cnn_forward.1} parent=1 // pred_fallthru
      _
    // Predicated region
    $region30: #{cnn_forward.1} parent=1 // pred_check
      _
    $region31: #{cnn_forward.1} parent=1 // pred_check_branch
      %57 = sbr.rel (0) target = $region33
    $region32: #{cnn_forward.1} parent=1 // pred_region
      _
    $region33: #{cnn_forward.1} parent=1 // pred_fallthru
      _
    // Predicated region
    $region34: #{cnn_forward.1} parent=1 // pred_check
      _
    $region35: #{cnn_forward.1} parent=1 // pred_check_branch
      %59 = sbr.rel (0) target = $region37
    $region36: #{cnn_forward.1} parent=1 // pred_region
      _
    $region37: #{cnn_forward.1} parent=1 // pred_fallthru
      _
    // Predicated region
    $region38: #{cnn_forward.1} parent=1 // pred_check
      _
    $region39: #{cnn_forward.1} parent=1 // pred_check_branch
      %61 = sbr.rel (0) target = $region41
    $region40: #{cnn_forward.1} parent=1 // pred_region
      %63 = vsyncadd [#allocation11], 0
      %s64 = sshll.u32 %s9, 4
      %s65 = int_to_ptr.hbm [resolvable:$true] %s64
      %s66 = sshll.u32 [#allocation12], 4
      %s67 = int_to_ptr.vmem [resolvable:$true] %s66
      %72 = dma.hbm_to_vmem [thread:$0]  %s65, 2048, %s67, [#allocation11], 64, 64, 4
    $region41: #{cnn_forward.1} parent=1 // pred_fallthru
      _
    // Predicated region
    $region42: #{cnn_forward.1} parent=1 // pred_check
      _
    $region43: #{cnn_forward.1} parent=1 // pred_check_branch
      %74 = sbr.rel (0) target = $region45
    $region44: #{cnn_forward.1} parent=1 // pred_region
      _
    $region45: #{cnn_forward.1} parent=1 // pred_fallthru
      _
    // Predicated region
    $region46: #{cnn_forward.1} parent=1 // pred_check
      _
    $region47: #{cnn_forward.1} parent=1 // pred_check_branch
      %76 = sbr.rel (0) target = $region49
    $region48: #{cnn_forward.1} parent=1 // pred_region
      _
    $region49: #{cnn_forward.1} parent=1 // pred_fallthru
      _
    // Predicated region
    $region50: #{cnn_forward.1} parent=1 // pred_check
      _
    $region51: #{cnn_forward.1} parent=1 // pred_check_branch
      %78 = sbr.rel (0) target = $region53
    $region52: #{cnn_forward.1} parent=1 // pred_region
      _
    $region53: #{cnn_forward.1} parent=1 // pred_fallthru
      _
    // Predicated region
    $region54: #{cnn_forward.1} parent=1 // pred_check
      _
    $region55: #{cnn_forward.1} parent=1 // pred_check_branch
      %80 = sbr.rel (0) target = $region57
    $region56: #{cnn_forward.1} parent=1 // pred_region
      %82 = dma.done [#allocation9], 6144
    $region57: #{cnn_forward.1} parent=1 // pred_fallthru
      _
    // Predicated region
    $region58: #{cnn_forward.1} parent=1 // pred_check
      _
    $region59: #{cnn_forward.1} parent=1 // pred_check_branch
      %84 = sbr.rel (0) target = $region61
    $region60: #{cnn_forward.1} parent=1 // pred_region
      %86 = dma.done [#allocation11], 24576
    $region61: #{cnn_forward.1} parent=1 // pred_fallthru
      _
    // Predicated region
    $region62: #{cnn_forward.1} parent=1 // pred_check
      _
    $region63: #{cnn_forward.1} parent=1 // pred_check_branch
      %88 = sbr.rel (0) target = $region65
    $region64: #{cnn_forward.1} parent=1 // pred_region
      %90 = dma.done [#allocation11], 2048
    $region65: #{cnn_forward.1} parent=1 // pred_fallthru
      _
    %92 = vst [vmem:[#allocation2] sm:$0xf] 0
    %93 = vst [vmem:[#allocation2 + $0x24] sm:$0xf] 0
    %94 = vst [vmem:[#allocation3] sm:$0xff] 0
    %95 = vst [vmem:[#allocation3 + $0x28] sm:$0xff] 0
    %v96 = vld [vmem:[%s0] sm:$0xf]
    %v97 = vld [vmem:[%s0 + $0x4] sm:$0xf]
    %v98 = vld [vmem:[%s0 + $0x8] sm:$0xf]
    %v99 = vld [vmem:[%s0 + $0xc] sm:$0xf]
    %v100 = vld [vmem:[%s0 + $0x10] sm:$0xf]
    %v101 = vld [vmem:[%s0 + $0x14] sm:$0xf]
    %v102 = vld [vmem:[%s0 + $0x18] sm:$0xf]
    %v103 = vld [vmem:[%s0 + $0x1c] sm:$0xf]
    %v104 = vld [vmem:[%s0 + $0x20] sm:$0xf]
    %v105 = vld [vmem:[%s0 + $0x24] sm:$0xf]
    %v106 = vld [vmem:[%s0 + $0x28] sm:$0xf]
    %v107 = vld [vmem:[%s0 + $0x2c] sm:$0xf]
    %v108 = vld [vmem:[%s0 + $0x30] sm:$0xf]
    %v109 = vld [vmem:[%s0 + $0x34] sm:$0xf]
    %v110 = vld [vmem:[%s0 + $0x38] sm:$0xf]
    %v111 = vld [vmem:[%s0 + $0x3c] sm:$0xf]
    %v112 = vld [vmem:[#allocation8] sm:$0xff]
    %v113 = vld [vmem:[#allocation8 + $0x8] sm:$0xff]
    %v114 = vld [vmem:[#allocation8 + $0x10] sm:$0xff]
    %v115 = vld [vmem:[#allocation8 + $0x18] sm:$0xff]
    %v116 = vld [vmem:[#allocation8 + $0x20] sm:$0xff]
    %v117 = vld [vmem:[#allocation8 + $0x28] sm:$0xff]
    %v118 = vld [vmem:[#allocation8 + $0x30] sm:$0xff]
    %v119 = vld [vmem:[#allocation8 + $0x38] sm:$0xff]
    %v120 = vld [vmem:[#allocation8 + $0x40] sm:$0xff]
    %v121 = vld [vmem:[#allocation8 + $0x48] sm:$0xff]
    %v122 = vld [vmem:[#allocation8 + $0x50] sm:$0xff]
    %v123 = vld [vmem:[#allocation8 + $0x58] sm:$0xff]
    %v124 = vld [vmem:[#allocation8 + $0x60] sm:$0xff]
    %v125 = vld [vmem:[#allocation8 + $0x68] sm:$0xff]
    %v126 = vld [vmem:[#allocation8 + $0x70] sm:$0xff]
    %v127 = vld [vmem:[#allocation8 + $0x78] sm:$0xff]
    %v144 = vunpack.c.l.b16 %v96
    %v145 = vunpack.c.l.b16 %v97
    %v146 = vunpack.c.l.b16 %v98
    %v147 = vunpack.c.l.b16 %v99
    %v148 = vunpack.c.l.b16 %v100
    %v149 = vunpack.c.l.b16 %v101
    %v150 = vunpack.c.l.b16 %v102
    %v151 = vunpack.c.l.b16 %v103
    %v152 = vunpack.c.l.b16 %v104
    %v153 = vunpack.c.l.b16 %v105
    %v154 = vunpack.c.l.b16 %v106
    %v155 = vunpack.c.l.b16 %v107
    %v156 = vunpack.c.l.b16 %v108
    %v157 = vunpack.c.l.b16 %v109
    %v158 = vunpack.c.l.b16 %v110
    %v159 = vunpack.c.l.b16 %v111
    %v160 = vpack.c.b16 %v145, %v144
    %v161 = vpack.c.b16 %v147, %v146
    %v162 = vpack.c.b16 %v149, %v148
    %v163 = vpack.c.b16 %v151, %v150
    %v164 = vpack.c.b16 %v153, %v152
    %v165 = vpack.c.b16 %v155, %v154
    %v166 = vpack.c.b16 %v157, %v156
    %v167 = vpack.c.b16 %v159, %v158
    %v192 = vunpack.c.l.b16 %v112
    %v193 = vunpack.c.h.b16 %v112
    %v194 = vunpack.c.l.b16 %v113
    %v195 = vunpack.c.h.b16 %v113
    %v196 = vunpack.c.l.b16 %v114
    %v197 = vunpack.c.h.b16 %v114
    %v198 = vunpack.c.l.b16 %v115
    %v199 = vunpack.c.h.b16 %v115
    %v200 = vunpack.c.l.b16 %v116
    %v201 = vunpack.c.h.b16 %v116
    %v202 = vunpack.c.l.b16 %v117
    %v203 = vunpack.c.h.b16 %v117
    %v204 = vunpack.c.l.b16 %v118
    %v205 = vunpack.c.h.b16 %v118
    %v206 = vunpack.c.l.b16 %v119
    %v207 = vunpack.c.h.b16 %v119
    %v208 = vunpack.c.l.b16 %v120
    %v209 = vunpack.c.h.b16 %v120
    %v210 = vunpack.c.l.b16 %v121
    %v211 = vunpack.c.h.b16 %v121
    %v212 = vunpack.c.l.b16 %v122
    %v213 = vunpack.c.h.b16 %v122
    %v214 = vunpack.c.l.b16 %v123
    %v215 = vunpack.c.h.b16 %v123
    %v216 = vunpack.c.l.b16 %v124
    %v217 = vunpack.c.h.b16 %v124
    %v218 = vunpack.c.l.b16 %v125
    %v219 = vunpack.c.h.b16 %v125
    %v220 = vunpack.c.l.b16 %v126
    %v221 = vunpack.c.h.b16 %v126
    %v222 = vunpack.c.l.b16 %v127
    %v223 = vunpack.c.h.b16 %v127
    %v224 = vpack.c.b16 %v194, %v192
    %v225 = vpack.c.b16 %v195, %v193
    %v226 = vpack.c.b16 %v198, %v196
    %v227 = vpack.c.b16 %v199, %v197
    %v228 = vpack.c.b16 %v202, %v200
    %v229 = vpack.c.b16 %v203, %v201
    %v230 = vpack.c.b16 %v206, %v204
    %v231 = vpack.c.b16 %v207, %v205
    %v232 = vpack.c.b16 %v210, %v208
    %v233 = vpack.c.b16 %v211, %v209
    %v234 = vpack.c.b16 %v214, %v212
    %v235 = vpack.c.b16 %v215, %v213
    %v236 = vpack.c.b16 %v218, %v216
    %v237 = vpack.c.b16 %v219, %v217
    %v238 = vpack.c.b16 %v222, %v220
    %v239 = vpack.c.b16 %v223, %v221
    %256 = vmatpush.bf16.msra.mxu0 %v238
    %257 = vmatpush.bf16.msra.mxu0 %v236
    %258 = vmatpush.bf16.msra.mxu0 %v234
    %259 = vmatpush.bf16.msra.mxu0 %v232
    %260 = vmatpush.bf16.msra.mxu0 %v230
    %261 = vmatpush.bf16.msra.mxu0 %v228
    %262 = vmatpush.bf16.msra.mxu0 %v226
    %263 = vmatpush.bf16.msra.mxu0 %v224
    %264 = vmatmul.bf16.gmra.mxu0 %v160
    %v265 = vpop.f32.mrf.mxu0
    %v266 = vadd.f32 0.0, %v265
    %v267 = vpop.f32.mrf.mxu0
    %v268 = vadd.f32 0.0, %v267
    %269 = vmatmul.bf16.gmra.mxu0 %v161
    %v270 = vpop.f32.mrf.mxu0
    %v271 = vadd.f32 0.0, %v270
    %v272 = vpop.f32.mrf.mxu0
    %v273 = vadd.f32 0.0, %v272
    %274 = vmatmul.bf16.gmra.mxu0 %v162
    %v275 = vpop.f32.mrf.mxu0
    %v276 = vadd.f32 0.0, %v275
    %v277 = vpop.f32.mrf.mxu0
    %v278 = vadd.f32 0.0, %v277
    %279 = vmatmul.bf16.gmra.mxu0 %v163
    %v280 = vpop.f32.mrf.mxu0
    %v281 = vadd.f32 0.0, %v280
    %v282 = vpop.f32.mrf.mxu0
    %v283 = vadd.f32 0.0, %v282
    %284 = vmatmul.bf16.gmra.mxu0 %v164
    %v285 = vpop.f32.mrf.mxu0
    %v286 = vadd.f32 0.0, %v285
    %v287 = vpop.f32.mrf.mxu0
    %v288 = vadd.f32 0.0, %v287
    %289 = vmatmul.bf16.gmra.mxu0 %v165
    %v290 = vpop.f32.mrf.mxu0
    %v291 = vadd.f32 0.0, %v290
    %v292 = vpop.f32.mrf.mxu0
    %v293 = vadd.f32 0.0, %v292
    %294 = vmatmul.bf16.gmra.mxu0 %v166
    %v295 = vpop.f32.mrf.mxu0
    %v296 = vadd.f32 0.0, %v295
    %v297 = vpop.f32.mrf.mxu0
    %v298 = vadd.f32 0.0, %v297
    %299 = vmatmul.bf16.gmra.mxu0 %v167
    %v300 = vpop.f32.mrf.mxu0
    %v301 = vadd.f32 0.0, %v300
    %v302 = vpop.f32.mrf.mxu0
    %v303 = vadd.f32 0.0, %v302
    %304 = vdwg.mxu0
    %305 = vmatpush.bf16.msra.mxu0 %v239
    %306 = vmatpush.bf16.msra.mxu0 %v237
    %307 = vmatpush.bf16.msra.mxu0 %v235
    %308 = vmatpush.bf16.msra.mxu0 %v233
    %309 = vmatpush.bf16.msra.mxu0 %v231
    %310 = vmatpush.bf16.msra.mxu0 %v229
    %311 = vmatpush.bf16.msra.mxu0 %v227
    %312 = vmatpush.bf16.msra.mxu0 %v225
    %313 = vmatmul.bf16.gmra.mxu0 %v160
    %v314 = vpop.f32.mrf.mxu0
    %v315 = vadd.f32 0.0, %v314
    %v316 = vpop.f32.mrf.mxu0
    %v317 = vadd.f32 0.0, %v316
    %318 = vmatmul.bf16.gmra.mxu0 %v161
    %v319 = vpop.f32.mrf.mxu0
    %v320 = vadd.f32 0.0, %v319
    %v321 = vpop.f32.mrf.mxu0
    %v322 = vadd.f32 0.0, %v321
    %323 = vmatmul.bf16.gmra.mxu0 %v162
    %v324 = vpop.f32.mrf.mxu0
    %v325 = vadd.f32 0.0, %v324
    %v326 = vpop.f32.mrf.mxu0
    %v327 = vadd.f32 0.0, %v326
    %328 = vmatmul.bf16.gmra.mxu0 %v163
    %v329 = vpop.f32.mrf.mxu0
    %v330 = vadd.f32 0.0, %v329
    %v331 = vpop.f32.mrf.mxu0
    %v332 = vadd.f32 0.0, %v331
    %333 = vmatmul.bf16.gmra.mxu0 %v164
    %v334 = vpop.f32.mrf.mxu0
    %v335 = vadd.f32 0.0, %v334
    %v336 = vpop.f32.mrf.mxu0
    %v337 = vadd.f32 0.0, %v336
    %338 = vmatmul.bf16.gmra.mxu0 %v165
    %v339 = vpop.f32.mrf.mxu0
    %v340 = vadd.f32 0.0, %v339
    %v341 = vpop.f32.mrf.mxu0
    %v342 = vadd.f32 0.0, %v341
    %343 = vmatmul.bf16.gmra.mxu0 %v166
    %v344 = vpop.f32.mrf.mxu0
    %v345 = vadd.f32 0.0, %v344
    %v346 = vpop.f32.mrf.mxu0
    %v347 = vadd.f32 0.0, %v346
    %348 = vmatmul.bf16.gmra.mxu0 %v167
    %v349 = vpop.f32.mrf.mxu0
    %v350 = vadd.f32 0.0, %v349
    %v351 = vpop.f32.mrf.mxu0
    %v352 = vadd.f32 0.0, %v351
    %353 = vdwg.mxu0
    %354 = vst [vmem:[#allocation5] sm:$0xff] %v266
    %355 = vst [vmem:[#allocation5 + $0x8] sm:$0xff] %v315
    %356 = vst [vmem:[#allocation5 + $0x10] sm:$0xff] %v268
    %357 = vst [vmem:[#allocation5 + $0x18] sm:$0xff] %v317
    %358 = vst [vmem:[#allocation5 + $0x20] sm:$0xff] %v271
    %359 = vst [vmem:[#allocation5 + $0x28] sm:$0xff] %v320
    %360 = vst [vmem:[#allocation5 + $0x30] sm:$0xff] %v273
    %361 = vst [vmem:[#allocation5 + $0x38] sm:$0xff] %v322
    %362 = vst [vmem:[#allocation5 + $0x40] sm:$0xff] %v276
    %363 = vst [vmem:[#allocation5 + $0x48] sm:$0xff] %v325
    %364 = vst [vmem:[#allocation5 + $0x50] sm:$0xff] %v278
    %365 = vst [vmem:[#allocation5 + $0x58] sm:$0xff] %v327
    %366 = vst [vmem:[#allocation5 + $0x60] sm:$0xff] %v281
    %367 = vst [vmem:[#allocation5 + $0x68] sm:$0xff] %v330
    %368 = vst [vmem:[#allocation5 + $0x70] sm:$0xff] %v283
    %369 = vst [vmem:[#allocation5 + $0x78] sm:$0xff] %v332
    %370 = vst [vmem:[#allocation5 + $0x80] sm:$0xff] %v286
    %371 = vst [vmem:[#allocation5 + $0x88] sm:$0xff] %v335
    %372 = vst [vmem:[#allocation5 + $0x90] sm:$0xff] %v288
    %373 = vst [vmem:[#allocation5 + $0x98] sm:$0xff] %v337
    %374 = vst [vmem:[#allocation5 + $0xa0] sm:$0xff] %v291
    %375 = vst [vmem:[#allocation5 + $0xa8] sm:$0xff] %v340
    %376 = vst [vmem:[#allocation5 + $0xb0] sm:$0xff] %v293
    %377 = vst [vmem:[#allocation5 + $0xb8] sm:$0xff] %v342
    %378 = vst [vmem:[#allocation5 + $0xc0] sm:$0xff] %v296
    %379 = vst [vmem:[#allocation5 + $0xc8] sm:$0xff] %v345
    %380 = vst [vmem:[#allocation5 + $0xd0] sm:$0xff] %v298
    %381 = vst [vmem:[#allocation5 + $0xd8] sm:$0xff] %v347
    %382 = vst [vmem:[#allocation5 + $0xe0] sm:$0xff] %v301
    %383 = vst [vmem:[#allocation5 + $0xe8] sm:$0xff] %v350
    %384 = vst [vmem:[#allocation5 + $0xf0] sm:$0xff] %v303
    %385 = vst [vmem:[#allocation5 + $0xf8] sm:$0xff] %v352
    %v386 = vld [vmem:[%s0 + $0x4] sm:$0xf]
    %v387 = vld [vmem:[%s0 + $0x8] sm:$0xf]
    %v388 = vld [vmem:[%s0 + $0xc] sm:$0xf]
    %v389 = vld [vmem:[%s0 + $0x10] sm:$0xf]
    %v390 = vld [vmem:[%s0 + $0x14] sm:$0xf]
    %v391 = vld [vmem:[%s0 + $0x18] sm:$0xf]
    %v392 = vld [vmem:[%s0 + $0x1c] sm:$0xf]
    %v393 = vld [vmem:[%s0 + $0x20] sm:$0xf]
    %v394 = vld [vmem:[%s0 + $0x24] sm:$0xf]
    %v395 = vld [vmem:[%s0 + $0x28] sm:$0xf]
    %v396 = vld [vmem:[%s0 + $0x2c] sm:$0xf]
    %v397 = vld [vmem:[%s0 + $0x30] sm:$0xf]
    %v398 = vld [vmem:[%s0 + $0x34] sm:$0xf]
    %v399 = vld [vmem:[%s0 + $0x38] sm:$0xf]
    %v400 = vld [vmem:[%s0 + $0x3c] sm:$0xf]
    %v401 = vld [vmem:[%s0 + $0x40] sm:$0xf]
    %s402 = scalar_lea.vmem [#allocation8], 128
    %v403 = vld [vmem:[%s402] sm:$0xff]
    %v404 = vld [vmem:[%s402 + $0x8] sm:$0xff]
    %v405 = vld [vmem:[%s402 + $0x10] sm:$0xff]
    %v406 = vld [vmem:[%s402 + $0x18] sm:$0xff]
    %v407 = vld [vmem:[%s402 + $0x20] sm:$0xff]
    %v408 = vld [vmem:[%s402 + $0x28] sm:$0xff]
    %v409 = vld [vmem:[%s402 + $0x30] sm:$0xff]
    %v410 = vld [vmem:[%s402 + $0x38] sm:$0xff]
    %v411 = vld [vmem:[%s402 + $0x40] sm:$0xff]
    %v412 = vld [vmem:[%s402 + $0x48] sm:$0xff]
    %v413 = vld [vmem:[%s402 + $0x50] sm:$0xff]
    %v414 = vld [vmem:[%s402 + $0x58] sm:$0xff]
    %v415 = vld [vmem:[%s402 + $0x60] sm:$0xff]
    %v416 = vld [vmem:[%s402 + $0x68] sm:$0xff]
    %v417 = vld [vmem:[%s402 + $0x70] sm:$0xff]
    %v418 = vld [vmem:[%s402 + $0x78] sm:$0xff]
    %v435 = vunpack.c.l.b16 %v386
    %v436 = vunpack.c.l.b16 %v387
    %v437 = vunpack.c.l.b16 %v388
    %v438 = vunpack.c.l.b16 %v389
    %v439 = vunpack.c.l.b16 %v390
    %v440 = vunpack.c.l.b16 %v391
    %v441 = vunpack.c.l.b16 %v392
    %v442 = vunpack.c.l.b16 %v393
    %v443 = vunpack.c.l.b16 %v394
    %v444 = vunpack.c.l.b16 %v395
    %v445 = vunpack.c.l.b16 %v396
    %v446 = vunpack.c.l.b16 %v397
    %v447 = vunpack.c.l.b16 %v398
    %v448 = vunpack.c.l.b16 %v399
    %v449 = vunpack.c.l.b16 %v400
    %v450 = vunpack.c.l.b16 %v401
    %v451 = vpack.c.b16 %v436, %v435
    %v452 = vpack.c.b16 %v438, %v437
    %v453 = vpack.c.b16 %v440, %v439
    %v454 = vpack.c.b16 %v442, %v441
    %v455 = vpack.c.b16 %v444, %v443
    %v456 = vpack.c.b16 %v446, %v445
    %v457 = vpack.c.b16 %v448, %v447
    %v458 = vpack.c.b16 %v450, %v449
    %v483 = vunpack.c.l.b16 %v403
    %v484 = vunpack.c.h.b16 %v403
    %v485 = vunpack.c.l.b16 %v404
    %v486 = vunpack.c.h.b16 %v404
    %v487 = vunpack.c.l.b16 %v405
    %v488 = vunpack.c.h.b16 %v405
    %v489 = vunpack.c.l.b16 %v406
    %v490 = vunpack.c.h.b16 %v406
    %v491 = vunpack.c.l.b16 %v407
    %v492 = vunpack.c.h.b16 %v407
    %v493 = vunpack.c.l.b16 %v408
    %v494 = vunpack.c.h.b16 %v408
    %v495 = vunpack.c.l.b16 %v409
    %v496 = vunpack.c.h.b16 %v409
    %v497 = vunpack.c.l.b16 %v410
    %v498 = vunpack.c.h.b16 %v410
    %v499 = vunpack.c.l.b16 %v411
    %v500 = vunpack.c.h.b16 %v411
    %v501 = vunpack.c.l.b16 %v412
    %v502 = vunpack.c.h.b16 %v412
    %v503 = vunpack.c.l.b16 %v413
    %v504 = vunpack.c.h.b16 %v413
    %v505 = vunpack.c.l.b16 %v414
    %v506 = vunpack.c.h.b16 %v414
    %v507 = vunpack.c.l.b16 %v415
    %v508 = vunpack.c.h.b16 %v415
    %v509 = vunpack.c.l.b16 %v416
    %v510 = vunpack.c.h.b16 %v416
    %v511 = vunpack.c.l.b16 %v417
    %v512 = vunpack.c.h.b16 %v417
    %v513 = vunpack.c.l.b16 %v418
    %v514 = vunpack.c.h.b16 %v418
    %v515 = vpack.c.b16 %v485, %v483
    %v516 = vpack.c.b16 %v486, %v484
    %v517 = vpack.c.b16 %v489, %v487
    %v518 = vpack.c.b16 %v490, %v488
    %v519 = vpack.c.b16 %v493, %v491
    %v520 = vpack.c.b16 %v494, %v492
    %v521 = vpack.c.b16 %v497, %v495
    %v522 = vpack.c.b16 %v498, %v496
    %v523 = vpack.c.b16 %v501, %v499
    %v524 = vpack.c.b16 %v502, %v500
    %v525 = vpack.c.b16 %v505, %v503
    %v526 = vpack.c.b16 %v506, %v504
    %v527 = vpack.c.b16 %v509, %v507
    %v528 = vpack.c.b16 %v510, %v508
    %v529 = vpack.c.b16 %v513, %v511
    %v530 = vpack.c.b16 %v514, %v512
    %547 = vmatpush.bf16.msra.mxu0 %v529
    %548 = vmatpush.bf16.msra.mxu0 %v527
    %549 = vmatpush.bf16.msra.mxu0 %v525
    %550 = vmatpush.bf16.msra.mxu0 %v523
    %551 = vmatpush.bf16.msra.mxu0 %v521
    %552 = vmatpush.bf16.msra.mxu0 %v519
    %553 = vmatpush.bf16.msra.mxu0 %v517
    %554 = vmatpush.bf16.msra.mxu0 %v515
    %555 = vmatmul.bf16.gmra.mxu0 %v451
    %v556 = vpop.f32.mrf.mxu0
    %v557 = vadd.f32 0.0, %v556
    %v558 = vpop.f32.mrf.mxu0
    %v559 = vadd.f32 0.0, %v558
    %560 = vmatmul.bf16.gmra.mxu0 %v452
    %v561 = vpop.f32.mrf.mxu0
    %v562 = vadd.f32 0.0, %v561
    %v563 = vpop.f32.mrf.mxu0
    %v564 = vadd.f32 0.0, %v563
    %565 = vmatmul.bf16.gmra.mxu0 %v453
    %v566 = vpop.f32.mrf.mxu0
    %v567 = vadd.f32 0.0, %v566
    %v568 = vpop.f32.mrf.mxu0
    %v569 = vadd.f32 0.0, %v568
    %570 = vmatmul.bf16.gmra.mxu0 %v454
    %v571 = vpop.f32.mrf.mxu0
    %v572 = vadd.f32 0.0, %v571
    %v573 = vpop.f32.mrf.mxu0
    %v574 = vadd.f32 0.0, %v573
    %575 = vmatmul.bf16.gmra.mxu0 %v455
    %v576 = vpop.f32.mrf.mxu0
    %v577 = vadd.f32 0.0, %v576
    %v578 = vpop.f32.mrf.mxu0
    %v579 = vadd.f32 0.0, %v578
    %580 = vmatmul.bf16.gmra.mxu0 %v456
    %v581 = vpop.f32.mrf.mxu0
    %v582 = vadd.f32 0.0, %v581
    %v583 = vpop.f32.mrf.mxu0
    %v584 = vadd.f32 0.0, %v583
    %585 = vmatmul.bf16.gmra.mxu0 %v457
    %v586 = vpop.f32.mrf.mxu0
    %v587 = vadd.f32 0.0, %v586
    %v588 = vpop.f32.mrf.mxu0
    %v589 = vadd.f32 0.0, %v588
    %590 = vmatmul.bf16.gmra.mxu0 %v458
    %v591 = vpop.f32.mrf.mxu0
    %v592 = vadd.f32 0.0, %v591
    %v593 = vpop.f32.mrf.mxu0
    %v594 = vadd.f32 0.0, %v593
    %595 = vdwg.mxu0
    %596 = vmatpush.bf16.msra.mxu0 %v530
    %597 = vmatpush.bf16.msra.mxu0 %v528
    %598 = vmatpush.bf16.msra.mxu0 %v526
    %599 = vmatpush.bf16.msra.mxu0 %v524
    %600 = vmatpush.bf16.msra.mxu0 %v522
    %601 = vmatpush.bf16.msra.mxu0 %v520
    %602 = vmatpush.bf16.msra.mxu0 %v518
    %603 = vmatpush.bf16.msra.mxu0 %v516
    %604 = vmatmul.bf16.gmra.mxu0 %v451
    %v605 = vpop.f32.mrf.mxu0
    %v606 = vadd.f32 0.0, %v605
    %v607 = vpop.f32.mrf.mxu0
    %v608 = vadd.f32 0.0, %v607
    %609 = vmatmul.bf16.gmra.mxu0 %v452
    %v610 = vpop.f32.mrf.mxu0
    %v611 = vadd.f32 0.0, %v610
    %v612 = vpop.f32.mrf.mxu0
    %v613 = vadd.f32 0.0, %v612
    %614 = vmatmul.bf16.gmra.mxu0 %v453
    %v615 = vpop.f32.mrf.mxu0
    %v616 = vadd.f32 0.0, %v615
    %v617 = vpop.f32.mrf.mxu0
    %v618 = vadd.f32 0.0, %v617
    %619 = vmatmul.bf16.gmra.mxu0 %v454
    %v620 = vpop.f32.mrf.mxu0
    %v621 = vadd.f32 0.0, %v620
    %v622 = vpop.f32.mrf.mxu0
    %v623 = vadd.f32 0.0, %v622
    %624 = vmatmul.bf16.gmra.mxu0 %v455
    %v625 = vpop.f32.mrf.mxu0
    %v626 = vadd.f32 0.0, %v625
    %v627 = vpop.f32.mrf.mxu0
    %v628 = vadd.f32 0.0, %v627
    %629 = vmatmul.bf16.gmra.mxu0 %v456
    %v630 = vpop.f32.mrf.mxu0
    %v631 = vadd.f32 0.0, %v630
    %v632 = vpop.f32.mrf.mxu0
    %v633 = vadd.f32 0.0, %v632
    %634 = vmatmul.bf16.gmra.mxu0 %v457
    %v635 = vpop.f32.mrf.mxu0
    %v636 = vadd.f32 0.0, %v635
    %v637 = vpop.f32.mrf.mxu0
    %v638 = vadd.f32 0.0, %v637
    %639 = vmatmul.bf16.gmra.mxu0 %v458
    %v640 = vpop.f32.mrf.mxu0
    %v641 = vadd.f32 0.0, %v640
    %v642 = vpop.f32.mrf.mxu0
    %v643 = vadd.f32 0.0, %v642
    %644 = vdwg.mxu0
    %v645 = vld [vmem:[#allocation5] sm:$0xff]
    %v646 = vld [vmem:[#allocation5 + $0x8] sm:$0xff]
    %v647 = vld [vmem:[#allocation5 + $0x10] sm:$0xff]
    %v648 = vld [vmem:[#allocation5 + $0x18] sm:$0xff]
    %v649 = vld [vmem:[#allocation5 + $0x20] sm:$0xff]
    %v650 = vld [vmem:[#allocation5 + $0x28] sm:$0xff]
    %v651 = vld [vmem:[#allocation5 + $0x30] sm:$0xff]
    %v652 = vld [vmem:[#allocation5 + $0x38] sm:$0xff]
    %v653 = vld [vmem:[#allocation5 + $0x40] sm:$0xff]
    %v654 = vld [vmem:[#allocation5 + $0x48] sm:$0xff]
    %v655 = vld [vmem:[#allocation5 + $0x50] sm:$0xff]
    %v656 = vld [vmem:[#allocation5 + $0x58] sm:$0xff]
    %v657 = vld [vmem:[#allocation5 + $0x60] sm:$0xff]
    %v658 = vld [vmem:[#allocation5 + $0x68] sm:$0xff]
    %v659 = vld [vmem:[#allocation5 + $0x70] sm:$0xff]
    %v660 = vld [vmem:[#allocation5 + $0x78] sm:$0xff]
    %v661 = vld [vmem:[#allocation5 + $0x80] sm:$0xff]
    %v662 = vld [vmem:[#allocation5 + $0x88] sm:$0xff]
    %v663 = vld [vmem:[#allocation5 + $0x90] sm:$0xff]
    %v664 = vld [vmem:[#allocation5 + $0x98] sm:$0xff]
    %v665 = vld [vmem:[#allocation5 + $0xa0] sm:$0xff]
    %v666 = vld [vmem:[#allocation5 + $0xa8] sm:$0xff]
    %v667 = vld [vmem:[#allocation5 + $0xb0] sm:$0xff]
    %v668 = vld [vmem:[#allocation5 + $0xb8] sm:$0xff]
    %v669 = vld [vmem:[#allocation5 + $0xc0] sm:$0xff]
    %v670 = vld [vmem:[#allocation5 + $0xc8] sm:$0xff]
    %v671 = vld [vmem:[#allocation5 + $0xd0] sm:$0xff]
    %v672 = vld [vmem:[#allocation5 + $0xd8] sm:$0xff]
    %v673 = vld [vmem:[#allocation5 + $0xe0] sm:$0xff]
    %v674 = vld [vmem:[#allocation5 + $0xe8] sm:$0xff]
    %v675 = vld [vmem:[#allocation5 + $0xf0] sm:$0xff]
    %v676 = vld [vmem:[#allocation5 + $0xf8] sm:$0xff]
    %v677 = vadd.f32 %v645, %v557
    %v678 = vadd.f32 %v646, %v606
    %v679 = vadd.f32 %v647, %v559
    %v680 = vadd.f32 %v648, %v608
    %v681 = vadd.f32 %v649, %v562
    %v682 = vadd.f32 %v650, %v611
    %v683 = vadd.f32 %v651, %v564
    %v684 = vadd.f32 %v652, %v613
    %v685 = vadd.f32 %v653, %v567
    %v686 = vadd.f32 %v654, %v616
    %v687 = vadd.f32 %v655, %v569
    %v688 = vadd.f32 %v656, %v618
    %v689 = vadd.f32 %v657, %v572
    %v690 = vadd.f32 %v658, %v621
    %v691 = vadd.f32 %v659, %v574
    %v692 = vadd.f32 %v660, %v623
    %v693 = vadd.f32 %v661, %v577
    %v694 = vadd.f32 %v662, %v626
    %v695 = vadd.f32 %v663, %v579
    %v696 = vadd.f32 %v664, %v628
    %v697 = vadd.f32 %v665, %v582
    %v698 = vadd.f32 %v666, %v631
    %v699 = vadd.f32 %v667, %v584
    %v700 = vadd.f32 %v668, %v633
    %v701 = vadd.f32 %v669, %v587
    %v702 = vadd.f32 %v670, %v636
    %v703 = vadd.f32 %v671, %v589
    %v704 = vadd.f32 %v672, %v638
    %v705 = vadd.f32 %v673, %v592
    %v706 = vadd.f32 %v674, %v641
    %v707 = vadd.f32 %v675, %v594
    %v708 = vadd.f32 %v676, %v643
    %709 = vst [vmem:[#allocation5] sm:$0xff] %v677
    %710 = vst [vmem:[#allocation5 + $0x8] sm:$0xff] %v678
    %711 = vst [vmem:[#allocation5 + $0x10] sm:$0xff] %v679
    %712 = vst [vmem:[#allocation5 + $0x18] sm:$0xff] %v680
    %713 = vst [vmem:[#allocation5 + $0x20] sm:$0xff] %v681
    %714 = vst [vmem:[#allocation5 + $0x28] sm:$0xff] %v682
    %715 = vst [vmem:[#allocation5 + $0x30] sm:$0xff] %v683
    %716 = vst [vmem:[#allocation5 + $0x38] sm:$0xff] %v684
    %717 = vst [vmem:[#allocation5 + $0x40] sm:$0xff] %v685
    %718 = vst [vmem:[#allocation5 + $0x48] sm:$0xff] %v686
    %719 = vst [vmem:[#allocation5 + $0x50] sm:$0xff] %v687
    %720 = vst [vmem:[#allocation5 + $0x58] sm:$0xff] %v688
    %721 = vst [vmem:[#allocation5 + $0x60] sm:$0xff] %v689
    %722 = vst [vmem:[#allocation5 + $0x68] sm:$0xff] %v690
    %723 = vst [vmem:[#allocation5 + $0x70] sm:$0xff] %v691
    %724 = vst [vmem:[#allocation5 + $0x78] sm:$0xff] %v692
    %725 = vst [vmem:[#allocation5 + $0x80] sm:$0xff] %v693
    %726 = vst [vmem:[#allocation5 + $0x88] sm:$0xff] %v694
    %727 = vst [vmem:[#allocation5 + $0x90] sm:$0xff] %v695
    %728 = vst [vmem:[#allocation5 + $0x98] sm:$0xff] %v696
    %729 = vst [vmem:[#allocation5 + $0xa0] sm:$0xff] %v697
    %730 = vst [vmem:[#allocation5 + $0xa8] sm:$0xff] %v698
    %731 = vst [vmem:[#allocation5 + $0xb0] sm:$0xff] %v699
    %732 = vst [vmem:[#allocation5 + $0xb8] sm:$0xff] %v700
    %733 = vst [vmem:[#allocation5 + $0xc0] sm:$0xff] %v701
    %734 = vst [vmem:[#allocation5 + $0xc8] sm:$0xff] %v702
    %735 = vst [vmem:[#allocation5 + $0xd0] sm:$0xff] %v703
    %736 = vst [vmem:[#allocation5 + $0xd8] sm:$0xff] %v704
    %737 = vst [vmem:[#allocation5 + $0xe0] sm:$0xff] %v705
    %738 = vst [vmem:[#allocation5 + $0xe8] sm:$0xff] %v706
    %739 = vst [vmem:[#allocation5 + $0xf0] sm:$0xff] %v707
    %740 = vst [vmem:[#allocation5 + $0xf8] sm:$0xff] %v708
    %v741 = vld [vmem:[%s0 + $0x8] sm:$0xf]
    %v742 = vld [vmem:[%s0 + $0xc] sm:$0xf]
    %v743 = vld [vmem:[%s0 + $0x10] sm:$0xf]
    %v744 = vld [vmem:[%s0 + $0x14] sm:$0xf]
    %v745 = vld [vmem:[%s0 + $0x18] sm:$0xf]
    %v746 = vld [vmem:[%s0 + $0x1c] sm:$0xf]
    %v747 = vld [vmem:[%s0 + $0x20] sm:$0xf]
    %v748 = vld [vmem:[%s0 + $0x24] sm:$0xf]
    %v749 = vld [vmem:[%s0 + $0x28] sm:$0xf]
    %v750 = vld [vmem:[%s0 + $0x2c] sm:$0xf]
    %v751 = vld [vmem:[%s0 + $0x30] sm:$0xf]
    %v752 = vld [vmem:[%s0 + $0x34] sm:$0xf]
    %v753 = vld [vmem:[%s0 + $0x38] sm:$0xf]
    %v754 = vld [vmem:[%s0 + $0x3c] sm:$0xf]
    %v755 = vld [vmem:[%s0 + $0x40] sm:$0xf]
    %v756 = vld [vmem:[%s0 + $0x44] sm:$0xf]
    %s757 = scalar_lea.vmem [#allocation8], 256
    %v758 = vld [vmem:[%s757] sm:$0xff]
    %v759 = vld [vmem:[%s757 + $0x8] sm:$0xff]
    %v760 = vld [vmem:[%s757 + $0x10] sm:$0xff]
    %v761 = vld [vmem:[%s757 + $0x18] sm:$0xff]
    %v762 = vld [vmem:[%s757 + $0x20] sm:$0xff]
    %v763 = vld [vmem:[%s757 + $0x28] sm:$0xff]
    %v764 = vld [vmem:[%s757 + $0x30] sm:$0xff]
    %v765 = vld [vmem:[%s757 + $0x38] sm:$0xff]
    %v766 = vld [vmem:[%s757 + $0x40] sm:$0xff]
    %v767 = vld [vmem:[%s757 + $0x48] sm:$0xff]
    %v768 = vld [vmem:[%s757 + $0x50] sm:$0xff]
    %v769 = vld [vmem:[%s757 + $0x58] sm:$0xff]
    %v770 = vld [vmem:[%s757 + $0x60] sm:$0xff]
    %v771 = vld [vmem:[%s757 + $0x68] sm:$0xff]
    %v772 = vld [vmem:[%s757 + $0x70] sm:$0xff]
    %v773 = vld [vmem:[%s757 + $0x78] sm:$0xff]
    %v790 = vunpack.c.l.b16 %v741
    %v791 = vunpack.c.l.b16 %v742
    %v792 = vunpack.c.l.b16 %v743
    %v793 = vunpack.c.l.b16 %v744
    %v794 = vunpack.c.l.b16 %v745
    %v795 = vunpack.c.l.b16 %v746
    %v796 = vunpack.c.l.b16 %v747
    %v797 = vunpack.c.l.b16 %v748
    %v798 = vunpack.c.l.b16 %v749
    %v799 = vunpack.c.l.b16 %v750
    %v800 = vunpack.c.l.b16 %v751
    %v801 = vunpack.c.l.b16 %v752
    %v802 = vunpack.c.l.b16 %v753
    %v803 = vunpack.c.l.b16 %v754
    %v804 = vunpack.c.l.b16 %v755
    %v805 = vunpack.c.l.b16 %v756
    %v806 = vpack.c.b16 %v791, %v790
    %v807 = vpack.c.b16 %v793, %v792
    %v808 = vpack.c.b16 %v795, %v794
    %v809 = vpack.c.b16 %v797, %v796
    %v810 = vpack.c.b16 %v799, %v798
    %v811 = vpack.c.b16 %v801, %v800
    %v812 = vpack.c.b16 %v803, %v802
    %v813 = vpack.c.b16 %v805, %v804
    %v838 = vunpack.c.l.b16 %v758
    %v839 = vunpack.c.h.b16 %v758
    %v840 = vunpack.c.l.b16 %v759
    %v841 = vunpack.c.h.b16 %v759
    %v842 = vunpack.c.l.b16 %v760
    %v843 = vunpack.c.h.b16 %v760
    %v844 = vunpack.c.l.b16 %v761
    %v845 = vunpack.c.h.b16 %v761
    %v846 = vunpack.c.l.b16 %v762
    %v847 = vunpack.c.h.b16 %v762
    %v848 = vunpack.c.l.b16 %v763
    %v849 = vunpack.c.h.b16 %v763
    %v850 = vunpack.c.l.b16 %v764
    %v851 = vunpack.c.h.b16 %v764
    %v852 = vunpack.c.l.b16 %v765
    %v853 = vunpack.c.h.b16 %v765
    %v854 = vunpack.c.l.b16 %v766
    %v855 = vunpack.c.h.b16 %v766
    %v856 = vunpack.c.l.b16 %v767
    %v857 = vunpack.c.h.b16 %v767
    %v858 = vunpack.c.l.b16 %v768
    %v859 = vunpack.c.h.b16 %v768
    %v860 = vunpack.c.l.b16 %v769
    %v861 = vunpack.c.h.b16 %v769
    %v862 = vunpack.c.l.b16 %v770
    %v863 = vunpack.c.h.b16 %v770
    %v864 = vunpack.c.l.b16 %v771
    %v865 = vunpack.c.h.b16 %v771
    %v866 = vunpack.c.l.b16 %v772
    %v867 = vunpack.c.h.b16 %v772
    %v868 = vunpack.c.l.b16 %v773
    %v869 = vunpack.c.h.b16 %v773
    %v870 = vpack.c.b16 %v840, %v838
    %v871 = vpack.c.b16 %v841, %v839
    %v872 = vpack.c.b16 %v844, %v842
    %v873 = vpack.c.b16 %v845, %v843
    %v874 = vpack.c.b16 %v848, %v846
    %v875 = vpack.c.b16 %v849, %v847
    %v876 = vpack.c.b16 %v852, %v850
    %v877 = vpack.c.b16 %v853, %v851
    %v878 = vpack.c.b16 %v856, %v854
    %v879 = vpack.c.b16 %v857, %v855
    %v880 = vpack.c.b16 %v860, %v858
    %v881 = vpack.c.b16 %v861, %v859
    %v882 = vpack.c.b16 %v864, %v862
    %v883 = vpack.c.b16 %v865, %v863
    %v884 = vpack.c.b16 %v868, %v866
    %v885 = vpack.c.b16 %v869, %v867
    %902 = vmatpush.bf16.msra.mxu0 %v884
    %903 = vmatpush.bf16.msra.mxu0 %v882
    %904 = vmatpush.bf16.msra.mxu0 %v880
    %905 = vmatpush.bf16.msra.mxu0 %v878
    %906 = vmatpush.bf16.msra.mxu0 %v876
    %907 = vmatpush.bf16.msra.mxu0 %v874
    %908 = vmatpush.bf16.msra.mxu0 %v872
    %909 = vmatpush.bf16.msra.mxu0 %v870
    %910 = vmatmul.bf16.gmra.mxu0 %v806
    %v911 = vpop.f32.mrf.mxu0
    %v912 = vadd.f32 0.0, %v911
    %v913 = vpop.f32.mrf.mxu0
    %v914 = vadd.f32 0.0, %v913
    %915 = vmatmul.bf16.gmra.mxu0 %v807
    %v916 = vpop.f32.mrf.mxu0
    %v917 = vadd.f32 0.0, %v916
    %v918 = vpop.f32.mrf.mxu0
    %v919 = vadd.f32 0.0, %v918
    %920 = vmatmul.bf16.gmra.mxu0 %v808
    %v921 = vpop.f32.mrf.mxu0
    %v922 = vadd.f32 0.0, %v921
    %v923 = vpop.f32.mrf.mxu0
    %v924 = vadd.f32 0.0, %v923
    %925 = vmatmul.bf16.gmra.mxu0 %v809
    %v926 = vpop.f32.mrf.mxu0
    %v927 = vadd.f32 0.0, %v926
    %v928 = vpop.f32.mrf.mxu0
    %v929 = vadd.f32 0.0, %v928
    %930 = vmatmul.bf16.gmra.mxu0 %v810
    %v931 = vpop.f32.mrf.mxu0
    %v932 = vadd.f32 0.0, %v931
    %v933 = vpop.f32.mrf.mxu0
    %v934 = vadd.f32 0.0, %v933
    %935 = vmatmul.bf16.gmra.mxu0 %v811
    %v936 = vpop.f32.mrf.mxu0
    %v937 = vadd.f32 0.0, %v936
    %v938 = vpop.f32.mrf.mxu0
    %v939 = vadd.f32 0.0, %v938
    %940 = vmatmul.bf16.gmra.mxu0 %v812
    %v941 = vpop.f32.mrf.mxu0
    %v942 = vadd.f32 0.0, %v941
    %v943 = vpop.f32.mrf.mxu0
    %v944 = vadd.f32 0.0, %v943
    %945 = vmatmul.bf16.gmra.mxu0 %v813
    %v946 = vpop.f32.mrf.mxu0
    %v947 = vadd.f32 0.0, %v946
    %v948 = vpop.f32.mrf.mxu0
    %v949 = vadd.f32 0.0, %v948
    %950 = vdwg.mxu0
    %951 = vmatpush.bf16.msra.mxu0 %v885
    %952 = vmatpush.bf16.msra.mxu0 %v883
    %953 = vmatpush.bf16.msra.mxu0 %v881
    %954 = vmatpush.bf16.msra.mxu0 %v879
    %955 = vmatpush.bf16.msra.mxu0 %v877
    %956 = vmatpush.bf16.msra.mxu0 %v875
    %957 = vmatpush.bf16.msra.mxu0 %v873
    %958 = vmatpush.bf16.msra.mxu0 %v871
    %959 = vmatmul.bf16.gmra.mxu0 %v806
    %v960 = vpop.f32.mrf.mxu0
    %v961 = vadd.f32 0.0, %v960
    %v962 = vpop.f32.mrf.mxu0
    %v963 = vadd.f32 0.0, %v962
    %964 = vmatmul.bf16.gmra.mxu0 %v807
    %v965 = vpop.f32.mrf.mxu0
    %v966 = vadd.f32 0.0, %v965
    %v967 = vpop.f32.mrf.mxu0
    %v968 = vadd.f32 0.0, %v967
    %969 = vmatmul.bf16.gmra.mxu0 %v808
    %v970 = vpop.f32.mrf.mxu0
    %v971 = vadd.f32 0.0, %v970
    %v972 = vpop.f32.mrf.mxu0
    %v973 = vadd.f32 0.0, %v972
    %974 = vmatmul.bf16.gmra.mxu0 %v809
    %v975 = vpop.f32.mrf.mxu0
    %v976 = vadd.f32 0.0, %v975
    %v977 = vpop.f32.mrf.mxu0
    %v978 = vadd.f32 0.0, %v977
    %979 = vmatmul.bf16.gmra.mxu0 %v810
    %v980 = vpop.f32.mrf.mxu0
    %v981 = vadd.f32 0.0, %v980
    %v982 = vpop.f32.mrf.mxu0
    %v983 = vadd.f32 0.0, %v982
    %984 = vmatmul.bf16.gmra.mxu0 %v811
    %v985 = vpop.f32.mrf.mxu0
    %v986 = vadd.f32 0.0, %v985
    %v987 = vpop.f32.mrf.mxu0
    %v988 = vadd.f32 0.0, %v987
    %989 = vmatmul.bf16.gmra.mxu0 %v812
    %v990 = vpop.f32.mrf.mxu0
    %v991 = vadd.f32 0.0, %v990
    %v992 = vpop.f32.mrf.mxu0
    %v993 = vadd.f32 0.0, %v992
    %994 = vmatmul.bf16.gmra.mxu0 %v813
    %v995 = vpop.f32.mrf.mxu0
    %v996 = vadd.f32 0.0, %v995
    %v997 = vpop.f32.mrf.mxu0
    %v998 = vadd.f32 0.0, %v997
    %999 = vdwg.mxu0
    %v1000 = vld [vmem:[#allocation5] sm:$0xff]
    %v1001 = vld [vmem:[#allocation5 + $0x8] sm:$0xff]
    %v1002 = vld [vmem:[#allocation5 + $0x10] sm:$0xff]
    %v1003 = vld [vmem:[#allocation5 + $0x18] sm:$0xff]
    %v1004 = vld [vmem:[#allocation5 + $0x20] sm:$0xff]
    %v1005 = vld [vmem:[#allocation5 + $0x28] sm:$0xff]
    %v1006 = vld [vmem:[#allocation5 + $0x30] sm:$0xff]
    %v1007 = vld [vmem:[#allocation5 + $0x38] sm:$0xff]
    %v1008 = vld [vmem:[#allocation5 + $0x40] sm:$0xff]
    %v1009 = vld [vmem:[#allocation5 + $0x48] sm:$0xff]
    %v1010 = vld [vmem:[#allocation5 + $0x50] sm:$0xff]
    %v1011 = vld [vmem:[#allocation5 + $0x58] sm:$0xff]
    %v1012 = vld [vmem:[#allocation5 + $0x60] sm:$0xff]
    %v1013 = vld [vmem:[#allocation5 + $0x68] sm:$0xff]
    %v1014 = vld [vmem:[#allocation5 + $0x70] sm:$0xff]
    %v1015 = vld [vmem:[#allocation5 + $0x78] sm:$0xff]
    %v1016 = vld [vmem:[#allocation5 + $0x80] sm:$0xff]
    %v1017 = vld [vmem:[#allocation5 + $0x88] sm:$0xff]
    %v1018 = vld [vmem:[#allocation5 + $0x90] sm:$0xff]
    %v1019 = vld [vmem:[#allocation5 + $0x98] sm:$0xff]
    %v1020 = vld [vmem:[#allocation5 + $0xa0] sm:$0xff]
    %v1021 = vld [vmem:[#allocation5 + $0xa8] sm:$0xff]
    %v1022 = vld [vmem:[#allocation5 + $0xb0] sm:$0xff]
    %v1023 = vld [vmem:[#allocation5 + $0xb8] sm:$0xff]
    %v1024 = vld [vmem:[#allocation5 + $0xc0] sm:$0xff]
    %v1025 = vld [vmem:[#allocation5 + $0xc8] sm:$0xff]
    %v1026 = vld [vmem:[#allocation5 + $0xd0] sm:$0xff]
    %v1027 = vld [vmem:[#allocation5 + $0xd8] sm:$0xff]
    %v1028 = vld [vmem:[#allocation5 + $0xe0] sm:$0xff]
    %v1029 = vld [vmem:[#allocation5 + $0xe8] sm:$0xff]
    %v1030 = vld [vmem:[#allocation5 + $0xf0] sm:$0xff]
    %v1031 = vld [vmem:[#allocation5 + $0xf8] sm:$0xff]
    %v1032 = vadd.f32 %v1000, %v912
    %v1033 = vadd.f32 %v1001, %v961
    %v1034 = vadd.f32 %v1002, %v914
    %v1035 = vadd.f32 %v1003, %v963
    %v1036 = vadd.f32 %v1004, %v917
    %v1037 = vadd.f32 %v1005, %v966
    %v1038 = vadd.f32 %v1006, %v919
    %v1039 = vadd.f32 %v1007, %v968
    %v1040 = vadd.f32 %v1008, %v922
    %v1041 = vadd.f32 %v1009, %v971
    %v1042 = vadd.f32 %v1010, %v924
    %v1043 = vadd.f32 %v1011, %v973
    %v1044 = vadd.f32 %v1012, %v927
    %v1045 = vadd.f32 %v1013, %v976
    %v1046 = vadd.f32 %v1014, %v929
    %v1047 = vadd.f32 %v1015, %v978
    %v1048 = vadd.f32 %v1016, %v932
    %v1049 = vadd.f32 %v1017, %v981
    %v1050 = vadd.f32 %v1018, %v934
    %v1051 = vadd.f32 %v1019, %v983
    %v1052 = vadd.f32 %v1020, %v937
    %v1053 = vadd.f32 %v1021, %v986
    %v1054 = vadd.f32 %v1022, %v939
    %v1055 = vadd.f32 %v1023, %v988
    %v1056 = vadd.f32 %v1024, %v942
    %v1057 = vadd.f32 %v1025, %v991
    %v1058 = vadd.f32 %v1026, %v944
    %v1059 = vadd.f32 %v1027, %v993
    %v1060 = vadd.f32 %v1028, %v947
    %v1061 = vadd.f32 %v1029, %v996
    %v1062 = vadd.f32 %v1030, %v949
    %v1063 = vadd.f32 %v1031, %v998
    %1064 = vst [vmem:[#allocation5] sm:$0xff] %v1032
    %1065 = vst [vmem:[#allocation5 + $0x8] sm:$0xff] %v1033
    %1066 = vst [vmem:[#allocation5 + $0x10] sm:$0xff] %v1034
    %1067 = vst [vmem:[#allocation5 + $0x18] sm:$0xff] %v1035
    %1068 = vst [vmem:[#allocation5 + $0x20] sm:$0xff] %v1036
    %1069 = vst [vmem:[#allocation5 + $0x28] sm:$0xff] %v1037
    %1070 = vst [vmem:[#allocation5 + $0x30] sm:$0xff] %v1038
    %1071 = vst [vmem:[#allocation5 + $0x38] sm:$0xff] %v1039
    %1072 = vst [vmem:[#allocation5 + $0x40] sm:$0xff] %v1040
    %1073 = vst [vmem:[#allocation5 + $0x48] sm:$0xff] %v1041
    %1074 = vst [vmem:[#allocation5 + $0x50] sm:$0xff] %v1042
    %1075 = vst [vmem:[#allocation5 + $0x58] sm:$0xff] %v1043
    %1076 = vst [vmem:[#allocation5 + $0x60] sm:$0xff] %v1044
    %1077 = vst [vmem:[#allocation5 + $0x68] sm:$0xff] %v1045
    %1078 = vst [vmem:[#allocation5 + $0x70] sm:$0xff] %v1046
    %1079 = vst [vmem:[#allocation5 + $0x78] sm:$0xff] %v1047
    %1080 = vst [vmem:[#allocation5 + $0x80] sm:$0xff] %v1048
    %1081 = vst [vmem:[#allocation5 + $0x88] sm:$0xff] %v1049
    %1082 = vst [vmem:[#allocation5 + $0x90] sm:$0xff] %v1050
    %1083 = vst [vmem:[#allocation5 + $0x98] sm:$0xff] %v1051
    %1084 = vst [vmem:[#allocation5 + $0xa0] sm:$0xff] %v1052
    %1085 = vst [vmem:[#allocation5 + $0xa8] sm:$0xff] %v1053
    %1086 = vst [vmem:[#allocation5 + $0xb0] sm:$0xff] %v1054
    %1087 = vst [vmem:[#allocation5 + $0xb8] sm:$0xff] %v1055
    %1088 = vst [vmem:[#allocation5 + $0xc0] sm:$0xff] %v1056
    %1089 = vst [vmem:[#allocation5 + $0xc8] sm:$0xff] %v1057
    %1090 = vst [vmem:[#allocation5 + $0xd0] sm:$0xff] %v1058
    %1091 = vst [vmem:[#allocation5 + $0xd8] sm:$0xff] %v1059
    %1092 = vst [vmem:[#allocation5 + $0xe0] sm:$0xff] %v1060
    %1093 = vst [vmem:[#allocation5 + $0xe8] sm:$0xff] %v1061
    %1094 = vst [vmem:[#allocation5 + $0xf0] sm:$0xff] %v1062
    %1095 = vst [vmem:[#allocation5 + $0xf8] sm:$0xff] %v1063
    %v1096 = vld [vmem:[%s2] sm:$0x1]
    %v1097 = vld [vmem:[#allocation5] sm:$0xff]
    %v1098 = vld [vmem:[#allocation5 + $0x8] sm:$0xff]
    %v1099 = vld [vmem:[#allocation5 + $0x10] sm:$0xff]
    %v1100 = vld [vmem:[#allocation5 + $0x18] sm:$0xff]
    %v1101 = vmax.f32 %v1097, %v1099
    %v1102 = vmax.f32 %v1098, %v1100
    %v1103 = vmax.f32 %v1101, %v1102
    %v1105 = vperm.slane %v1096, 0
    %v1107 = vadd.f32 %v1103, %v1105
    %v1108 = vmax.f32 %v1107, 0.0
    %v1109 = vpack.c.bf16 %v1108, %v1108
    %1110 = vst [vmem:[#allocation2 + $0x4] sm:$0xf] %v1109
    %v1111 = vld [vmem:[#allocation5 + $0x20] sm:$0xff]
    %v1112 = vld [vmem:[#allocation5 + $0x28] sm:$0xff]
    %v1113 = vld [vmem:[#allocation5 + $0x30] sm:$0xff]
    %v1114 = vld [vmem:[#allocation5 + $0x38] sm:$0xff]
    %v1115 = vmax.f32 %v1111, %v1113
    %v1116 = vmax.f32 %v1112, %v1114
    %v1117 = vmax.f32 %v1115, %v1116
    %v1118 = vadd.f32 %v1117, %v1105
    %v1119 = vmax.f32 %v1118, 0.0
    %v1120 = vpack.c.bf16 %v1119, %v1119
    %1121 = vst [vmem:[#allocation2 + $0x8] sm:$0xf] %v1120
    %v1122 = vld [vmem:[#allocation5 + $0x40] sm:$0xff]
    %v1123 = vld [vmem:[#allocation5 + $0x48] sm:$0xff]
    %v1124 = vld [vmem:[#allocation5 + $0x50] sm:$0xff]
    %v1125 = vld [vmem:[#allocation5 + $0x58] sm:$0xff]
    %v1126 = vmax.f32 %v1122, %v1124
    %v1127 = vmax.f32 %v1123, %v1125
    %v1128 = vmax.f32 %v1126, %v1127
    %v1129 = vadd.f32 %v1128, %v1105
    %v1130 = vmax.f32 %v1129, 0.0
    %v1131 = vpack.c.bf16 %v1130, %v1130
    %1132 = vst [vmem:[#allocation2 + $0xc] sm:$0xf] %v1131
    %v1133 = vld [vmem:[#allocation5 + $0x60] sm:$0xff]
    %v1134 = vld [vmem:[#allocation5 + $0x68] sm:$0xff]
    %v1135 = vld [vmem:[#allocation5 + $0x70] sm:$0xff]
    %v1136 = vld [vmem:[#allocation5 + $0x78] sm:$0xff]
    %v1137 = vmax.f32 %v1133, %v1135
    %v1138 = vmax.f32 %v1134, %v1136
    %v1139 = vmax.f32 %v1137, %v1138
    %v1140 = vadd.f32 %v1139, %v1105
    %v1141 = vmax.f32 %v1140, 0.0
    %v1142 = vpack.c.bf16 %v1141, %v1141
    %1143 = vst [vmem:[#allocation2 + $0x10] sm:$0xf] %v1142
    %v1144 = vld [vmem:[#allocation5 + $0x80] sm:$0xff]
    %v1145 = vld [vmem:[#allocation5 + $0x88] sm:$0xff]
    %v1146 = vld [vmem:[#allocation5 + $0x90] sm:$0xff]
    %v1147 = vld [vmem:[#allocation5 + $0x98] sm:$0xff]
    %v1148 = vmax.f32 %v1144, %v1146
    %v1149 = vmax.f32 %v1145, %v1147
    %v1150 = vmax.f32 %v1148, %v1149
    %v1151 = vadd.f32 %v1150, %v1105
    %v1152 = vmax.f32 %v1151, 0.0
    %v1153 = vpack.c.bf16 %v1152, %v1152
    %1154 = vst [vmem:[#allocation2 + $0x14] sm:$0xf] %v1153
    %v1155 = vld [vmem:[#allocation5 + $0xa0] sm:$0xff]
    %v1156 = vld [vmem:[#allocation5 + $0xa8] sm:$0xff]
    %v1157 = vld [vmem:[#allocation5 + $0xb0] sm:$0xff]
    %v1158 = vld [vmem:[#allocation5 + $0xb8] sm:$0xff]
    %v1159 = vmax.f32 %v1155, %v1157
    %v1160 = vmax.f32 %v1156, %v1158
    %v1161 = vmax.f32 %v1159, %v1160
    %v1162 = vadd.f32 %v1161, %v1105
    %v1163 = vmax.f32 %v1162, 0.0
    %v1164 = vpack.c.bf16 %v1163, %v1163
    %1165 = vst [vmem:[#allocation2 + $0x18] sm:$0xf] %v1164
    %v1166 = vld [vmem:[#allocation5 + $0xc0] sm:$0xff]
    %v1167 = vld [vmem:[#allocation5 + $0xc8] sm:$0xff]
    %v1168 = vld [vmem:[#allocation5 + $0xd0] sm:$0xff]
    %v1169 = vld [vmem:[#allocation5 + $0xd8] sm:$0xff]
    %v1170 = vmax.f32 %v1166, %v1168
    %v1171 = vmax.f32 %v1167, %v1169
    %v1172 = vmax.f32 %v1170, %v1171
    %v1173 = vadd.f32 %v1172, %v1105
    %v1174 = vmax.f32 %v1173, 0.0
    %v1175 = vpack.c.bf16 %v1174, %v1174
    %1176 = vst [vmem:[#allocation2 + $0x1c] sm:$0xf] %v1175
    %v1177 = vld [vmem:[#allocation5 + $0xe0] sm:$0xff]
    %v1178 = vld [vmem:[#allocation5 + $0xe8] sm:$0xff]
    %v1179 = vld [vmem:[#allocation5 + $0xf0] sm:$0xff]
    %v1180 = vld [vmem:[#allocation5 + $0xf8] sm:$0xff]
    %v1181 = vmax.f32 %v1177, %v1179
    %v1182 = vmax.f32 %v1178, %v1180
    %v1183 = vmax.f32 %v1181, %v1182
    %v1184 = vadd.f32 %v1183, %v1105
    %v1185 = vmax.f32 %v1184, 0.0
    %v1186 = vpack.c.bf16 %v1185, %v1185
    %1187 = vst [vmem:[#allocation2 + $0x20] sm:$0xf] %v1186
    %v1188 = vld [vmem:[#allocation2] sm:$0xf]
    %v1189 = vld [vmem:[#allocation2 + $0x4] sm:$0xf]
    %v1190 = vld [vmem:[#allocation2 + $0x8] sm:$0xf]
    %v1191 = vld [vmem:[#allocation2 + $0xc] sm:$0xf]
    %v1192 = vld [vmem:[#allocation2 + $0x10] sm:$0xf]
    %v1193 = vld [vmem:[#allocation2 + $0x14] sm:$0xf]
    %v1194 = vld [vmem:[#allocation2 + $0x18] sm:$0xf]
    %v1195 = vld [vmem:[#allocation2 + $0x1c] sm:$0xf]
    %v1196 = vld [vmem:[%s3] sm:$0xff]
    %v1197 = vld [vmem:[%s3 + $0x8] sm:$0xff]
    %v1198 = vld [vmem:[%s3 + $0x10] sm:$0xff]
    %v1199 = vld [vmem:[%s3 + $0x18] sm:$0xff]
    %v1200 = vld [vmem:[%s3 + $0x20] sm:$0xff]
    %v1201 = vld [vmem:[%s3 + $0x28] sm:$0xff]
    %v1202 = vld [vmem:[%s3 + $0x30] sm:$0xff]
    %v1203 = vld [vmem:[%s3 + $0x38] sm:$0xff]
    %v1204 = vld [vmem:[%s3 + $0x40] sm:$0xff]
    %v1205 = vld [vmem:[%s3 + $0x48] sm:$0xff]
    %v1206 = vld [vmem:[%s3 + $0x50] sm:$0xff]
    %v1207 = vld [vmem:[%s3 + $0x58] sm:$0xff]
    %v1208 = vld [vmem:[%s3 + $0x60] sm:$0xff]
    %v1209 = vld [vmem:[%s3 + $0x68] sm:$0xff]
    %v1210 = vld [vmem:[%s3 + $0x70] sm:$0xff]
    %v1211 = vld [vmem:[%s3 + $0x78] sm:$0xff]
    %v1212 = vld [vmem:[%s3 + $0x80] sm:$0xff]
    %v1213 = vld [vmem:[%s3 + $0x88] sm:$0xff]
    %v1214 = vld [vmem:[%s3 + $0x90] sm:$0xff]
    %v1215 = vld [vmem:[%s3 + $0x98] sm:$0xff]
    %v1216 = vld [vmem:[%s3 + $0xa0] sm:$0xff]
    %v1217 = vld [vmem:[%s3 + $0xa8] sm:$0xff]
    %v1218 = vld [vmem:[%s3 + $0xb0] sm:$0xff]
    %v1219 = vld [vmem:[%s3 + $0xb8] sm:$0xff]
    %v1220 = vld [vmem:[%s3 + $0xc0] sm:$0xff]
    %v1221 = vld [vmem:[%s3 + $0xc8] sm:$0xff]
    %v1222 = vld [vmem:[%s3 + $0xd0] sm:$0xff]
    %v1223 = vld [vmem:[%s3 + $0xd8] sm:$0xff]
    %v1224 = vld [vmem:[%s3 + $0xe0] sm:$0xff]
    %v1225 = vld [vmem:[%s3 + $0xe8] sm:$0xff]
    %v1226 = vld [vmem:[%s3 + $0xf0] sm:$0xff]
    %v1227 = vld [vmem:[%s3 + $0xf8] sm:$0xff]
    %v1236 = vunpack.c.l.b16 %v1188
    %v1237 = vunpack.c.l.b16 %v1189
    %v1238 = vunpack.c.l.b16 %v1190
    %v1239 = vunpack.c.l.b16 %v1191
    %v1240 = vunpack.c.l.b16 %v1192
    %v1241 = vunpack.c.l.b16 %v1193
    %v1242 = vunpack.c.l.b16 %v1194
    %v1243 = vunpack.c.l.b16 %v1195
    %v1244 = vpack.c.b16 %v1237, %v1236
    %v1245 = vpack.c.b16 %v1239, %v1238
    %v1246 = vpack.c.b16 %v1241, %v1240
    %v1247 = vpack.c.b16 %v1243, %v1242
    %v1284 = vunpack.c.l.b16 %v1196
    %v1285 = vunpack.c.h.b16 %v1196
    %v1286 = vunpack.c.l.b16 %v1197
    %v1287 = vunpack.c.h.b16 %v1197
    %v1288 = vunpack.c.l.b16 %v1198
    %v1289 = vunpack.c.h.b16 %v1198
    %v1290 = vunpack.c.l.b16 %v1199
    %v1291 = vunpack.c.h.b16 %v1199
    %v1292 = vunpack.c.l.b16 %v1200
    %v1293 = vunpack.c.h.b16 %v1200
    %v1294 = vunpack.c.l.b16 %v1201
    %v1295 = vunpack.c.h.b16 %v1201
    %v1296 = vunpack.c.l.b16 %v1202
    %v1297 = vunpack.c.h.b16 %v1202
    %v1298 = vunpack.c.l.b16 %v1203
    %v1299 = vunpack.c.h.b16 %v1203
    %v1300 = vunpack.c.l.b16 %v1204
    %v1301 = vunpack.c.h.b16 %v1204
    %v1302 = vunpack.c.l.b16 %v1205
    %v1303 = vunpack.c.h.b16 %v1205
    %v1304 = vunpack.c.l.b16 %v1206
    %v1305 = vunpack.c.h.b16 %v1206
    %v1306 = vunpack.c.l.b16 %v1207
    %v1307 = vunpack.c.h.b16 %v1207
    %v1308 = vunpack.c.l.b16 %v1208
    %v1309 = vunpack.c.h.b16 %v1208
    %v1310 = vunpack.c.l.b16 %v1209
    %v1311 = vunpack.c.h.b16 %v1209
    %v1312 = vunpack.c.l.b16 %v1210
    %v1313 = vunpack.c.h.b16 %v1210
    %v1314 = vunpack.c.l.b16 %v1211
    %v1315 = vunpack.c.h.b16 %v1211
    %v1316 = vunpack.c.l.b16 %v1212
    %v1317 = vunpack.c.h.b16 %v1212
    %v1318 = vunpack.c.l.b16 %v1213
    %v1319 = vunpack.c.h.b16 %v1213
    %v1320 = vunpack.c.l.b16 %v1214
    %v1321 = vunpack.c.h.b16 %v1214
    %v1322 = vunpack.c.l.b16 %v1215
    %v1323 = vunpack.c.h.b16 %v1215
    %v1324 = vunpack.c.l.b16 %v1216
    %v1325 = vunpack.c.h.b16 %v1216
    %v1326 = vunpack.c.l.b16 %v1217
    %v1327 = vunpack.c.h.b16 %v1217
    %v1328 = vunpack.c.l.b16 %v1218
    %v1329 = vunpack.c.h.b16 %v1218
    %v1330 = vunpack.c.l.b16 %v1219
    %v1331 = vunpack.c.h.b16 %v1219
    %v1332 = vunpack.c.l.b16 %v1220
    %v1333 = vunpack.c.h.b16 %v1220
    %v1334 = vunpack.c.l.b16 %v1221
    %v1335 = vunpack.c.h.b16 %v1221
    %v1336 = vunpack.c.l.b16 %v1222
    %v1337 = vunpack.c.h.b16 %v1222
    %v1338 = vunpack.c.l.b16 %v1223
    %v1339 = vunpack.c.h.b16 %v1223
    %v1340 = vunpack.c.l.b16 %v1224
    %v1341 = vunpack.c.h.b16 %v1224
    %v1342 = vunpack.c.l.b16 %v1225
    %v1343 = vunpack.c.h.b16 %v1225
    %v1344 = vunpack.c.l.b16 %v1226
    %v1345 = vunpack.c.h.b16 %v1226
    %v1346 = vunpack.c.l.b16 %v1227
    %v1347 = vunpack.c.h.b16 %v1227
    %v1348 = vpack.c.b16 %v1288, %v1284
    %v1349 = vpack.c.b16 %v1289, %v1285
    %v1350 = vpack.c.b16 %v1290, %v1286
    %v1351 = vpack.c.b16 %v1291, %v1287
    %v1352 = vpack.c.b16 %v1296, %v1292
    %v1353 = vpack.c.b16 %v1297, %v1293
    %v1354 = vpack.c.b16 %v1298, %v1294
    %v1355 = vpack.c.b16 %v1299, %v1295
    %v1356 = vpack.c.b16 %v1304, %v1300
    %v1357 = vpack.c.b16 %v1305, %v1301
    %v1358 = vpack.c.b16 %v1306, %v1302
    %v1359 = vpack.c.b16 %v1307, %v1303
    %v1360 = vpack.c.b16 %v1312, %v1308
    %v1361 = vpack.c.b16 %v1313, %v1309
    %v1362 = vpack.c.b16 %v1314, %v1310
    %v1363 = vpack.c.b16 %v1315, %v1311
    %v1364 = vpack.c.b16 %v1320, %v1316
    %v1365 = vpack.c.b16 %v1321, %v1317
    %v1366 = vpack.c.b16 %v1322, %v1318
    %v1367 = vpack.c.b16 %v1323, %v1319
    %v1368 = vpack.c.b16 %v1328, %v1324
    %v1369 = vpack.c.b16 %v1329, %v1325
    %v1370 = vpack.c.b16 %v1330, %v1326
    %v1371 = vpack.c.b16 %v1331, %v1327
    %v1372 = vpack.c.b16 %v1336, %v1332
    %v1373 = vpack.c.b16 %v1337, %v1333
    %v1374 = vpack.c.b16 %v1338, %v1334
    %v1375 = vpack.c.b16 %v1339, %v1335
    %v1376 = vpack.c.b16 %v1344, %v1340
    %v1377 = vpack.c.b16 %v1345, %v1341
    %v1378 = vpack.c.b16 %v1346, %v1342
    %v1379 = vpack.c.b16 %v1347, %v1343
    %1412 = vmatpush.bf16.msra.mxu0 %v1376
    %1413 = vmatpush.bf16.msra.mxu0 %v1372
    %1414 = vmatpush.bf16.msra.mxu0 %v1368
    %1415 = vmatpush.bf16.msra.mxu0 %v1364
    %1416 = vmatpush.bf16.msra.mxu0 %v1360
    %1417 = vmatpush.bf16.msra.mxu0 %v1356
    %1418 = vmatpush.bf16.msra.mxu0 %v1352
    %1419 = vmatpush.bf16.msra.mxu0 %v1348
    %1420 = vmatmul.bf16.gmra.mxu0 %v1244
    %v1421 = vpop.f32.mrf.mxu0
    %v1422 = vadd.f32 0.0, %v1421
    %v1423 = vpop.f32.mrf.mxu0
    %v1424 = vadd.f32 0.0, %v1423
    %1425 = vmatmul.bf16.gmra.mxu0 %v1245
    %v1426 = vpop.f32.mrf.mxu0
    %v1427 = vadd.f32 0.0, %v1426
    %v1428 = vpop.f32.mrf.mxu0
    %v1429 = vadd.f32 0.0, %v1428
    %1430 = vmatmul.bf16.gmra.mxu0 %v1246
    %v1431 = vpop.f32.mrf.mxu0
    %v1432 = vadd.f32 0.0, %v1431
    %v1433 = vpop.f32.mrf.mxu0
    %v1434 = vadd.f32 0.0, %v1433
    %1435 = vmatmul.bf16.gmra.mxu0 %v1247
    %v1436 = vpop.f32.mrf.mxu0
    %v1437 = vadd.f32 0.0, %v1436
    %v1438 = vpop.f32.mrf.mxu0
    %v1439 = vadd.f32 0.0, %v1438
    %1440 = vdwg.mxu0
    %1441 = vmatpush.bf16.msra.mxu0 %v1377
    %1442 = vmatpush.bf16.msra.mxu0 %v1373
    %1443 = vmatpush.bf16.msra.mxu0 %v1369
    %1444 = vmatpush.bf16.msra.mxu0 %v1365
    %1445 = vmatpush.bf16.msra.mxu0 %v1361
    %1446 = vmatpush.bf16.msra.mxu0 %v1357
    %1447 = vmatpush.bf16.msra.mxu0 %v1353
    %1448 = vmatpush.bf16.msra.mxu0 %v1349
    %1449 = vmatmul.bf16.gmra.mxu0 %v1244
    %v1450 = vpop.f32.mrf.mxu0
    %v1451 = vadd.f32 0.0, %v1450
    %v1452 = vpop.f32.mrf.mxu0
    %v1453 = vadd.f32 0.0, %v1452
    %1454 = vmatmul.bf16.gmra.mxu0 %v1245
    %v1455 = vpop.f32.mrf.mxu0
    %v1456 = vadd.f32 0.0, %v1455
    %v1457 = vpop.f32.mrf.mxu0
    %v1458 = vadd.f32 0.0, %v1457
    %1459 = vmatmul.bf16.gmra.mxu0 %v1246
    %v1460 = vpop.f32.mrf.mxu0
    %v1461 = vadd.f32 0.0, %v1460
    %v1462 = vpop.f32.mrf.mxu0
    %v1463 = vadd.f32 0.0, %v1462
    %1464 = vmatmul.bf16.gmra.mxu0 %v1247
    %v1465 = vpop.f32.mrf.mxu0
    %v1466 = vadd.f32 0.0, %v1465
    %v1467 = vpop.f32.mrf.mxu0
    %v1468 = vadd.f32 0.0, %v1467
    %1469 = vdwg.mxu0
    %1470 = vmatpush.bf16.msra.mxu0 %v1378
    %1471 = vmatpush.bf16.msra.mxu0 %v1374
    %1472 = vmatpush.bf16.msra.mxu0 %v1370
    %1473 = vmatpush.bf16.msra.mxu0 %v1366
    %1474 = vmatpush.bf16.msra.mxu0 %v1362
    %1475 = vmatpush.bf16.msra.mxu0 %v1358
    %1476 = vmatpush.bf16.msra.mxu0 %v1354
    %1477 = vmatpush.bf16.msra.mxu0 %v1350
    %1478 = vmatmul.bf16.gmra.mxu0 %v1244
    %v1479 = vpop.f32.mrf.mxu0
    %v1480 = vadd.f32 0.0, %v1479
    %v1481 = vpop.f32.mrf.mxu0
    %v1482 = vadd.f32 0.0, %v1481
    %1483 = vmatmul.bf16.gmra.mxu0 %v1245
    %v1484 = vpop.f32.mrf.mxu0
    %v1485 = vadd.f32 0.0, %v1484
    %v1486 = vpop.f32.mrf.mxu0
    %v1487 = vadd.f32 0.0, %v1486
    %1488 = vmatmul.bf16.gmra.mxu0 %v1246
    %v1489 = vpop.f32.mrf.mxu0
    %v1490 = vadd.f32 0.0, %v1489
    %v1491 = vpop.f32.mrf.mxu0
    %v1492 = vadd.f32 0.0, %v1491
    %1493 = vmatmul.bf16.gmra.mxu0 %v1247
    %v1494 = vpop.f32.mrf.mxu0
    %v1495 = vadd.f32 0.0, %v1494
    %v1496 = vpop.f32.mrf.mxu0
    %v1497 = vadd.f32 0.0, %v1496
    %1498 = vdwg.mxu0
    %1499 = vmatpush.bf16.msra.mxu0 %v1379
    %1500 = vmatpush.bf16.msra.mxu0 %v1375
    %1501 = vmatpush.bf16.msra.mxu0 %v1371
    %1502 = vmatpush.bf16.msra.mxu0 %v1367
    %1503 = vmatpush.bf16.msra.mxu0 %v1363
    %1504 = vmatpush.bf16.msra.mxu0 %v1359
    %1505 = vmatpush.bf16.msra.mxu0 %v1355
    %1506 = vmatpush.bf16.msra.mxu0 %v1351
    %1507 = vmatmul.bf16.gmra.mxu0 %v1244
    %v1508 = vpop.f32.mrf.mxu0
    %v1509 = vadd.f32 0.0, %v1508
    %v1510 = vpop.f32.mrf.mxu0
    %v1511 = vadd.f32 0.0, %v1510
    %1512 = vmatmul.bf16.gmra.mxu0 %v1245
    %v1513 = vpop.f32.mrf.mxu0
    %v1514 = vadd.f32 0.0, %v1513
    %v1515 = vpop.f32.mrf.mxu0
    %v1516 = vadd.f32 0.0, %v1515
    %1517 = vmatmul.bf16.gmra.mxu0 %v1246
    %v1518 = vpop.f32.mrf.mxu0
    %v1519 = vadd.f32 0.0, %v1518
    %v1520 = vpop.f32.mrf.mxu0
    %v1521 = vadd.f32 0.0, %v1520
    %1522 = vmatmul.bf16.gmra.mxu0 %v1247
    %v1523 = vpop.f32.mrf.mxu0
    %v1524 = vadd.f32 0.0, %v1523
    %v1525 = vpop.f32.mrf.mxu0
    %v1526 = vadd.f32 0.0, %v1525
    %1527 = vdwg.mxu0
    %1528 = vst [vmem:[#allocation6] sm:$0xff] %v1422
    %1529 = vst [vmem:[#allocation6 + $0x8] sm:$0xff] %v1451
    %1530 = vst [vmem:[#allocation6 + $0x10] sm:$0xff] %v1480
    %1531 = vst [vmem:[#allocation6 + $0x18] sm:$0xff] %v1509
    %1532 = vst [vmem:[#allocation6 + $0x20] sm:$0xff] %v1424
    %1533 = vst [vmem:[#allocation6 + $0x28] sm:$0xff] %v1453
    %1534 = vst [vmem:[#allocation6 + $0x30] sm:$0xff] %v1482
    %1535 = vst [vmem:[#allocation6 + $0x38] sm:$0xff] %v1511
    %1536 = vst [vmem:[#allocation6 + $0x40] sm:$0xff] %v1427
    %1537 = vst [vmem:[#allocation6 + $0x48] sm:$0xff] %v1456
    %1538 = vst [vmem:[#allocation6 + $0x50] sm:$0xff] %v1485
    %1539 = vst [vmem:[#allocation6 + $0x58] sm:$0xff] %v1514
    %1540 = vst [vmem:[#allocation6 + $0x60] sm:$0xff] %v1429
    %1541 = vst [vmem:[#allocation6 + $0x68] sm:$0xff] %v1458
    %1542 = vst [vmem:[#allocation6 + $0x70] sm:$0xff] %v1487
    %1543 = vst [vmem:[#allocation6 + $0x78] sm:$0xff] %v1516
    %1544 = vst [vmem:[#allocation6 + $0x80] sm:$0xff] %v1432
    %1545 = vst [vmem:[#allocation6 + $0x88] sm:$0xff] %v1461
    %1546 = vst [vmem:[#allocation6 + $0x90] sm:$0xff] %v1490
    %1547 = vst [vmem:[#allocation6 + $0x98] sm:$0xff] %v1519
    %1548 = vst [vmem:[#allocation6 + $0xa0] sm:$0xff] %v1434
    %1549 = vst [vmem:[#allocation6 + $0xa8] sm:$0xff] %v1463
    %1550 = vst [vmem:[#allocation6 + $0xb0] sm:$0xff] %v1492
    %1551 = vst [vmem:[#allocation6 + $0xb8] sm:$0xff] %v1521
    %1552 = vst [vmem:[#allocation6 + $0xc0] sm:$0xff] %v1437
    %1553 = vst [vmem:[#allocation6 + $0xc8] sm:$0xff] %v1466
    %1554 = vst [vmem:[#allocation6 + $0xd0] sm:$0xff] %v1495
    %1555 = vst [vmem:[#allocation6 + $0xd8] sm:$0xff] %v1524
    %1556 = vst [vmem:[#allocation6 + $0xe0] sm:$0xff] %v1439
    %1557 = vst [vmem:[#allocation6 + $0xe8] sm:$0xff] %v1468
    %1558 = vst [vmem:[#allocation6 + $0xf0] sm:$0xff] %v1497
    %1559 = vst [vmem:[#allocation6 + $0xf8] sm:$0xff] %v1526
    %v1560 = vld [vmem:[#allocation2 + $0x4] sm:$0xf]
    %v1561 = vld [vmem:[#allocation2 + $0x8] sm:$0xf]
    %v1562 = vld [vmem:[#allocation2 + $0xc] sm:$0xf]
    %v1563 = vld [vmem:[#allocation2 + $0x10] sm:$0xf]
    %v1564 = vld [vmem:[#allocation2 + $0x14] sm:$0xf]
    %v1565 = vld [vmem:[#allocation2 + $0x18] sm:$0xf]
    %v1566 = vld [vmem:[#allocation2 + $0x1c] sm:$0xf]
    %v1567 = vld [vmem:[#allocation2 + $0x20] sm:$0xf]
    %s1568 = scalar_lea.vmem %s3, 256
    %v1569 = vld [vmem:[%s1568] sm:$0xff]
    %v1570 = vld [vmem:[%s1568 + $0x8] sm:$0xff]
    %v1571 = vld [vmem:[%s1568 + $0x10] sm:$0xff]
    %v1572 = vld [vmem:[%s1568 + $0x18] sm:$0xff]
    %v1573 = vld [vmem:[%s1568 + $0x20] sm:$0xff]
    %v1574 = vld [vmem:[%s1568 + $0x28] sm:$0xff]
    %v1575 = vld [vmem:[%s1568 + $0x30] sm:$0xff]
    %v1576 = vld [vmem:[%s1568 + $0x38] sm:$0xff]
    %v1577 = vld [vmem:[%s1568 + $0x40] sm:$0xff]
    %v1578 = vld [vmem:[%s1568 + $0x48] sm:$0xff]
    %v1579 = vld [vmem:[%s1568 + $0x50] sm:$0xff]
    %v1580 = vld [vmem:[%s1568 + $0x58] sm:$0xff]
    %v1581 = vld [vmem:[%s1568 + $0x60] sm:$0xff]
    %v1582 = vld [vmem:[%s1568 + $0x68] sm:$0xff]
    %v1583 = vld [vmem:[%s1568 + $0x70] sm:$0xff]
    %v1584 = vld [vmem:[%s1568 + $0x78] sm:$0xff]
    %v1585 = vld [vmem:[%s1568 + $0x80] sm:$0xff]
    %v1586 = vld [vmem:[%s1568 + $0x88] sm:$0xff]
    %v1587 = vld [vmem:[%s1568 + $0x90] sm:$0xff]
    %v1588 = vld [vmem:[%s1568 + $0x98] sm:$0xff]
    %v1589 = vld [vmem:[%s1568 + $0xa0] sm:$0xff]
    %v1590 = vld [vmem:[%s1568 + $0xa8] sm:$0xff]
    %v1591 = vld [vmem:[%s1568 + $0xb0] sm:$0xff]
    %v1592 = vld [vmem:[%s1568 + $0xb8] sm:$0xff]
    %v1593 = vld [vmem:[%s1568 + $0xc0] sm:$0xff]
    %v1594 = vld [vmem:[%s1568 + $0xc8] sm:$0xff]
    %v1595 = vld [vmem:[%s1568 + $0xd0] sm:$0xff]
    %v1596 = vld [vmem:[%s1568 + $0xd8] sm:$0xff]
    %v1597 = vld [vmem:[%s1568 + $0xe0] sm:$0xff]
    %v1598 = vld [vmem:[%s1568 + $0xe8] sm:$0xff]
    %v1599 = vld [vmem:[%s1568 + $0xf0] sm:$0xff]
    %v1600 = vld [vmem:[%s1568 + $0xf8] sm:$0xff]
    %v1609 = vunpack.c.l.b16 %v1560
    %v1610 = vunpack.c.l.b16 %v1561
    %v1611 = vunpack.c.l.b16 %v1562
    %v1612 = vunpack.c.l.b16 %v1563
    %v1613 = vunpack.c.l.b16 %v1564
    %v1614 = vunpack.c.l.b16 %v1565
    %v1615 = vunpack.c.l.b16 %v1566
    %v1616 = vunpack.c.l.b16 %v1567
    %v1617 = vpack.c.b16 %v1610, %v1609
    %v1618 = vpack.c.b16 %v1612, %v1611
    %v1619 = vpack.c.b16 %v1614, %v1613
    %v1620 = vpack.c.b16 %v1616, %v1615
    %v1657 = vunpack.c.l.b16 %v1569
    %v1658 = vunpack.c.h.b16 %v1569
    %v1659 = vunpack.c.l.b16 %v1570
    %v1660 = vunpack.c.h.b16 %v1570
    %v1661 = vunpack.c.l.b16 %v1571
    %v1662 = vunpack.c.h.b16 %v1571
    %v1663 = vunpack.c.l.b16 %v1572
    %v1664 = vunpack.c.h.b16 %v1572
    %v1665 = vunpack.c.l.b16 %v1573
    %v1666 = vunpack.c.h.b16 %v1573
    %v1667 = vunpack.c.l.b16 %v1574
    %v1668 = vunpack.c.h.b16 %v1574
    %v1669 = vunpack.c.l.b16 %v1575
    %v1670 = vunpack.c.h.b16 %v1575
    %v1671 = vunpack.c.l.b16 %v1576
    %v1672 = vunpack.c.h.b16 %v1576
    %v1673 = vunpack.c.l.b16 %v1577
    %v1674 = vunpack.c.h.b16 %v1577
    %v1675 = vunpack.c.l.b16 %v1578
    %v1676 = vunpack.c.h.b16 %v1578
    %v1677 = vunpack.c.l.b16 %v1579
    %v1678 = vunpack.c.h.b16 %v1579
    %v1679 = vunpack.c.l.b16 %v1580
    %v1680 = vunpack.c.h.b16 %v1580
    %v1681 = vunpack.c.l.b16 %v1581
    %v1682 = vunpack.c.h.b16 %v1581
    %v1683 = vunpack.c.l.b16 %v1582
    %v1684 = vunpack.c.h.b16 %v1582
    %v1685 = vunpack.c.l.b16 %v1583
    %v1686 = vunpack.c.h.b16 %v1583
    %v1687 = vunpack.c.l.b16 %v1584
    %v1688 = vunpack.c.h.b16 %v1584
    %v1689 = vunpack.c.l.b16 %v1585
    %v1690 = vunpack.c.h.b16 %v1585
    %v1691 = vunpack.c.l.b16 %v1586
    %v1692 = vunpack.c.h.b16 %v1586
    %v1693 = vunpack.c.l.b16 %v1587
    %v1694 = vunpack.c.h.b16 %v1587
    %v1695 = vunpack.c.l.b16 %v1588
    %v1696 = vunpack.c.h.b16 %v1588
    %v1697 = vunpack.c.l.b16 %v1589
    %v1698 = vunpack.c.h.b16 %v1589
    %v1699 = vunpack.c.l.b16 %v1590
    %v1700 = vunpack.c.h.b16 %v1590
    %v1701 = vunpack.c.l.b16 %v1591
    %v1702 = vunpack.c.h.b16 %v1591
    %v1703 = vunpack.c.l.b16 %v1592
    %v1704 = vunpack.c.h.b16 %v1592
    %v1705 = vunpack.c.l.b16 %v1593
    %v1706 = vunpack.c.h.b16 %v1593
    %v1707 = vunpack.c.l.b16 %v1594
    %v1708 = vunpack.c.h.b16 %v1594
    %v1709 = vunpack.c.l.b16 %v1595
    %v1710 = vunpack.c.h.b16 %v1595
    %v1711 = vunpack.c.l.b16 %v1596
    %v1712 = vunpack.c.h.b16 %v1596
    %v1713 = vunpack.c.l.b16 %v1597
    %v1714 = vunpack.c.h.b16 %v1597
    %v1715 = vunpack.c.l.b16 %v1598
    %v1716 = vunpack.c.h.b16 %v1598
    %v1717 = vunpack.c.l.b16 %v1599
    %v1718 = vunpack.c.h.b16 %v1599
    %v1719 = vunpack.c.l.b16 %v1600
    %v1720 = vunpack.c.h.b16 %v1600
    %v1721 = vpack.c.b16 %v1661, %v1657
    %v1722 = vpack.c.b16 %v1662, %v1658
    %v1723 = vpack.c.b16 %v1663, %v1659
    %v1724 = vpack.c.b16 %v1664, %v1660
    %v1725 = vpack.c.b16 %v1669, %v1665
    %v1726 = vpack.c.b16 %v1670, %v1666
    %v1727 = vpack.c.b16 %v1671, %v1667
    %v1728 = vpack.c.b16 %v1672, %v1668
    %v1729 = vpack.c.b16 %v1677, %v1673
    %v1730 = vpack.c.b16 %v1678, %v1674
    %v1731 = vpack.c.b16 %v1679, %v1675
    %v1732 = vpack.c.b16 %v1680, %v1676
    %v1733 = vpack.c.b16 %v1685, %v1681
    %v1734 = vpack.c.b16 %v1686, %v1682
    %v1735 = vpack.c.b16 %v1687, %v1683
    %v1736 = vpack.c.b16 %v1688, %v1684
    %v1737 = vpack.c.b16 %v1693, %v1689
    %v1738 = vpack.c.b16 %v1694, %v1690
    %v1739 = vpack.c.b16 %v1695, %v1691
    %v1740 = vpack.c.b16 %v1696, %v1692
    %v1741 = vpack.c.b16 %v1701, %v1697
    %v1742 = vpack.c.b16 %v1702, %v1698
    %v1743 = vpack.c.b16 %v1703, %v1699
    %v1744 = vpack.c.b16 %v1704, %v1700
    %v1745 = vpack.c.b16 %v1709, %v1705
    %v1746 = vpack.c.b16 %v1710, %v1706
    %v1747 = vpack.c.b16 %v1711, %v1707
    %v1748 = vpack.c.b16 %v1712, %v1708
    %v1749 = vpack.c.b16 %v1717, %v1713
    %v1750 = vpack.c.b16 %v1718, %v1714
    %v1751 = vpack.c.b16 %v1719, %v1715
    %v1752 = vpack.c.b16 %v1720, %v1716
    %1785 = vmatpush.bf16.msra.mxu0 %v1749
    %1786 = vmatpush.bf16.msra.mxu0 %v1745
    %1787 = vmatpush.bf16.msra.mxu0 %v1741
    %1788 = vmatpush.bf16.msra.mxu0 %v1737
    %1789 = vmatpush.bf16.msra.mxu0 %v1733
    %1790 = vmatpush.bf16.msra.mxu0 %v1729
    %1791 = vmatpush.bf16.msra.mxu0 %v1725
    %1792 = vmatpush.bf16.msra.mxu0 %v1721
    %1793 = vmatmul.bf16.gmra.mxu0 %v1617
    %v1794 = vpop.f32.mrf.mxu0
    %v1795 = vadd.f32 0.0, %v1794
    %v1796 = vpop.f32.mrf.mxu0
    %v1797 = vadd.f32 0.0, %v1796
    %1798 = vmatmul.bf16.gmra.mxu0 %v1618
    %v1799 = vpop.f32.mrf.mxu0
    %v1800 = vadd.f32 0.0, %v1799
    %v1801 = vpop.f32.mrf.mxu0
    %v1802 = vadd.f32 0.0, %v1801
    %1803 = vmatmul.bf16.gmra.mxu0 %v1619
    %v1804 = vpop.f32.mrf.mxu0
    %v1805 = vadd.f32 0.0, %v1804
    %v1806 = vpop.f32.mrf.mxu0
    %v1807 = vadd.f32 0.0, %v1806
    %1808 = vmatmul.bf16.gmra.mxu0 %v1620
    %v1809 = vpop.f32.mrf.mxu0
    %v1810 = vadd.f32 0.0, %v1809
    %v1811 = vpop.f32.mrf.mxu0
    %v1812 = vadd.f32 0.0, %v1811
    %1813 = vdwg.mxu0
    %1814 = vmatpush.bf16.msra.mxu0 %v1750
    %1815 = vmatpush.bf16.msra.mxu0 %v1746
    %1816 = vmatpush.bf16.msra.mxu0 %v1742
    %1817 = vmatpush.bf16.msra.mxu0 %v1738
    %1818 = vmatpush.bf16.msra.mxu0 %v1734
    %1819 = vmatpush.bf16.msra.mxu0 %v1730
    %1820 = vmatpush.bf16.msra.mxu0 %v1726
    %1821 = vmatpush.bf16.msra.mxu0 %v1722
    %1822 = vmatmul.bf16.gmra.mxu0 %v1617
    %v1823 = vpop.f32.mrf.mxu0
    %v1824 = vadd.f32 0.0, %v1823
    %v1825 = vpop.f32.mrf.mxu0
    %v1826 = vadd.f32 0.0, %v1825
    %1827 = vmatmul.bf16.gmra.mxu0 %v1618
    %v1828 = vpop.f32.mrf.mxu0
    %v1829 = vadd.f32 0.0, %v1828
    %v1830 = vpop.f32.mrf.mxu0
    %v1831 = vadd.f32 0.0, %v1830
    %1832 = vmatmul.bf16.gmra.mxu0 %v1619
    %v1833 = vpop.f32.mrf.mxu0
    %v1834 = vadd.f32 0.0, %v1833
    %v1835 = vpop.f32.mrf.mxu0
    %v1836 = vadd.f32 0.0, %v1835
    %1837 = vmatmul.bf16.gmra.mxu0 %v1620
    %v1838 = vpop.f32.mrf.mxu0
    %v1839 = vadd.f32 0.0, %v1838
    %v1840 = vpop.f32.mrf.mxu0
    %v1841 = vadd.f32 0.0, %v1840
    %1842 = vdwg.mxu0
    %1843 = vmatpush.bf16.msra.mxu0 %v1751
    %1844 = vmatpush.bf16.msra.mxu0 %v1747
    %1845 = vmatpush.bf16.msra.mxu0 %v1743
    %1846 = vmatpush.bf16.msra.mxu0 %v1739
    %1847 = vmatpush.bf16.msra.mxu0 %v1735
    %1848 = vmatpush.bf16.msra.mxu0 %v1731
    %1849 = vmatpush.bf16.msra.mxu0 %v1727
    %1850 = vmatpush.bf16.msra.mxu0 %v1723
    %1851 = vmatmul.bf16.gmra.mxu0 %v1617
    %v1852 = vpop.f32.mrf.mxu0
    %v1853 = vadd.f32 0.0, %v1852
    %v1854 = vpop.f32.mrf.mxu0
    %v1855 = vadd.f32 0.0, %v1854
    %1856 = vmatmul.bf16.gmra.mxu0 %v1618
    %v1857 = vpop.f32.mrf.mxu0
    %v1858 = vadd.f32 0.0, %v1857
    %v1859 = vpop.f32.mrf.mxu0
    %v1860 = vadd.f32 0.0, %v1859
    %1861 = vmatmul.bf16.gmra.mxu0 %v1619
    %v1862 = vpop.f32.mrf.mxu0
    %v1863 = vadd.f32 0.0, %v1862
    %v1864 = vpop.f32.mrf.mxu0
    %v1865 = vadd.f32 0.0, %v1864
    %1866 = vmatmul.bf16.gmra.mxu0 %v1620
    %v1867 = vpop.f32.mrf.mxu0
    %v1868 = vadd.f32 0.0, %v1867
    %v1869 = vpop.f32.mrf.mxu0
    %v1870 = vadd.f32 0.0, %v1869
    %1871 = vdwg.mxu0
    %1872 = vmatpush.bf16.msra.mxu0 %v1752
    %1873 = vmatpush.bf16.msra.mxu0 %v1748
    %1874 = vmatpush.bf16.msra.mxu0 %v1744
    %1875 = vmatpush.bf16.msra.mxu0 %v1740
    %1876 = vmatpush.bf16.msra.mxu0 %v1736
    %1877 = vmatpush.bf16.msra.mxu0 %v1732
    %1878 = vmatpush.bf16.msra.mxu0 %v1728
    %1879 = vmatpush.bf16.msra.mxu0 %v1724
    %1880 = vmatmul.bf16.gmra.mxu0 %v1617
    %v1881 = vpop.f32.mrf.mxu0
    %v1882 = vadd.f32 0.0, %v1881
    %v1883 = vpop.f32.mrf.mxu0
    %v1884 = vadd.f32 0.0, %v1883
    %1885 = vmatmul.bf16.gmra.mxu0 %v1618
    %v1886 = vpop.f32.mrf.mxu0
    %v1887 = vadd.f32 0.0, %v1886
    %v1888 = vpop.f32.mrf.mxu0
    %v1889 = vadd.f32 0.0, %v1888
    %1890 = vmatmul.bf16.gmra.mxu0 %v1619
    %v1891 = vpop.f32.mrf.mxu0
    %v1892 = vadd.f32 0.0, %v1891
    %v1893 = vpop.f32.mrf.mxu0
    %v1894 = vadd.f32 0.0, %v1893
    %1895 = vmatmul.bf16.gmra.mxu0 %v1620
    %v1896 = vpop.f32.mrf.mxu0
    %v1897 = vadd.f32 0.0, %v1896
    %v1898 = vpop.f32.mrf.mxu0
    %v1899 = vadd.f32 0.0, %v1898
    %1900 = vdwg.mxu0
    %v1901 = vld [vmem:[#allocation6] sm:$0xff]
    %v1902 = vld [vmem:[#allocation6 + $0x8] sm:$0xff]
    %v1903 = vld [vmem:[#allocation6 + $0x10] sm:$0xff]
    %v1904 = vld [vmem:[#allocation6 + $0x18] sm:$0xff]
    %v1905 = vld [vmem:[#allocation6 + $0x20] sm:$0xff]
    %v1906 = vld [vmem:[#allocation6 + $0x28] sm:$0xff]
    %v1907 = vld [vmem:[#allocation6 + $0x30] sm:$0xff]
    %v1908 = vld [vmem:[#allocation6 + $0x38] sm:$0xff]
    %v1909 = vld [vmem:[#allocation6 + $0x40] sm:$0xff]
    %v1910 = vld [vmem:[#allocation6 + $0x48] sm:$0xff]
    %v1911 = vld [vmem:[#allocation6 + $0x50] sm:$0xff]
    %v1912 = vld [vmem:[#allocation6 + $0x58] sm:$0xff]
    %v1913 = vld [vmem:[#allocation6 + $0x60] sm:$0xff]
    %v1914 = vld [vmem:[#allocation6 + $0x68] sm:$0xff]
    %v1915 = vld [vmem:[#allocation6 + $0x70] sm:$0xff]
    %v1916 = vld [vmem:[#allocation6 + $0x78] sm:$0xff]
    %v1917 = vld [vmem:[#allocation6 + $0x80] sm:$0xff]
    %v1918 = vld [vmem:[#allocation6 + $0x88] sm:$0xff]
    %v1919 = vld [vmem:[#allocation6 + $0x90] sm:$0xff]
    %v1920 = vld [vmem:[#allocation6 + $0x98] sm:$0xff]
    %v1921 = vld [vmem:[#allocation6 + $0xa0] sm:$0xff]
    %v1922 = vld [vmem:[#allocation6 + $0xa8] sm:$0xff]
    %v1923 = vld [vmem:[#allocation6 + $0xb0] sm:$0xff]
    %v1924 = vld [vmem:[#allocation6 + $0xb8] sm:$0xff]
    %v1925 = vld [vmem:[#allocation6 + $0xc0] sm:$0xff]
    %v1926 = vld [vmem:[#allocation6 + $0xc8] sm:$0xff]
    %v1927 = vld [vmem:[#allocation6 + $0xd0] sm:$0xff]
    %v1928 = vld [vmem:[#allocation6 + $0xd8] sm:$0xff]
    %v1929 = vld [vmem:[#allocation6 + $0xe0] sm:$0xff]
    %v1930 = vld [vmem:[#allocation6 + $0xe8] sm:$0xff]
    %v1931 = vld [vmem:[#allocation6 + $0xf0] sm:$0xff]
    %v1932 = vld [vmem:[#allocation6 + $0xf8] sm:$0xff]
    %v1933 = vadd.f32 %v1901, %v1795
    %v1934 = vadd.f32 %v1902, %v1824
    %v1935 = vadd.f32 %v1903, %v1853
    %v1936 = vadd.f32 %v1904, %v1882
    %v1937 = vadd.f32 %v1905, %v1797
    %v1938 = vadd.f32 %v1906, %v1826
    %v1939 = vadd.f32 %v1907, %v1855
    %v1940 = vadd.f32 %v1908, %v1884
    %v1941 = vadd.f32 %v1909, %v1800
    %v1942 = vadd.f32 %v1910, %v1829
    %v1943 = vadd.f32 %v1911, %v1858
    %v1944 = vadd.f32 %v1912, %v1887
    %v1945 = vadd.f32 %v1913, %v1802
    %v1946 = vadd.f32 %v1914, %v1831
    %v1947 = vadd.f32 %v1915, %v1860
    %v1948 = vadd.f32 %v1916, %v1889
    %v1949 = vadd.f32 %v1917, %v1805
    %v1950 = vadd.f32 %v1918, %v1834
    %v1951 = vadd.f32 %v1919, %v1863
    %v1952 = vadd.f32 %v1920, %v1892
    %v1953 = vadd.f32 %v1921, %v1807
    %v1954 = vadd.f32 %v1922, %v1836
    %v1955 = vadd.f32 %v1923, %v1865
    %v1956 = vadd.f32 %v1924, %v1894
    %v1957 = vadd.f32 %v1925, %v1810
    %v1958 = vadd.f32 %v1926, %v1839
    %v1959 = vadd.f32 %v1927, %v1868
    %v1960 = vadd.f32 %v1928, %v1897
    %v1961 = vadd.f32 %v1929, %v1812
    %v1962 = vadd.f32 %v1930, %v1841
    %v1963 = vadd.f32 %v1931, %v1870
    %v1964 = vadd.f32 %v1932, %v1899
    %1965 = vst [vmem:[#allocation6] sm:$0xff] %v1933
    %1966 = vst [vmem:[#allocation6 + $0x8] sm:$0xff] %v1934
    %1967 = vst [vmem:[#allocation6 + $0x10] sm:$0xff] %v1935
    %1968 = vst [vmem:[#allocation6 + $0x18] sm:$0xff] %v1936
    %1969 = vst [vmem:[#allocation6 + $0x20] sm:$0xff] %v1937
    %1970 = vst [vmem:[#allocation6 + $0x28] sm:$0xff] %v1938
    %1971 = vst [vmem:[#allocation6 + $0x30] sm:$0xff] %v1939
    %1972 = vst [vmem:[#allocation6 + $0x38] sm:$0xff] %v1940
    %1973 = vst [vmem:[#allocation6 + $0x40] sm:$0xff] %v1941
    %1974 = vst [vmem:[#allocation6 + $0x48] sm:$0xff] %v1942
    %1975 = vst [vmem:[#allocation6 + $0x50] sm:$0xff] %v1943
    %1976 = vst [vmem:[#allocation6 + $0x58] sm:$0xff] %v1944
    %1977 = vst [vmem:[#allocation6 + $0x60] sm:$0xff] %v1945
    %1978 = vst [vmem:[#allocation6 + $0x68] sm:$0xff] %v1946
    %1979 = vst [vmem:[#allocation6 + $0x70] sm:$0xff] %v1947
    %1980 = vst [vmem:[#allocation6 + $0x78] sm:$0xff] %v1948
    %1981 = vst [vmem:[#allocation6 + $0x80] sm:$0xff] %v1949
    %1982 = vst [vmem:[#allocation6 + $0x88] sm:$0xff] %v1950
    %1983 = vst [vmem:[#allocation6 + $0x90] sm:$0xff] %v1951
    %1984 = vst [vmem:[#allocation6 + $0x98] sm:$0xff] %v1952
    %1985 = vst [vmem:[#allocation6 + $0xa0] sm:$0xff] %v1953
    %1986 = vst [vmem:[#allocation6 + $0xa8] sm:$0xff] %v1954
    %1987 = vst [vmem:[#allocation6 + $0xb0] sm:$0xff] %v1955
    %1988 = vst [vmem:[#allocation6 + $0xb8] sm:$0xff] %v1956
    %1989 = vst [vmem:[#allocation6 + $0xc0] sm:$0xff] %v1957
    %1990 = vst [vmem:[#allocation6 + $0xc8] sm:$0xff] %v1958
    %1991 = vst [vmem:[#allocation6 + $0xd0] sm:$0xff] %v1959
    %1992 = vst [vmem:[#allocation6 + $0xd8] sm:$0xff] %v1960
    %1993 = vst [vmem:[#allocation6 + $0xe0] sm:$0xff] %v1961
    %1994 = vst [vmem:[#allocation6 + $0xe8] sm:$0xff] %v1962
    %1995 = vst [vmem:[#allocation6 + $0xf0] sm:$0xff] %v1963
    %1996 = vst [vmem:[#allocation6 + $0xf8] sm:$0xff] %v1964
    %v1997 = vld [vmem:[#allocation2 + $0x8] sm:$0xf]
    %v1998 = vld [vmem:[#allocation2 + $0xc] sm:$0xf]
    %v1999 = vld [vmem:[#allocation2 + $0x10] sm:$0xf]
    %v2000 = vld [vmem:[#allocation2 + $0x14] sm:$0xf]
    %v2001 = vld [vmem:[#allocation2 + $0x18] sm:$0xf]
    %v2002 = vld [vmem:[#allocation2 + $0x1c] sm:$0xf]
    %v2003 = vld [vmem:[#allocation2 + $0x20] sm:$0xf]
    %v2004 = vld [vmem:[#allocation2 + $0x24] sm:$0xf]
    %s2005 = scalar_lea.vmem %s3, 512
    %v2006 = vld [vmem:[%s2005] sm:$0xff]
    %v2007 = vld [vmem:[%s2005 + $0x8] sm:$0xff]
    %v2008 = vld [vmem:[%s2005 + $0x10] sm:$0xff]
    %v2009 = vld [vmem:[%s2005 + $0x18] sm:$0xff]
    %v2010 = vld [vmem:[%s2005 + $0x20] sm:$0xff]
    %v2011 = vld [vmem:[%s2005 + $0x28] sm:$0xff]
    %v2012 = vld [vmem:[%s2005 + $0x30] sm:$0xff]
    %v2013 = vld [vmem:[%s2005 + $0x38] sm:$0xff]
    %v2014 = vld [vmem:[%s2005 + $0x40] sm:$0xff]
    %v2015 = vld [vmem:[%s2005 + $0x48] sm:$0xff]
    %v2016 = vld [vmem:[%s2005 + $0x50] sm:$0xff]
    %v2017 = vld [vmem:[%s2005 + $0x58] sm:$0xff]
    %v2018 = vld [vmem:[%s2005 + $0x60] sm:$0xff]
    %v2019 = vld [vmem:[%s2005 + $0x68] sm:$0xff]
    %v2020 = vld [vmem:[%s2005 + $0x70] sm:$0xff]
    %v2021 = vld [vmem:[%s2005 + $0x78] sm:$0xff]
    %v2022 = vld [vmem:[%s2005 + $0x80] sm:$0xff]
    %v2023 = vld [vmem:[%s2005 + $0x88] sm:$0xff]
    %v2024 = vld [vmem:[%s2005 + $0x90] sm:$0xff]
    %v2025 = vld [vmem:[%s2005 + $0x98] sm:$0xff]
    %v2026 = vld [vmem:[%s2005 + $0xa0] sm:$0xff]
    %v2027 = vld [vmem:[%s2005 + $0xa8] sm:$0xff]
    %v2028 = vld [vmem:[%s2005 + $0xb0] sm:$0xff]
    %v2029 = vld [vmem:[%s2005 + $0xb8] sm:$0xff]
    %v2030 = vld [vmem:[%s2005 + $0xc0] sm:$0xff]
    %v2031 = vld [vmem:[%s2005 + $0xc8] sm:$0xff]
    %v2032 = vld [vmem:[%s2005 + $0xd0] sm:$0xff]
    %v2033 = vld [vmem:[%s2005 + $0xd8] sm:$0xff]
    %v2034 = vld [vmem:[%s2005 + $0xe0] sm:$0xff]
    %v2035 = vld [vmem:[%s2005 + $0xe8] sm:$0xff]
    %v2036 = vld [vmem:[%s2005 + $0xf0] sm:$0xff]
    %v2037 = vld [vmem:[%s2005 + $0xf8] sm:$0xff]
    %v2046 = vunpack.c.l.b16 %v1997
    %v2047 = vunpack.c.l.b16 %v1998
    %v2048 = vunpack.c.l.b16 %v1999
    %v2049 = vunpack.c.l.b16 %v2000
    %v2050 = vunpack.c.l.b16 %v2001
    %v2051 = vunpack.c.l.b16 %v2002
    %v2052 = vunpack.c.l.b16 %v2003
    %v2053 = vunpack.c.l.b16 %v2004
    %v2054 = vpack.c.b16 %v2047, %v2046
    %v2055 = vpack.c.b16 %v2049, %v2048
    %v2056 = vpack.c.b16 %v2051, %v2050
    %v2057 = vpack.c.b16 %v2053, %v2052
    %v2094 = vunpack.c.l.b16 %v2006
    %v2095 = vunpack.c.h.b16 %v2006
    %v2096 = vunpack.c.l.b16 %v2007
    %v2097 = vunpack.c.h.b16 %v2007
    %v2098 = vunpack.c.l.b16 %v2008
    %v2099 = vunpack.c.h.b16 %v2008
    %v2100 = vunpack.c.l.b16 %v2009
    %v2101 = vunpack.c.h.b16 %v2009
    %v2102 = vunpack.c.l.b16 %v2010
    %v2103 = vunpack.c.h.b16 %v2010
    %v2104 = vunpack.c.l.b16 %v2011
    %v2105 = vunpack.c.h.b16 %v2011
    %v2106 = vunpack.c.l.b16 %v2012
    %v2107 = vunpack.c.h.b16 %v2012
    %v2108 = vunpack.c.l.b16 %v2013
    %v2109 = vunpack.c.h.b16 %v2013
    %v2110 = vunpack.c.l.b16 %v2014
    %v2111 = vunpack.c.h.b16 %v2014
    %v2112 = vunpack.c.l.b16 %v2015
    %v2113 = vunpack.c.h.b16 %v2015
    %v2114 = vunpack.c.l.b16 %v2016
    %v2115 = vunpack.c.h.b16 %v2016
    %v2116 = vunpack.c.l.b16 %v2017
    %v2117 = vunpack.c.h.b16 %v2017
    %v2118 = vunpack.c.l.b16 %v2018
    %v2119 = vunpack.c.h.b16 %v2018
    %v2120 = vunpack.c.l.b16 %v2019
    %v2121 = vunpack.c.h.b16 %v2019
    %v2122 = vunpack.c.l.b16 %v2020
    %v2123 = vunpack.c.h.b16 %v2020
    %v2124 = vunpack.c.l.b16 %v2021
    %v2125 = vunpack.c.h.b16 %v2021
    %v2126 = vunpack.c.l.b16 %v2022
    %v2127 = vunpack.c.h.b16 %v2022
    %v2128 = vunpack.c.l.b16 %v2023
    %v2129 = vunpack.c.h.b16 %v2023
    %v2130 = vunpack.c.l.b16 %v2024
    %v2131 = vunpack.c.h.b16 %v2024
    %v2132 = vunpack.c.l.b16 %v2025
    %v2133 = vunpack.c.h.b16 %v2025
    %v2134 = vunpack.c.l.b16 %v2026
    %v2135 = vunpack.c.h.b16 %v2026
    %v2136 = vunpack.c.l.b16 %v2027
    %v2137 = vunpack.c.h.b16 %v2027
    %v2138 = vunpack.c.l.b16 %v2028
    %v2139 = vunpack.c.h.b16 %v2028
    %v2140 = vunpack.c.l.b16 %v2029
    %v2141 = vunpack.c.h.b16 %v2029
    %v2142 = vunpack.c.l.b16 %v2030
    %v2143 = vunpack.c.h.b16 %v2030
    %v2144 = vunpack.c.l.b16 %v2031
    %v2145 = vunpack.c.h.b16 %v2031
    %v2146 = vunpack.c.l.b16 %v2032
    %v2147 = vunpack.c.h.b16 %v2032
    %v2148 = vunpack.c.l.b16 %v2033
    %v2149 = vunpack.c.h.b16 %v2033
    %v2150 = vunpack.c.l.b16 %v2034
    %v2151 = vunpack.c.h.b16 %v2034
    %v2152 = vunpack.c.l.b16 %v2035
    %v2153 = vunpack.c.h.b16 %v2035
    %v2154 = vunpack.c.l.b16 %v2036
    %v2155 = vunpack.c.h.b16 %v2036
    %v2156 = vunpack.c.l.b16 %v2037
    %v2157 = vunpack.c.h.b16 %v2037
    %v2158 = vpack.c.b16 %v2098, %v2094
    %v2159 = vpack.c.b16 %v2099, %v2095
    %v2160 = vpack.c.b16 %v2100, %v2096
    %v2161 = vpack.c.b16 %v2101, %v2097
    %v2162 = vpack.c.b16 %v2106, %v2102
    %v2163 = vpack.c.b16 %v2107, %v2103
    %v2164 = vpack.c.b16 %v2108, %v2104
    %v2165 = vpack.c.b16 %v2109, %v2105
    %v2166 = vpack.c.b16 %v2114, %v2110
    %v2167 = vpack.c.b16 %v2115, %v2111
    %v2168 = vpack.c.b16 %v2116, %v2112
    %v2169 = vpack.c.b16 %v2117, %v2113
    %v2170 = vpack.c.b16 %v2122, %v2118
    %v2171 = vpack.c.b16 %v2123, %v2119
    %v2172 = vpack.c.b16 %v2124, %v2120
    %v2173 = vpack.c.b16 %v2125, %v2121
    %v2174 = vpack.c.b16 %v2130, %v2126
    %v2175 = vpack.c.b16 %v2131, %v2127
    %v2176 = vpack.c.b16 %v2132, %v2128
    %v2177 = vpack.c.b16 %v2133, %v2129
    %v2178 = vpack.c.b16 %v2138, %v2134
    %v2179 = vpack.c.b16 %v2139, %v2135
    %v2180 = vpack.c.b16 %v2140, %v2136
    %v2181 = vpack.c.b16 %v2141, %v2137
    %v2182 = vpack.c.b16 %v2146, %v2142
    %v2183 = vpack.c.b16 %v2147, %v2143
    %v2184 = vpack.c.b16 %v2148, %v2144
    %v2185 = vpack.c.b16 %v2149, %v2145
    %v2186 = vpack.c.b16 %v2154, %v2150
    %v2187 = vpack.c.b16 %v2155, %v2151
    %v2188 = vpack.c.b16 %v2156, %v2152
    %v2189 = vpack.c.b16 %v2157, %v2153
    %2222 = vmatpush.bf16.msra.mxu0 %v2186
    %2223 = vmatpush.bf16.msra.mxu0 %v2182
    %2224 = vmatpush.bf16.msra.mxu0 %v2178
    %2225 = vmatpush.bf16.msra.mxu0 %v2174
    %2226 = vmatpush.bf16.msra.mxu0 %v2170
    %2227 = vmatpush.bf16.msra.mxu0 %v2166
    %2228 = vmatpush.bf16.msra.mxu0 %v2162
    %2229 = vmatpush.bf16.msra.mxu0 %v2158
    %2230 = vmatmul.bf16.gmra.mxu0 %v2054
    %v2231 = vpop.f32.mrf.mxu0
    %v2232 = vadd.f32 0.0, %v2231
    %v2233 = vpop.f32.mrf.mxu0
    %v2234 = vadd.f32 0.0, %v2233
    %2235 = vmatmul.bf16.gmra.mxu0 %v2055
    %v2236 = vpop.f32.mrf.mxu0
    %v2237 = vadd.f32 0.0, %v2236
    %v2238 = vpop.f32.mrf.mxu0
    %v2239 = vadd.f32 0.0, %v2238
    %2240 = vmatmul.bf16.gmra.mxu0 %v2056
    %v2241 = vpop.f32.mrf.mxu0
    %v2242 = vadd.f32 0.0, %v2241
    %v2243 = vpop.f32.mrf.mxu0
    %v2244 = vadd.f32 0.0, %v2243
    %2245 = vmatmul.bf16.gmra.mxu0 %v2057
    %v2246 = vpop.f32.mrf.mxu0
    %v2247 = vadd.f32 0.0, %v2246
    %v2248 = vpop.f32.mrf.mxu0
    %v2249 = vadd.f32 0.0, %v2248
    %2250 = vdwg.mxu0
    %2251 = vmatpush.bf16.msra.mxu0 %v2187
    %2252 = vmatpush.bf16.msra.mxu0 %v2183
    %2253 = vmatpush.bf16.msra.mxu0 %v2179
    %2254 = vmatpush.bf16.msra.mxu0 %v2175
    %2255 = vmatpush.bf16.msra.mxu0 %v2171
    %2256 = vmatpush.bf16.msra.mxu0 %v2167
    %2257 = vmatpush.bf16.msra.mxu0 %v2163
    %2258 = vmatpush.bf16.msra.mxu0 %v2159
    %2259 = vmatmul.bf16.gmra.mxu0 %v2054
    %v2260 = vpop.f32.mrf.mxu0
    %v2261 = vadd.f32 0.0, %v2260
    %v2262 = vpop.f32.mrf.mxu0
    %v2263 = vadd.f32 0.0, %v2262
    %2264 = vmatmul.bf16.gmra.mxu0 %v2055
    %v2265 = vpop.f32.mrf.mxu0
    %v2266 = vadd.f32 0.0, %v2265
    %v2267 = vpop.f32.mrf.mxu0
    %v2268 = vadd.f32 0.0, %v2267
    %2269 = vmatmul.bf16.gmra.mxu0 %v2056
    %v2270 = vpop.f32.mrf.mxu0
    %v2271 = vadd.f32 0.0, %v2270
    %v2272 = vpop.f32.mrf.mxu0
    %v2273 = vadd.f32 0.0, %v2272
    %2274 = vmatmul.bf16.gmra.mxu0 %v2057
    %v2275 = vpop.f32.mrf.mxu0
    %v2276 = vadd.f32 0.0, %v2275
    %v2277 = vpop.f32.mrf.mxu0
    %v2278 = vadd.f32 0.0, %v2277
    %2279 = vdwg.mxu0
    %2280 = vmatpush.bf16.msra.mxu0 %v2188
    %2281 = vmatpush.bf16.msra.mxu0 %v2184
    %2282 = vmatpush.bf16.msra.mxu0 %v2180
    %2283 = vmatpush.bf16.msra.mxu0 %v2176
    %2284 = vmatpush.bf16.msra.mxu0 %v2172
    %2285 = vmatpush.bf16.msra.mxu0 %v2168
    %2286 = vmatpush.bf16.msra.mxu0 %v2164
    %2287 = vmatpush.bf16.msra.mxu0 %v2160
    %2288 = vmatmul.bf16.gmra.mxu0 %v2054
    %v2289 = vpop.f32.mrf.mxu0
    %v2290 = vadd.f32 0.0, %v2289
    %v2291 = vpop.f32.mrf.mxu0
    %v2292 = vadd.f32 0.0, %v2291
    %2293 = vmatmul.bf16.gmra.mxu0 %v2055
    %v2294 = vpop.f32.mrf.mxu0
    %v2295 = vadd.f32 0.0, %v2294
    %v2296 = vpop.f32.mrf.mxu0
    %v2297 = vadd.f32 0.0, %v2296
    %2298 = vmatmul.bf16.gmra.mxu0 %v2056
    %v2299 = vpop.f32.mrf.mxu0
    %v2300 = vadd.f32 0.0, %v2299
    %v2301 = vpop.f32.mrf.mxu0
    %v2302 = vadd.f32 0.0, %v2301
    %2303 = vmatmul.bf16.gmra.mxu0 %v2057
    %v2304 = vpop.f32.mrf.mxu0
    %v2305 = vadd.f32 0.0, %v2304
    %v2306 = vpop.f32.mrf.mxu0
    %v2307 = vadd.f32 0.0, %v2306
    %2308 = vdwg.mxu0
    %2309 = vmatpush.bf16.msra.mxu0 %v2189
    %2310 = vmatpush.bf16.msra.mxu0 %v2185
    %2311 = vmatpush.bf16.msra.mxu0 %v2181
    %2312 = vmatpush.bf16.msra.mxu0 %v2177
    %2313 = vmatpush.bf16.msra.mxu0 %v2173
    %2314 = vmatpush.bf16.msra.mxu0 %v2169
    %2315 = vmatpush.bf16.msra.mxu0 %v2165
    %2316 = vmatpush.bf16.msra.mxu0 %v2161
    %2317 = vmatmul.bf16.gmra.mxu0 %v2054
    %v2318 = vpop.f32.mrf.mxu0
    %v2319 = vadd.f32 0.0, %v2318
    %v2320 = vpop.f32.mrf.mxu0
    %v2321 = vadd.f32 0.0, %v2320
    %2322 = vmatmul.bf16.gmra.mxu0 %v2055
    %v2323 = vpop.f32.mrf.mxu0
    %v2324 = vadd.f32 0.0, %v2323
    %v2325 = vpop.f32.mrf.mxu0
    %v2326 = vadd.f32 0.0, %v2325
    %2327 = vmatmul.bf16.gmra.mxu0 %v2056
    %v2328 = vpop.f32.mrf.mxu0
    %v2329 = vadd.f32 0.0, %v2328
    %v2330 = vpop.f32.mrf.mxu0
    %v2331 = vadd.f32 0.0, %v2330
    %2332 = vmatmul.bf16.gmra.mxu0 %v2057
    %v2333 = vpop.f32.mrf.mxu0
    %v2334 = vadd.f32 0.0, %v2333
    %v2335 = vpop.f32.mrf.mxu0
    %v2336 = vadd.f32 0.0, %v2335
    %2337 = vdwg.mxu0
    %v2338 = vld [vmem:[#allocation6] sm:$0xff]
    %v2339 = vld [vmem:[#allocation6 + $0x8] sm:$0xff]
    %v2340 = vld [vmem:[#allocation6 + $0x10] sm:$0xff]
    %v2341 = vld [vmem:[#allocation6 + $0x18] sm:$0xff]
    %v2342 = vld [vmem:[#allocation6 + $0x20] sm:$0xff]
    %v2343 = vld [vmem:[#allocation6 + $0x28] sm:$0xff]
    %v2344 = vld [vmem:[#allocation6 + $0x30] sm:$0xff]
    %v2345 = vld [vmem:[#allocation6 + $0x38] sm:$0xff]
    %v2346 = vld [vmem:[#allocation6 + $0x40] sm:$0xff]
    %v2347 = vld [vmem:[#allocation6 + $0x48] sm:$0xff]
    %v2348 = vld [vmem:[#allocation6 + $0x50] sm:$0xff]
    %v2349 = vld [vmem:[#allocation6 + $0x58] sm:$0xff]
    %v2350 = vld [vmem:[#allocation6 + $0x60] sm:$0xff]
    %v2351 = vld [vmem:[#allocation6 + $0x68] sm:$0xff]
    %v2352 = vld [vmem:[#allocation6 + $0x70] sm:$0xff]
    %v2353 = vld [vmem:[#allocation6 + $0x78] sm:$0xff]
    %v2354 = vld [vmem:[#allocation6 + $0x80] sm:$0xff]
    %v2355 = vld [vmem:[#allocation6 + $0x88] sm:$0xff]
    %v2356 = vld [vmem:[#allocation6 + $0x90] sm:$0xff]
    %v2357 = vld [vmem:[#allocation6 + $0x98] sm:$0xff]
    %v2358 = vld [vmem:[#allocation6 + $0xa0] sm:$0xff]
    %v2359 = vld [vmem:[#allocation6 + $0xa8] sm:$0xff]
    %v2360 = vld [vmem:[#allocation6 + $0xb0] sm:$0xff]
    %v2361 = vld [vmem:[#allocation6 + $0xb8] sm:$0xff]
    %v2362 = vld [vmem:[#allocation6 + $0xc0] sm:$0xff]
    %v2363 = vld [vmem:[#allocation6 + $0xc8] sm:$0xff]
    %v2364 = vld [vmem:[#allocation6 + $0xd0] sm:$0xff]
    %v2365 = vld [vmem:[#allocation6 + $0xd8] sm:$0xff]
    %v2366 = vld [vmem:[#allocation6 + $0xe0] sm:$0xff]
    %v2367 = vld [vmem:[#allocation6 + $0xe8] sm:$0xff]
    %v2368 = vld [vmem:[#allocation6 + $0xf0] sm:$0xff]
    %v2369 = vld [vmem:[#allocation6 + $0xf8] sm:$0xff]
    %v2370 = vadd.f32 %v2338, %v2232
    %v2371 = vadd.f32 %v2339, %v2261
    %v2372 = vadd.f32 %v2340, %v2290
    %v2373 = vadd.f32 %v2341, %v2319
    %v2374 = vadd.f32 %v2342, %v2234
    %v2375 = vadd.f32 %v2343, %v2263
    %v2376 = vadd.f32 %v2344, %v2292
    %v2377 = vadd.f32 %v2345, %v2321
    %v2378 = vadd.f32 %v2346, %v2237
    %v2379 = vadd.f32 %v2347, %v2266
    %v2380 = vadd.f32 %v2348, %v2295
    %v2381 = vadd.f32 %v2349, %v2324
    %v2382 = vadd.f32 %v2350, %v2239
    %v2383 = vadd.f32 %v2351, %v2268
    %v2384 = vadd.f32 %v2352, %v2297
    %v2385 = vadd.f32 %v2353, %v2326
    %v2386 = vadd.f32 %v2354, %v2242
    %v2387 = vadd.f32 %v2355, %v2271
    %v2388 = vadd.f32 %v2356, %v2300
    %v2389 = vadd.f32 %v2357, %v2329
    %v2390 = vadd.f32 %v2358, %v2244
    %v2391 = vadd.f32 %v2359, %v2273
    %v2392 = vadd.f32 %v2360, %v2302
    %v2393 = vadd.f32 %v2361, %v2331
    %v2394 = vadd.f32 %v2362, %v2247
    %v2395 = vadd.f32 %v2363, %v2276
    %v2396 = vadd.f32 %v2364, %v2305
    %v2397 = vadd.f32 %v2365, %v2334
    %v2398 = vadd.f32 %v2366, %v2249
    %v2399 = vadd.f32 %v2367, %v2278
    %v2400 = vadd.f32 %v2368, %v2307
    %v2401 = vadd.f32 %v2369, %v2336
    %2402 = vst [vmem:[#allocation6] sm:$0xff] %v2370
    %2403 = vst [vmem:[#allocation6 + $0x8] sm:$0xff] %v2371
    %2404 = vst [vmem:[#allocation6 + $0x10] sm:$0xff] %v2372
    %2405 = vst [vmem:[#allocation6 + $0x18] sm:$0xff] %v2373
    %2406 = vst [vmem:[#allocation6 + $0x20] sm:$0xff] %v2374
    %2407 = vst [vmem:[#allocation6 + $0x28] sm:$0xff] %v2375
    %2408 = vst [vmem:[#allocation6 + $0x30] sm:$0xff] %v2376
    %2409 = vst [vmem:[#allocation6 + $0x38] sm:$0xff] %v2377
    %2410 = vst [vmem:[#allocation6 + $0x40] sm:$0xff] %v2378
    %2411 = vst [vmem:[#allocation6 + $0x48] sm:$0xff] %v2379
    %2412 = vst [vmem:[#allocation6 + $0x50] sm:$0xff] %v2380
    %2413 = vst [vmem:[#allocation6 + $0x58] sm:$0xff] %v2381
    %2414 = vst [vmem:[#allocation6 + $0x60] sm:$0xff] %v2382
    %2415 = vst [vmem:[#allocation6 + $0x68] sm:$0xff] %v2383
    %2416 = vst [vmem:[#allocation6 + $0x70] sm:$0xff] %v2384
    %2417 = vst [vmem:[#allocation6 + $0x78] sm:$0xff] %v2385
    %2418 = vst [vmem:[#allocation6 + $0x80] sm:$0xff] %v2386
    %2419 = vst [vmem:[#allocation6 + $0x88] sm:$0xff] %v2387
    %2420 = vst [vmem:[#allocation6 + $0x90] sm:$0xff] %v2388
    %2421 = vst [vmem:[#allocation6 + $0x98] sm:$0xff] %v2389
    %2422 = vst [vmem:[#allocation6 + $0xa0] sm:$0xff] %v2390
    %2423 = vst [vmem:[#allocation6 + $0xa8] sm:$0xff] %v2391
    %2424 = vst [vmem:[#allocation6 + $0xb0] sm:$0xff] %v2392
    %2425 = vst [vmem:[#allocation6 + $0xb8] sm:$0xff] %v2393
    %2426 = vst [vmem:[#allocation6 + $0xc0] sm:$0xff] %v2394
    %2427 = vst [vmem:[#allocation6 + $0xc8] sm:$0xff] %v2395
    %2428 = vst [vmem:[#allocation6 + $0xd0] sm:$0xff] %v2396
    %2429 = vst [vmem:[#allocation6 + $0xd8] sm:$0xff] %v2397
    %2430 = vst [vmem:[#allocation6 + $0xe0] sm:$0xff] %v2398
    %2431 = vst [vmem:[#allocation6 + $0xe8] sm:$0xff] %v2399
    %2432 = vst [vmem:[#allocation6 + $0xf0] sm:$0xff] %v2400
    %2433 = vst [vmem:[#allocation6 + $0xf8] sm:$0xff] %v2401
    %v2434 = vld [vmem:[%s4] sm:$0x3]
    %v2435 = vld [vmem:[#allocation6] sm:$0xff]
    %v2436 = vld [vmem:[#allocation6 + $0x8] sm:$0xff]
    %v2437 = vld [vmem:[#allocation6 + $0x10] sm:$0xff]
    %v2438 = vld [vmem:[#allocation6 + $0x18] sm:$0xff]
    %v2439 = vld [vmem:[#allocation6 + $0x20] sm:$0xff]
    %v2440 = vld [vmem:[#allocation6 + $0x28] sm:$0xff]
    %v2441 = vld [vmem:[#allocation6 + $0x30] sm:$0xff]
    %v2442 = vld [vmem:[#allocation6 + $0x38] sm:$0xff]
    %v2443 = vmax.f32 %v2435, %v2439
    %v2444 = vmax.f32 %v2436, %v2440
    %v2445 = vmax.f32 %v2437, %v2441
    %v2446 = vmax.f32 %v2438, %v2442
    %v2447 = vmax.f32 %v2443, %v2445
    %v2448 = vmax.f32 %v2444, %v2446
    %v2450 = vperm.slane %v2434, 0
    %v2451 = vperm.slane %v2434, 1
    %v2454 = vadd.f32 %v2447, %v2450
    %v2455 = vadd.f32 %v2448, %v2451
    %v2456 = vmax.f32 %v2454, 0.0
    %v2457 = vmax.f32 %v2455, 0.0
    %v2458 = vpack.c.bf16 %v2457, %v2456
    %2459 = vst [vmem:[#allocation3 + $0x8] sm:$0xff] %v2458
    %v2460 = vld [vmem:[#allocation6 + $0x40] sm:$0xff]
    %v2461 = vld [vmem:[#allocation6 + $0x48] sm:$0xff]
    %v2462 = vld [vmem:[#allocation6 + $0x50] sm:$0xff]
    %v2463 = vld [vmem:[#allocation6 + $0x58] sm:$0xff]
    %v2464 = vld [vmem:[#allocation6 + $0x60] sm:$0xff]
    %v2465 = vld [vmem:[#allocation6 + $0x68] sm:$0xff]
    %v2466 = vld [vmem:[#allocation6 + $0x70] sm:$0xff]
    %v2467 = vld [vmem:[#allocation6 + $0x78] sm:$0xff]
    %v2468 = vmax.f32 %v2460, %v2464
    %v2469 = vmax.f32 %v2461, %v2465
    %v2470 = vmax.f32 %v2462, %v2466
    %v2471 = vmax.f32 %v2463, %v2467
    %v2472 = vmax.f32 %v2468, %v2470
    %v2473 = vmax.f32 %v2469, %v2471
    %v2474 = vadd.f32 %v2472, %v2450
    %v2475 = vadd.f32 %v2473, %v2451
    %v2476 = vmax.f32 %v2474, 0.0
    %v2477 = vmax.f32 %v2475, 0.0
    %v2478 = vpack.c.bf16 %v2477, %v2476
    %2479 = vst [vmem:[#allocation3 + $0x10] sm:$0xff] %v2478
    %v2480 = vld [vmem:[#allocation6 + $0x80] sm:$0xff]
    %v2481 = vld [vmem:[#allocation6 + $0x88] sm:$0xff]
    %v2482 = vld [vmem:[#allocation6 + $0x90] sm:$0xff]
    %v2483 = vld [vmem:[#allocation6 + $0x98] sm:$0xff]
    %v2484 = vld [vmem:[#allocation6 + $0xa0] sm:$0xff]
    %v2485 = vld [vmem:[#allocation6 + $0xa8] sm:$0xff]
    %v2486 = vld [vmem:[#allocation6 + $0xb0] sm:$0xff]
    %v2487 = vld [vmem:[#allocation6 + $0xb8] sm:$0xff]
    %v2488 = vmax.f32 %v2480, %v2484
    %v2489 = vmax.f32 %v2481, %v2485
    %v2490 = vmax.f32 %v2482, %v2486
    %v2491 = vmax.f32 %v2483, %v2487
    %v2492 = vmax.f32 %v2488, %v2490
    %v2493 = vmax.f32 %v2489, %v2491
    %v2494 = vadd.f32 %v2492, %v2450
    %v2495 = vadd.f32 %v2493, %v2451
    %v2496 = vmax.f32 %v2494, 0.0
    %v2497 = vmax.f32 %v2495, 0.0
    %v2498 = vpack.c.bf16 %v2497, %v2496
    %2499 = vst [vmem:[#allocation3 + $0x18] sm:$0xff] %v2498
    %v2500 = vld [vmem:[#allocation6 + $0xc0] sm:$0xff]
    %v2501 = vld [vmem:[#allocation6 + $0xc8] sm:$0xff]
    %v2502 = vld [vmem:[#allocation6 + $0xd0] sm:$0xff]
    %v2503 = vld [vmem:[#allocation6 + $0xd8] sm:$0xff]
    %v2504 = vld [vmem:[#allocation6 + $0xe0] sm:$0xff]
    %v2505 = vld [vmem:[#allocation6 + $0xe8] sm:$0xff]
    %v2506 = vld [vmem:[#allocation6 + $0xf0] sm:$0xff]
    %v2507 = vld [vmem:[#allocation6 + $0xf8] sm:$0xff]
    %v2508 = vmax.f32 %v2500, %v2504
    %v2509 = vmax.f32 %v2501, %v2505
    %v2510 = vmax.f32 %v2502, %v2506
    %v2511 = vmax.f32 %v2503, %v2507
    %v2512 = vmax.f32 %v2508, %v2510
    %v2513 = vmax.f32 %v2509, %v2511
    %v2514 = vadd.f32 %v2512, %v2450
    %v2515 = vadd.f32 %v2513, %v2451
    %v2516 = vmax.f32 %v2514, 0.0
    %v2517 = vmax.f32 %v2515, 0.0
    %v2518 = vpack.c.bf16 %v2517, %v2516
    %2519 = vst [vmem:[#allocation3 + $0x20] sm:$0xff] %v2518
    %v2520 = vld [vmem:[#allocation3] sm:$0xff]
    %v2521 = vld [vmem:[#allocation3 + $0x8] sm:$0xff]
    %v2522 = vld [vmem:[#allocation3 + $0x10] sm:$0xff]
    %v2523 = vld [vmem:[#allocation3 + $0x18] sm:$0xff]
    %v2524 = vld [vmem:[#allocation10] sm:$0xff]
    %v2525 = vld [vmem:[#allocation10 + $0x8] sm:$0xff]
    %v2526 = vld [vmem:[#allocation10 + $0x10] sm:$0xff]
    %v2527 = vld [vmem:[#allocation10 + $0x18] sm:$0xff]
    %v2528 = vld [vmem:[#allocation10 + $0x20] sm:$0xff]
    %v2529 = vld [vmem:[#allocation10 + $0x28] sm:$0xff]
    %v2530 = vld [vmem:[#allocation10 + $0x30] sm:$0xff]
    %v2531 = vld [vmem:[#allocation10 + $0x38] sm:$0xff]
    %v2532 = vld [vmem:[#allocation10 + $0x40] sm:$0xff]
    %v2533 = vld [vmem:[#allocation10 + $0x48] sm:$0xff]
    %v2534 = vld [vmem:[#allocation10 + $0x50] sm:$0xff]
    %v2535 = vld [vmem:[#allocation10 + $0x58] sm:$0xff]
    %v2536 = vld [vmem:[#allocation10 + $0x60] sm:$0xff]
    %v2537 = vld [vmem:[#allocation10 + $0x68] sm:$0xff]
    %v2538 = vld [vmem:[#allocation10 + $0x70] sm:$0xff]
    %v2539 = vld [vmem:[#allocation10 + $0x78] sm:$0xff]
    %v2540 = vld [vmem:[#allocation10 + $0x80] sm:$0xff]
    %v2541 = vld [vmem:[#allocation10 + $0x88] sm:$0xff]
    %v2542 = vld [vmem:[#allocation10 + $0x90] sm:$0xff]
    %v2543 = vld [vmem:[#allocation10 + $0x98] sm:$0xff]
    %v2544 = vld [vmem:[#allocation10 + $0xa0] sm:$0xff]
    %v2545 = vld [vmem:[#allocation10 + $0xa8] sm:$0xff]
    %v2546 = vld [vmem:[#allocation10 + $0xb0] sm:$0xff]
    %v2547 = vld [vmem:[#allocation10 + $0xb8] sm:$0xff]
    %v2548 = vld [vmem:[#allocation10 + $0xc0] sm:$0xff]
    %v2549 = vld [vmem:[#allocation10 + $0xc8] sm:$0xff]
    %v2550 = vld [vmem:[#allocation10 + $0xd0] sm:$0xff]
    %v2551 = vld [vmem:[#allocation10 + $0xd8] sm:$0xff]
    %v2552 = vld [vmem:[#allocation10 + $0xe0] sm:$0xff]
    %v2553 = vld [vmem:[#allocation10 + $0xe8] sm:$0xff]
    %v2554 = vld [vmem:[#allocation10 + $0xf0] sm:$0xff]
    %v2555 = vld [vmem:[#allocation10 + $0xf8] sm:$0xff]
    %v2556 = vld [vmem:[#allocation10 + $0x100] sm:$0xff]
    %v2557 = vld [vmem:[#allocation10 + $0x108] sm:$0xff]
    %v2558 = vld [vmem:[#allocation10 + $0x110] sm:$0xff]
    %v2559 = vld [vmem:[#allocation10 + $0x118] sm:$0xff]
    %v2560 = vld [vmem:[#allocation10 + $0x120] sm:$0xff]
    %v2561 = vld [vmem:[#allocation10 + $0x128] sm:$0xff]
    %v2562 = vld [vmem:[#allocation10 + $0x130] sm:$0xff]
    %v2563 = vld [vmem:[#allocation10 + $0x138] sm:$0xff]
    %v2564 = vld [vmem:[#allocation10 + $0x140] sm:$0xff]
    %v2565 = vld [vmem:[#allocation10 + $0x148] sm:$0xff]
    %v2566 = vld [vmem:[#allocation10 + $0x150] sm:$0xff]
    %v2567 = vld [vmem:[#allocation10 + $0x158] sm:$0xff]
    %v2568 = vld [vmem:[#allocation10 + $0x160] sm:$0xff]
    %v2569 = vld [vmem:[#allocation10 + $0x168] sm:$0xff]
    %v2570 = vld [vmem:[#allocation10 + $0x170] sm:$0xff]
    %v2571 = vld [vmem:[#allocation10 + $0x178] sm:$0xff]
    %v2572 = vld [vmem:[#allocation10 + $0x180] sm:$0xff]
    %v2573 = vld [vmem:[#allocation10 + $0x188] sm:$0xff]
    %v2574 = vld [vmem:[#allocation10 + $0x190] sm:$0xff]
    %v2575 = vld [vmem:[#allocation10 + $0x198] sm:$0xff]
    %v2576 = vld [vmem:[#allocation10 + $0x1a0] sm:$0xff]
    %v2577 = vld [vmem:[#allocation10 + $0x1a8] sm:$0xff]
    %v2578 = vld [vmem:[#allocation10 + $0x1b0] sm:$0xff]
    %v2579 = vld [vmem:[#allocation10 + $0x1b8] sm:$0xff]
    %v2580 = vld [vmem:[#allocation10 + $0x1c0] sm:$0xff]
    %v2581 = vld [vmem:[#allocation10 + $0x1c8] sm:$0xff]
    %v2582 = vld [vmem:[#allocation10 + $0x1d0] sm:$0xff]
    %v2583 = vld [vmem:[#allocation10 + $0x1d8] sm:$0xff]
    %v2584 = vld [vmem:[#allocation10 + $0x1e0] sm:$0xff]
    %v2585 = vld [vmem:[#allocation10 + $0x1e8] sm:$0xff]
    %v2586 = vld [vmem:[#allocation10 + $0x1f0] sm:$0xff]
    %v2587 = vld [vmem:[#allocation10 + $0x1f8] sm:$0xff]
    %v2592 = vunpack.c.l.b16 %v2520
    %v2593 = vunpack.c.h.b16 %v2520
    %v2594 = vunpack.c.l.b16 %v2521
    %v2595 = vunpack.c.h.b16 %v2521
    %v2596 = vunpack.c.l.b16 %v2522
    %v2597 = vunpack.c.h.b16 %v2522
    %v2598 = vunpack.c.l.b16 %v2523
    %v2599 = vunpack.c.h.b16 %v2523
    %v2600 = vpack.c.b16 %v2594, %v2592
    %v2601 = vpack.c.b16 %v2595, %v2593
    %v2602 = vpack.c.b16 %v2598, %v2596
    %v2603 = vpack.c.b16 %v2599, %v2597
    %v2672 = vunpack.c.l.b16 %v2524
    %v2673 = vunpack.c.h.b16 %v2524
    %v2674 = vunpack.c.l.b16 %v2525
    %v2675 = vunpack.c.h.b16 %v2525
    %v2676 = vunpack.c.l.b16 %v2526
    %v2677 = vunpack.c.h.b16 %v2526
    %v2678 = vunpack.c.l.b16 %v2527
    %v2679 = vunpack.c.h.b16 %v2527
    %v2680 = vunpack.c.l.b16 %v2528
    %v2681 = vunpack.c.h.b16 %v2528
    %v2682 = vunpack.c.l.b16 %v2529
    %v2683 = vunpack.c.h.b16 %v2529
    %v2684 = vunpack.c.l.b16 %v2530
    %v2685 = vunpack.c.h.b16 %v2530
    %v2686 = vunpack.c.l.b16 %v2531
    %v2687 = vunpack.c.h.b16 %v2531
    %v2688 = vunpack.c.l.b16 %v2532
    %v2689 = vunpack.c.h.b16 %v2532
    %v2690 = vunpack.c.l.b16 %v2533
    %v2691 = vunpack.c.h.b16 %v2533
    %v2692 = vunpack.c.l.b16 %v2534
    %v2693 = vunpack.c.h.b16 %v2534
    %v2694 = vunpack.c.l.b16 %v2535
    %v2695 = vunpack.c.h.b16 %v2535
    %v2696 = vunpack.c.l.b16 %v2536
    %v2697 = vunpack.c.h.b16 %v2536
    %v2698 = vunpack.c.l.b16 %v2537
    %v2699 = vunpack.c.h.b16 %v2537
    %v2700 = vunpack.c.l.b16 %v2538
    %v2701 = vunpack.c.h.b16 %v2538
    %v2702 = vunpack.c.l.b16 %v2539
    %v2703 = vunpack.c.h.b16 %v2539
    %v2704 = vunpack.c.l.b16 %v2540
    %v2705 = vunpack.c.h.b16 %v2540
    %v2706 = vunpack.c.l.b16 %v2541
    %v2707 = vunpack.c.h.b16 %v2541
    %v2708 = vunpack.c.l.b16 %v2542
    %v2709 = vunpack.c.h.b16 %v2542
    %v2710 = vunpack.c.l.b16 %v2543
    %v2711 = vunpack.c.h.b16 %v2543
    %v2712 = vunpack.c.l.b16 %v2544
    %v2713 = vunpack.c.h.b16 %v2544
    %v2714 = vunpack.c.l.b16 %v2545
    %v2715 = vunpack.c.h.b16 %v2545
    %v2716 = vunpack.c.l.b16 %v2546
    %v2717 = vunpack.c.h.b16 %v2546
    %v2718 = vunpack.c.l.b16 %v2547
    %v2719 = vunpack.c.h.b16 %v2547
    %v2720 = vunpack.c.l.b16 %v2548
    %v2721 = vunpack.c.h.b16 %v2548
    %v2722 = vunpack.c.l.b16 %v2549
    %v2723 = vunpack.c.h.b16 %v2549
    %v2724 = vunpack.c.l.b16 %v2550
    %v2725 = vunpack.c.h.b16 %v2550
    %v2726 = vunpack.c.l.b16 %v2551
    %v2727 = vunpack.c.h.b16 %v2551
    %v2728 = vunpack.c.l.b16 %v2552
    %v2729 = vunpack.c.h.b16 %v2552
    %v2730 = vunpack.c.l.b16 %v2553
    %v2731 = vunpack.c.h.b16 %v2553
    %v2732 = vunpack.c.l.b16 %v2554
    %v2733 = vunpack.c.h.b16 %v2554
    %v2734 = vunpack.c.l.b16 %v2555
    %v2735 = vunpack.c.h.b16 %v2555
    %v2736 = vunpack.c.l.b16 %v2556
    %v2737 = vunpack.c.h.b16 %v2556
    %v2738 = vunpack.c.l.b16 %v2557
    %v2739 = vunpack.c.h.b16 %v2557
    %v2740 = vunpack.c.l.b16 %v2558
    %v2741 = vunpack.c.h.b16 %v2558
    %v2742 = vunpack.c.l.b16 %v2559
    %v2743 = vunpack.c.h.b16 %v2559
    %v2744 = vunpack.c.l.b16 %v2560
    %v2745 = vunpack.c.h.b16 %v2560
    %v2746 = vunpack.c.l.b16 %v2561
    %v2747 = vunpack.c.h.b16 %v2561
    %v2748 = vunpack.c.l.b16 %v2562
    %v2749 = vunpack.c.h.b16 %v2562
    %v2750 = vunpack.c.l.b16 %v2563
    %v2751 = vunpack.c.h.b16 %v2563
    %v2752 = vunpack.c.l.b16 %v2564
    %v2753 = vunpack.c.h.b16 %v2564
    %v2754 = vunpack.c.l.b16 %v2565
    %v2755 = vunpack.c.h.b16 %v2565
    %v2756 = vunpack.c.l.b16 %v2566
    %v2757 = vunpack.c.h.b16 %v2566
    %v2758 = vunpack.c.l.b16 %v2567
    %v2759 = vunpack.c.h.b16 %v2567
    %v2760 = vunpack.c.l.b16 %v2568
    %v2761 = vunpack.c.h.b16 %v2568
    %v2762 = vunpack.c.l.b16 %v2569
    %v2763 = vunpack.c.h.b16 %v2569
    %v2764 = vunpack.c.l.b16 %v2570
    %v2765 = vunpack.c.h.b16 %v2570
    %v2766 = vunpack.c.l.b16 %v2571
    %v2767 = vunpack.c.h.b16 %v2571
    %v2768 = vunpack.c.l.b16 %v2572
    %v2769 = vunpack.c.h.b16 %v2572
    %v2770 = vunpack.c.l.b16 %v2573
    %v2771 = vunpack.c.h.b16 %v2573
    %v2772 = vunpack.c.l.b16 %v2574
    %v2773 = vunpack.c.h.b16 %v2574
    %v2774 = vunpack.c.l.b16 %v2575
    %v2775 = vunpack.c.h.b16 %v2575
    %v2776 = vunpack.c.l.b16 %v2576
    %v2777 = vunpack.c.h.b16 %v2576
    %v2778 = vunpack.c.l.b16 %v2577
    %v2779 = vunpack.c.h.b16 %v2577
    %v2780 = vunpack.c.l.b16 %v2578
    %v2781 = vunpack.c.h.b16 %v2578
    %v2782 = vunpack.c.l.b16 %v2579
    %v2783 = vunpack.c.h.b16 %v2579
    %v2784 = vunpack.c.l.b16 %v2580
    %v2785 = vunpack.c.h.b16 %v2580
    %v2786 = vunpack.c.l.b16 %v2581
    %v2787 = vunpack.c.h.b16 %v2581
    %v2788 = vunpack.c.l.b16 %v2582
    %v2789 = vunpack.c.h.b16 %v2582
    %v2790 = vunpack.c.l.b16 %v2583
    %v2791 = vunpack.c.h.b16 %v2583
    %v2792 = vunpack.c.l.b16 %v2584
    %v2793 = vunpack.c.h.b16 %v2584
    %v2794 = vunpack.c.l.b16 %v2585
    %v2795 = vunpack.c.h.b16 %v2585
    %v2796 = vunpack.c.l.b16 %v2586
    %v2797 = vunpack.c.h.b16 %v2586
    %v2798 = vunpack.c.l.b16 %v2587
    %v2799 = vunpack.c.h.b16 %v2587
    %v2800 = vpack.c.b16 %v2676, %v2672
    %v2801 = vpack.c.b16 %v2677, %v2673
    %v2802 = vpack.c.b16 %v2678, %v2674
    %v2803 = vpack.c.b16 %v2679, %v2675
    %v2804 = vpack.c.b16 %v2684, %v2680
    %v2805 = vpack.c.b16 %v2685, %v2681
    %v2806 = vpack.c.b16 %v2686, %v2682
    %v2807 = vpack.c.b16 %v2687, %v2683
    %v2808 = vpack.c.b16 %v2692, %v2688
    %v2809 = vpack.c.b16 %v2693, %v2689
    %v2810 = vpack.c.b16 %v2694, %v2690
    %v2811 = vpack.c.b16 %v2695, %v2691
    %v2812 = vpack.c.b16 %v2700, %v2696
    %v2813 = vpack.c.b16 %v2701, %v2697
    %v2814 = vpack.c.b16 %v2702, %v2698
    %v2815 = vpack.c.b16 %v2703, %v2699
    %v2816 = vpack.c.b16 %v2708, %v2704
    %v2817 = vpack.c.b16 %v2709, %v2705
    %v2818 = vpack.c.b16 %v2710, %v2706
    %v2819 = vpack.c.b16 %v2711, %v2707
    %v2820 = vpack.c.b16 %v2716, %v2712
    %v2821 = vpack.c.b16 %v2717, %v2713
    %v2822 = vpack.c.b16 %v2718, %v2714
    %v2823 = vpack.c.b16 %v2719, %v2715
    %v2824 = vpack.c.b16 %v2724, %v2720
    %v2825 = vpack.c.b16 %v2725, %v2721
    %v2826 = vpack.c.b16 %v2726, %v2722
    %v2827 = vpack.c.b16 %v2727, %v2723
    %v2828 = vpack.c.b16 %v2732, %v2728
    %v2829 = vpack.c.b16 %v2733, %v2729
    %v2830 = vpack.c.b16 %v2734, %v2730
    %v2831 = vpack.c.b16 %v2735, %v2731
    %v2832 = vpack.c.b16 %v2740, %v2736
    %v2833 = vpack.c.b16 %v2741, %v2737
    %v2834 = vpack.c.b16 %v2742, %v2738
    %v2835 = vpack.c.b16 %v2743, %v2739
    %v2836 = vpack.c.b16 %v2748, %v2744
    %v2837 = vpack.c.b16 %v2749, %v2745
    %v2838 = vpack.c.b16 %v2750, %v2746
    %v2839 = vpack.c.b16 %v2751, %v2747
    %v2840 = vpack.c.b16 %v2756, %v2752
    %v2841 = vpack.c.b16 %v2757, %v2753
    %v2842 = vpack.c.b16 %v2758, %v2754
    %v2843 = vpack.c.b16 %v2759, %v2755
    %v2844 = vpack.c.b16 %v2764, %v2760
    %v2845 = vpack.c.b16 %v2765, %v2761
    %v2846 = vpack.c.b16 %v2766, %v2762
    %v2847 = vpack.c.b16 %v2767, %v2763
    %v2848 = vpack.c.b16 %v2772, %v2768
    %v2849 = vpack.c.b16 %v2773, %v2769
    %v2850 = vpack.c.b16 %v2774, %v2770
    %v2851 = vpack.c.b16 %v2775, %v2771
    %v2852 = vpack.c.b16 %v2780, %v2776
    %v2853 = vpack.c.b16 %v2781, %v2777
    %v2854 = vpack.c.b16 %v2782, %v2778
    %v2855 = vpack.c.b16 %v2783, %v2779
    %v2856 = vpack.c.b16 %v2788, %v2784
    %v2857 = vpack.c.b16 %v2789, %v2785
    %v2858 = vpack.c.b16 %v2790, %v2786
    %v2859 = vpack.c.b16 %v2791, %v2787
    %v2860 = vpack.c.b16 %v2796, %v2792
    %v2861 = vpack.c.b16 %v2797, %v2793
    %v2862 = vpack.c.b16 %v2798, %v2794
    %v2863 = vpack.c.b16 %v2799, %v2795
    %2928 = vmatpush.bf16.msra.mxu0 %v2828
    %2929 = vmatpush.bf16.msra.mxu0 %v2824
    %2930 = vmatpush.bf16.msra.mxu0 %v2820
    %2931 = vmatpush.bf16.msra.mxu0 %v2816
    %2932 = vmatpush.bf16.msra.mxu0 %v2812
    %2933 = vmatpush.bf16.msra.mxu0 %v2808
    %2934 = vmatpush.bf16.msra.mxu0 %v2804
    %2935 = vmatpush.bf16.msra.mxu0 %v2800
    %2936 = vmatmul.bf16.gmra.mxu0 %v2600
    %v2937 = vpop.f32.mrf.mxu0
    %v2938 = vadd.f32 0.0, %v2937
    %v2939 = vpop.f32.mrf.mxu0
    %v2940 = vadd.f32 0.0, %v2939
    %2941 = vmatmul.bf16.gmra.mxu0 %v2602
    %v2942 = vpop.f32.mrf.mxu0
    %v2943 = vadd.f32 0.0, %v2942
    %v2944 = vpop.f32.mrf.mxu0
    %v2945 = vadd.f32 0.0, %v2944
    %2946 = vdwg.mxu0
    %2947 = vmatpush.bf16.msra.mxu0 %v2860
    %2948 = vmatpush.bf16.msra.mxu0 %v2856
    %2949 = vmatpush.bf16.msra.mxu0 %v2852
    %2950 = vmatpush.bf16.msra.mxu0 %v2848
    %2951 = vmatpush.bf16.msra.mxu0 %v2844
    %2952 = vmatpush.bf16.msra.mxu0 %v2840
    %2953 = vmatpush.bf16.msra.mxu0 %v2836
    %2954 = vmatpush.bf16.msra.mxu0 %v2832
    %2955 = vmatmul.bf16.gmra.mxu0 %v2601
    %v2956 = vpop.f32.mrf.mxu0
    %v2957 = vadd.f32 %v2938, %v2956
    %v2958 = vpop.f32.mrf.mxu0
    %v2959 = vadd.f32 %v2940, %v2958
    %2960 = vmatmul.bf16.gmra.mxu0 %v2603
    %v2961 = vpop.f32.mrf.mxu0
    %v2962 = vadd.f32 %v2943, %v2961
    %v2963 = vpop.f32.mrf.mxu0
    %v2964 = vadd.f32 %v2945, %v2963
    %2965 = vdwg.mxu0
    %2966 = vmatpush.bf16.msra.mxu0 %v2829
    %2967 = vmatpush.bf16.msra.mxu0 %v2825
    %2968 = vmatpush.bf16.msra.mxu0 %v2821
    %2969 = vmatpush.bf16.msra.mxu0 %v2817
    %2970 = vmatpush.bf16.msra.mxu0 %v2813
    %2971 = vmatpush.bf16.msra.mxu0 %v2809
    %2972 = vmatpush.bf16.msra.mxu0 %v2805
    %2973 = vmatpush.bf16.msra.mxu0 %v2801
    %2974 = vmatmul.bf16.gmra.mxu0 %v2600
    %v2975 = vpop.f32.mrf.mxu0
    %v2976 = vadd.f32 0.0, %v2975
    %v2977 = vpop.f32.mrf.mxu0
    %v2978 = vadd.f32 0.0, %v2977
    %2979 = vmatmul.bf16.gmra.mxu0 %v2602
    %v2980 = vpop.f32.mrf.mxu0
    %v2981 = vadd.f32 0.0, %v2980
    %v2982 = vpop.f32.mrf.mxu0
    %v2983 = vadd.f32 0.0, %v2982
    %2984 = vdwg.mxu0
    %2985 = vmatpush.bf16.msra.mxu0 %v2861
    %2986 = vmatpush.bf16.msra.mxu0 %v2857
    %2987 = vmatpush.bf16.msra.mxu0 %v2853
    %2988 = vmatpush.bf16.msra.mxu0 %v2849
    %2989 = vmatpush.bf16.msra.mxu0 %v2845
    %2990 = vmatpush.bf16.msra.mxu0 %v2841
    %2991 = vmatpush.bf16.msra.mxu0 %v2837
    %2992 = vmatpush.bf16.msra.mxu0 %v2833
    %2993 = vmatmul.bf16.gmra.mxu0 %v2601
    %v2994 = vpop.f32.mrf.mxu0
    %v2995 = vadd.f32 %v2976, %v2994
    %v2996 = vpop.f32.mrf.mxu0
    %v2997 = vadd.f32 %v2978, %v2996
    %2998 = vmatmul.bf16.gmra.mxu0 %v2603
    %v2999 = vpop.f32.mrf.mxu0
    %v3000 = vadd.f32 %v2981, %v2999
    %v3001 = vpop.f32.mrf.mxu0
    %v3002 = vadd.f32 %v2983, %v3001
    %3003 = vdwg.mxu0
    %3004 = vmatpush.bf16.msra.mxu0 %v2830
    %3005 = vmatpush.bf16.msra.mxu0 %v2826
    %3006 = vmatpush.bf16.msra.mxu0 %v2822
    %3007 = vmatpush.bf16.msra.mxu0 %v2818
    %3008 = vmatpush.bf16.msra.mxu0 %v2814
    %3009 = vmatpush.bf16.msra.mxu0 %v2810
    %3010 = vmatpush.bf16.msra.mxu0 %v2806
    %3011 = vmatpush.bf16.msra.mxu0 %v2802
    %3012 = vmatmul.bf16.gmra.mxu0 %v2600
    %v3013 = vpop.f32.mrf.mxu0
    %v3014 = vadd.f32 0.0, %v3013
    %v3015 = vpop.f32.mrf.mxu0
    %v3016 = vadd.f32 0.0, %v3015
    %3017 = vmatmul.bf16.gmra.mxu0 %v2602
    %v3018 = vpop.f32.mrf.mxu0
    %v3019 = vadd.f32 0.0, %v3018
    %v3020 = vpop.f32.mrf.mxu0
    %v3021 = vadd.f32 0.0, %v3020
    %3022 = vdwg.mxu0
    %3023 = vmatpush.bf16.msra.mxu0 %v2862
    %3024 = vmatpush.bf16.msra.mxu0 %v2858
    %3025 = vmatpush.bf16.msra.mxu0 %v2854
    %3026 = vmatpush.bf16.msra.mxu0 %v2850
    %3027 = vmatpush.bf16.msra.mxu0 %v2846
    %3028 = vmatpush.bf16.msra.mxu0 %v2842
    %3029 = vmatpush.bf16.msra.mxu0 %v2838
    %3030 = vmatpush.bf16.msra.mxu0 %v2834
    %3031 = vmatmul.bf16.gmra.mxu0 %v2601
    %v3032 = vpop.f32.mrf.mxu0
    %v3033 = vadd.f32 %v3014, %v3032
    %v3034 = vpop.f32.mrf.mxu0
    %v3035 = vadd.f32 %v3016, %v3034
    %3036 = vmatmul.bf16.gmra.mxu0 %v2603
    %v3037 = vpop.f32.mrf.mxu0
    %v3038 = vadd.f32 %v3019, %v3037
    %v3039 = vpop.f32.mrf.mxu0
    %v3040 = vadd.f32 %v3021, %v3039
    %3041 = vdwg.mxu0
    %3042 = vmatpush.bf16.msra.mxu0 %v2831
    %3043 = vmatpush.bf16.msra.mxu0 %v2827
    %3044 = vmatpush.bf16.msra.mxu0 %v2823
    %3045 = vmatpush.bf16.msra.mxu0 %v2819
    %3046 = vmatpush.bf16.msra.mxu0 %v2815
    %3047 = vmatpush.bf16.msra.mxu0 %v2811
    %3048 = vmatpush.bf16.msra.mxu0 %v2807
    %3049 = vmatpush.bf16.msra.mxu0 %v2803
    %3050 = vmatmul.bf16.gmra.mxu0 %v2600
    %v3051 = vpop.f32.mrf.mxu0
    %v3052 = vadd.f32 0.0, %v3051
    %v3053 = vpop.f32.mrf.mxu0
    %v3054 = vadd.f32 0.0, %v3053
    %3055 = vmatmul.bf16.gmra.mxu0 %v2602
    %v3056 = vpop.f32.mrf.mxu0
    %v3057 = vadd.f32 0.0, %v3056
    %v3058 = vpop.f32.mrf.mxu0
    %v3059 = vadd.f32 0.0, %v3058
    %3060 = vdwg.mxu0
    %3061 = vmatpush.bf16.msra.mxu0 %v2863
    %3062 = vmatpush.bf16.msra.mxu0 %v2859
    %3063 = vmatpush.bf16.msra.mxu0 %v2855
    %3064 = vmatpush.bf16.msra.mxu0 %v2851
    %3065 = vmatpush.bf16.msra.mxu0 %v2847
    %3066 = vmatpush.bf16.msra.mxu0 %v2843
    %3067 = vmatpush.bf16.msra.mxu0 %v2839
    %3068 = vmatpush.bf16.msra.mxu0 %v2835
    %3069 = vmatmul.bf16.gmra.mxu0 %v2601
    %v3070 = vpop.f32.mrf.mxu0
    %v3071 = vadd.f32 %v3052, %v3070
    %v3072 = vpop.f32.mrf.mxu0
    %v3073 = vadd.f32 %v3054, %v3072
    %3074 = vmatmul.bf16.gmra.mxu0 %v2603
    %v3075 = vpop.f32.mrf.mxu0
    %v3076 = vadd.f32 %v3057, %v3075
    %v3077 = vpop.f32.mrf.mxu0
    %v3078 = vadd.f32 %v3059, %v3077
    %3079 = vdwg.mxu0
    %3080 = vst [vmem:[#allocation7] sm:$0xff] %v2957
    %3081 = vst [vmem:[#allocation7 + $0x8] sm:$0xff] %v2995
    %3082 = vst [vmem:[#allocation7 + $0x10] sm:$0xff] %v3033
    %3083 = vst [vmem:[#allocation7 + $0x18] sm:$0xff] %v3071
    %3084 = vst [vmem:[#allocation7 + $0x20] sm:$0xff] %v2959
    %3085 = vst [vmem:[#allocation7 + $0x28] sm:$0xff] %v2997
    %3086 = vst [vmem:[#allocation7 + $0x30] sm:$0xff] %v3035
    %3087 = vst [vmem:[#allocation7 + $0x38] sm:$0xff] %v3073
    %3088 = vst [vmem:[#allocation7 + $0x40] sm:$0xff] %v2962
    %3089 = vst [vmem:[#allocation7 + $0x48] sm:$0xff] %v3000
    %3090 = vst [vmem:[#allocation7 + $0x50] sm:$0xff] %v3038
    %3091 = vst [vmem:[#allocation7 + $0x58] sm:$0xff] %v3076
    %3092 = vst [vmem:[#allocation7 + $0x60] sm:$0xff] %v2964
    %3093 = vst [vmem:[#allocation7 + $0x68] sm:$0xff] %v3002
    %3094 = vst [vmem:[#allocation7 + $0x70] sm:$0xff] %v3040
    %3095 = vst [vmem:[#allocation7 + $0x78] sm:$0xff] %v3078
    %v3096 = vld [vmem:[#allocation3 + $0x8] sm:$0xff]
    %v3097 = vld [vmem:[#allocation3 + $0x10] sm:$0xff]
    %v3098 = vld [vmem:[#allocation3 + $0x18] sm:$0xff]
    %v3099 = vld [vmem:[#allocation3 + $0x20] sm:$0xff]
    %s3100 = scalar_lea.vmem [#allocation10], 512
    %v3101 = vld [vmem:[%s3100] sm:$0xff]
    %v3102 = vld [vmem:[%s3100 + $0x8] sm:$0xff]
    %v3103 = vld [vmem:[%s3100 + $0x10] sm:$0xff]
    %v3104 = vld [vmem:[%s3100 + $0x18] sm:$0xff]
    %v3105 = vld [vmem:[%s3100 + $0x20] sm:$0xff]
    %v3106 = vld [vmem:[%s3100 + $0x28] sm:$0xff]
    %v3107 = vld [vmem:[%s3100 + $0x30] sm:$0xff]
    %v3108 = vld [vmem:[%s3100 + $0x38] sm:$0xff]
    %v3109 = vld [vmem:[%s3100 + $0x40] sm:$0xff]
    %v3110 = vld [vmem:[%s3100 + $0x48] sm:$0xff]
    %v3111 = vld [vmem:[%s3100 + $0x50] sm:$0xff]
    %v3112 = vld [vmem:[%s3100 + $0x58] sm:$0xff]
    %v3113 = vld [vmem:[%s3100 + $0x60] sm:$0xff]
    %v3114 = vld [vmem:[%s3100 + $0x68] sm:$0xff]
    %v3115 = vld [vmem:[%s3100 + $0x70] sm:$0xff]
    %v3116 = vld [vmem:[%s3100 + $0x78] sm:$0xff]
    %v3117 = vld [vmem:[%s3100 + $0x80] sm:$0xff]
    %v3118 = vld [vmem:[%s3100 + $0x88] sm:$0xff]
    %v3119 = vld [vmem:[%s3100 + $0x90] sm:$0xff]
    %v3120 = vld [vmem:[%s3100 + $0x98] sm:$0xff]
    %v3121 = vld [vmem:[%s3100 + $0xa0] sm:$0xff]
    %v3122 = vld [vmem:[%s3100 + $0xa8] sm:$0xff]
    %v3123 = vld [vmem:[%s3100 + $0xb0] sm:$0xff]
    %v3124 = vld [vmem:[%s3100 + $0xb8] sm:$0xff]
    %v3125 = vld [vmem:[%s3100 + $0xc0] sm:$0xff]
    %v3126 = vld [vmem:[%s3100 + $0xc8] sm:$0xff]
    %v3127 = vld [vmem:[%s3100 + $0xd0] sm:$0xff]
    %v3128 = vld [vmem:[%s3100 + $0xd8] sm:$0xff]
    %v3129 = vld [vmem:[%s3100 + $0xe0] sm:$0xff]
    %v3130 = vld [vmem:[%s3100 + $0xe8] sm:$0xff]
    %v3131 = vld [vmem:[%s3100 + $0xf0] sm:$0xff]
    %v3132 = vld [vmem:[%s3100 + $0xf8] sm:$0xff]
    %v3133 = vld [vmem:[%s3100 + $0x100] sm:$0xff]
    %v3134 = vld [vmem:[%s3100 + $0x108] sm:$0xff]
    %v3135 = vld [vmem:[%s3100 + $0x110] sm:$0xff]
    %v3136 = vld [vmem:[%s3100 + $0x118] sm:$0xff]
    %v3137 = vld [vmem:[%s3100 + $0x120] sm:$0xff]
    %v3138 = vld [vmem:[%s3100 + $0x128] sm:$0xff]
    %v3139 = vld [vmem:[%s3100 + $0x130] sm:$0xff]
    %v3140 = vld [vmem:[%s3100 + $0x138] sm:$0xff]
    %v3141 = vld [vmem:[%s3100 + $0x140] sm:$0xff]
    %v3142 = vld [vmem:[%s3100 + $0x148] sm:$0xff]
    %v3143 = vld [vmem:[%s3100 + $0x150] sm:$0xff]
    %v3144 = vld [vmem:[%s3100 + $0x158] sm:$0xff]
    %v3145 = vld [vmem:[%s3100 + $0x160] sm:$0xff]
    %v3146 = vld [vmem:[%s3100 + $0x168] sm:$0xff]
    %v3147 = vld [vmem:[%s3100 + $0x170] sm:$0xff]
    %v3148 = vld [vmem:[%s3100 + $0x178] sm:$0xff]
    %v3149 = vld [vmem:[%s3100 + $0x180] sm:$0xff]
    %v3150 = vld [vmem:[%s3100 + $0x188] sm:$0xff]
    %v3151 = vld [vmem:[%s3100 + $0x190] sm:$0xff]
    %v3152 = vld [vmem:[%s3100 + $0x198] sm:$0xff]
    %v3153 = vld [vmem:[%s3100 + $0x1a0] sm:$0xff]
    %v3154 = vld [vmem:[%s3100 + $0x1a8] sm:$0xff]
    %v3155 = vld [vmem:[%s3100 + $0x1b0] sm:$0xff]
    %v3156 = vld [vmem:[%s3100 + $0x1b8] sm:$0xff]
    %v3157 = vld [vmem:[%s3100 + $0x1c0] sm:$0xff]
    %v3158 = vld [vmem:[%s3100 + $0x1c8] sm:$0xff]
    %v3159 = vld [vmem:[%s3100 + $0x1d0] sm:$0xff]
    %v3160 = vld [vmem:[%s3100 + $0x1d8] sm:$0xff]
    %v3161 = vld [vmem:[%s3100 + $0x1e0] sm:$0xff]
    %v3162 = vld [vmem:[%s3100 + $0x1e8] sm:$0xff]
    %v3163 = vld [vmem:[%s3100 + $0x1f0] sm:$0xff]
    %v3164 = vld [vmem:[%s3100 + $0x1f8] sm:$0xff]
    %v3169 = vunpack.c.l.b16 %v3096
    %v3170 = vunpack.c.h.b16 %v3096
    %v3171 = vunpack.c.l.b16 %v3097
    %v3172 = vunpack.c.h.b16 %v3097
    %v3173 = vunpack.c.l.b16 %v3098
    %v3174 = vunpack.c.h.b16 %v3098
    %v3175 = vunpack.c.l.b16 %v3099
    %v3176 = vunpack.c.h.b16 %v3099
    %v3177 = vpack.c.b16 %v3171, %v3169
    %v3178 = vpack.c.b16 %v3172, %v3170
    %v3179 = vpack.c.b16 %v3175, %v3173
    %v3180 = vpack.c.b16 %v3176, %v3174
    %v3249 = vunpack.c.l.b16 %v3101
    %v3250 = vunpack.c.h.b16 %v3101
    %v3251 = vunpack.c.l.b16 %v3102
    %v3252 = vunpack.c.h.b16 %v3102
    %v3253 = vunpack.c.l.b16 %v3103
    %v3254 = vunpack.c.h.b16 %v3103
    %v3255 = vunpack.c.l.b16 %v3104
    %v3256 = vunpack.c.h.b16 %v3104
    %v3257 = vunpack.c.l.b16 %v3105
    %v3258 = vunpack.c.h.b16 %v3105
    %v3259 = vunpack.c.l.b16 %v3106
    %v3260 = vunpack.c.h.b16 %v3106
    %v3261 = vunpack.c.l.b16 %v3107
    %v3262 = vunpack.c.h.b16 %v3107
    %v3263 = vunpack.c.l.b16 %v3108
    %v3264 = vunpack.c.h.b16 %v3108
    %v3265 = vunpack.c.l.b16 %v3109
    %v3266 = vunpack.c.h.b16 %v3109
    %v3267 = vunpack.c.l.b16 %v3110
    %v3268 = vunpack.c.h.b16 %v3110
    %v3269 = vunpack.c.l.b16 %v3111
    %v3270 = vunpack.c.h.b16 %v3111
    %v3271 = vunpack.c.l.b16 %v3112
    %v3272 = vunpack.c.h.b16 %v3112
    %v3273 = vunpack.c.l.b16 %v3113
    %v3274 = vunpack.c.h.b16 %v3113
    %v3275 = vunpack.c.l.b16 %v3114
    %v3276 = vunpack.c.h.b16 %v3114
    %v3277 = vunpack.c.l.b16 %v3115
    %v3278 = vunpack.c.h.b16 %v3115
    %v3279 = vunpack.c.l.b16 %v3116
    %v3280 = vunpack.c.h.b16 %v3116
    %v3281 = vunpack.c.l.b16 %v3117
    %v3282 = vunpack.c.h.b16 %v3117
    %v3283 = vunpack.c.l.b16 %v3118
    %v3284 = vunpack.c.h.b16 %v3118
    %v3285 = vunpack.c.l.b16 %v3119
    %v3286 = vunpack.c.h.b16 %v3119
    %v3287 = vunpack.c.l.b16 %v3120
    %v3288 = vunpack.c.h.b16 %v3120
    %v3289 = vunpack.c.l.b16 %v3121
    %v3290 = vunpack.c.h.b16 %v3121
    %v3291 = vunpack.c.l.b16 %v3122
    %v3292 = vunpack.c.h.b16 %v3122
    %v3293 = vunpack.c.l.b16 %v3123
    %v3294 = vunpack.c.h.b16 %v3123
    %v3295 = vunpack.c.l.b16 %v3124
    %v3296 = vunpack.c.h.b16 %v3124
    %v3297 = vunpack.c.l.b16 %v3125
    %v3298 = vunpack.c.h.b16 %v3125
    %v3299 = vunpack.c.l.b16 %v3126
    %v3300 = vunpack.c.h.b16 %v3126
    %v3301 = vunpack.c.l.b16 %v3127
    %v3302 = vunpack.c.h.b16 %v3127
    %v3303 = vunpack.c.l.b16 %v3128
    %v3304 = vunpack.c.h.b16 %v3128
    %v3305 = vunpack.c.l.b16 %v3129
    %v3306 = vunpack.c.h.b16 %v3129
    %v3307 = vunpack.c.l.b16 %v3130
    %v3308 = vunpack.c.h.b16 %v3130
    %v3309 = vunpack.c.l.b16 %v3131
    %v3310 = vunpack.c.h.b16 %v3131
    %v3311 = vunpack.c.l.b16 %v3132
    %v3312 = vunpack.c.h.b16 %v3132
    %v3313 = vunpack.c.l.b16 %v3133
    %v3314 = vunpack.c.h.b16 %v3133
    %v3315 = vunpack.c.l.b16 %v3134
    %v3316 = vunpack.c.h.b16 %v3134
    %v3317 = vunpack.c.l.b16 %v3135
    %v3318 = vunpack.c.h.b16 %v3135
    %v3319 = vunpack.c.l.b16 %v3136
    %v3320 = vunpack.c.h.b16 %v3136
    %v3321 = vunpack.c.l.b16 %v3137
    %v3322 = vunpack.c.h.b16 %v3137
    %v3323 = vunpack.c.l.b16 %v3138
    %v3324 = vunpack.c.h.b16 %v3138
    %v3325 = vunpack.c.l.b16 %v3139
    %v3326 = vunpack.c.h.b16 %v3139
    %v3327 = vunpack.c.l.b16 %v3140
    %v3328 = vunpack.c.h.b16 %v3140
    %v3329 = vunpack.c.l.b16 %v3141
    %v3330 = vunpack.c.h.b16 %v3141
    %v3331 = vunpack.c.l.b16 %v3142
    %v3332 = vunpack.c.h.b16 %v3142
    %v3333 = vunpack.c.l.b16 %v3143
    %v3334 = vunpack.c.h.b16 %v3143
    %v3335 = vunpack.c.l.b16 %v3144
    %v3336 = vunpack.c.h.b16 %v3144
    %v3337 = vunpack.c.l.b16 %v3145
    %v3338 = vunpack.c.h.b16 %v3145
    %v3339 = vunpack.c.l.b16 %v3146
    %v3340 = vunpack.c.h.b16 %v3146
    %v3341 = vunpack.c.l.b16 %v3147
    %v3342 = vunpack.c.h.b16 %v3147
    %v3343 = vunpack.c.l.b16 %v3148
    %v3344 = vunpack.c.h.b16 %v3148
    %v3345 = vunpack.c.l.b16 %v3149
    %v3346 = vunpack.c.h.b16 %v3149
    %v3347 = vunpack.c.l.b16 %v3150
    %v3348 = vunpack.c.h.b16 %v3150
    %v3349 = vunpack.c.l.b16 %v3151
    %v3350 = vunpack.c.h.b16 %v3151
    %v3351 = vunpack.c.l.b16 %v3152
    %v3352 = vunpack.c.h.b16 %v3152
    %v3353 = vunpack.c.l.b16 %v3153
    %v3354 = vunpack.c.h.b16 %v3153
    %v3355 = vunpack.c.l.b16 %v3154
    %v3356 = vunpack.c.h.b16 %v3154
    %v3357 = vunpack.c.l.b16 %v3155
    %v3358 = vunpack.c.h.b16 %v3155
    %v3359 = vunpack.c.l.b16 %v3156
    %v3360 = vunpack.c.h.b16 %v3156
    %v3361 = vunpack.c.l.b16 %v3157
    %v3362 = vunpack.c.h.b16 %v3157
    %v3363 = vunpack.c.l.b16 %v3158
    %v3364 = vunpack.c.h.b16 %v3158
    %v3365 = vunpack.c.l.b16 %v3159
    %v3366 = vunpack.c.h.b16 %v3159
    %v3367 = vunpack.c.l.b16 %v3160
    %v3368 = vunpack.c.h.b16 %v3160
    %v3369 = vunpack.c.l.b16 %v3161
    %v3370 = vunpack.c.h.b16 %v3161
    %v3371 = vunpack.c.l.b16 %v3162
    %v3372 = vunpack.c.h.b16 %v3162
    %v3373 = vunpack.c.l.b16 %v3163
    %v3374 = vunpack.c.h.b16 %v3163
    %v3375 = vunpack.c.l.b16 %v3164
    %v3376 = vunpack.c.h.b16 %v3164
    %v3377 = vpack.c.b16 %v3253, %v3249
    %v3378 = vpack.c.b16 %v3254, %v3250
    %v3379 = vpack.c.b16 %v3255, %v3251
    %v3380 = vpack.c.b16 %v3256, %v3252
    %v3381 = vpack.c.b16 %v3261, %v3257
    %v3382 = vpack.c.b16 %v3262, %v3258
    %v3383 = vpack.c.b16 %v3263, %v3259
    %v3384 = vpack.c.b16 %v3264, %v3260
    %v3385 = vpack.c.b16 %v3269, %v3265
    %v3386 = vpack.c.b16 %v3270, %v3266
    %v3387 = vpack.c.b16 %v3271, %v3267
    %v3388 = vpack.c.b16 %v3272, %v3268
    %v3389 = vpack.c.b16 %v3277, %v3273
    %v3390 = vpack.c.b16 %v3278, %v3274
    %v3391 = vpack.c.b16 %v3279, %v3275
    %v3392 = vpack.c.b16 %v3280, %v3276
    %v3393 = vpack.c.b16 %v3285, %v3281
    %v3394 = vpack.c.b16 %v3286, %v3282
    %v3395 = vpack.c.b16 %v3287, %v3283
    %v3396 = vpack.c.b16 %v3288, %v3284
    %v3397 = vpack.c.b16 %v3293, %v3289
    %v3398 = vpack.c.b16 %v3294, %v3290
    %v3399 = vpack.c.b16 %v3295, %v3291
    %v3400 = vpack.c.b16 %v3296, %v3292
    %v3401 = vpack.c.b16 %v3301, %v3297
    %v3402 = vpack.c.b16 %v3302, %v3298
    %v3403 = vpack.c.b16 %v3303, %v3299
    %v3404 = vpack.c.b16 %v3304, %v3300
    %v3405 = vpack.c.b16 %v3309, %v3305
    %v3406 = vpack.c.b16 %v3310, %v3306
    %v3407 = vpack.c.b16 %v3311, %v3307
    %v3408 = vpack.c.b16 %v3312, %v3308
    %v3409 = vpack.c.b16 %v3317, %v3313
    %v3410 = vpack.c.b16 %v3318, %v3314
    %v3411 = vpack.c.b16 %v3319, %v3315
    %v3412 = vpack.c.b16 %v3320, %v3316
    %v3413 = vpack.c.b16 %v3325, %v3321
    %v3414 = vpack.c.b16 %v3326, %v3322
    %v3415 = vpack.c.b16 %v3327, %v3323
    %v3416 = vpack.c.b16 %v3328, %v3324
    %v3417 = vpack.c.b16 %v3333, %v3329
    %v3418 = vpack.c.b16 %v3334, %v3330
    %v3419 = vpack.c.b16 %v3335, %v3331
    %v3420 = vpack.c.b16 %v3336, %v3332
    %v3421 = vpack.c.b16 %v3341, %v3337
    %v3422 = vpack.c.b16 %v3342, %v3338
    %v3423 = vpack.c.b16 %v3343, %v3339
    %v3424 = vpack.c.b16 %v3344, %v3340
    %v3425 = vpack.c.b16 %v3349, %v3345
    %v3426 = vpack.c.b16 %v3350, %v3346
    %v3427 = vpack.c.b16 %v3351, %v3347
    %v3428 = vpack.c.b16 %v3352, %v3348
    %v3429 = vpack.c.b16 %v3357, %v3353
    %v3430 = vpack.c.b16 %v3358, %v3354
    %v3431 = vpack.c.b16 %v3359, %v3355
    %v3432 = vpack.c.b16 %v3360, %v3356
    %v3433 = vpack.c.b16 %v3365, %v3361
    %v3434 = vpack.c.b16 %v3366, %v3362
    %v3435 = vpack.c.b16 %v3367, %v3363
    %v3436 = vpack.c.b16 %v3368, %v3364
    %v3437 = vpack.c.b16 %v3373, %v3369
    %v3438 = vpack.c.b16 %v3374, %v3370
    %v3439 = vpack.c.b16 %v3375, %v3371
    %v3440 = vpack.c.b16 %v3376, %v3372
    %3505 = vmatpush.bf16.msra.mxu0 %v3405
    %3506 = vmatpush.bf16.msra.mxu0 %v3401
    %3507 = vmatpush.bf16.msra.mxu0 %v3397
    %3508 = vmatpush.bf16.msra.mxu0 %v3393
    %3509 = vmatpush.bf16.msra.mxu0 %v3389
    %3510 = vmatpush.bf16.msra.mxu0 %v3385
    %3511 = vmatpush.bf16.msra.mxu0 %v3381
    %3512 = vmatpush.bf16.msra.mxu0 %v3377
    %3513 = vmatmul.bf16.gmra.mxu0 %v3177
    %v3514 = vpop.f32.mrf.mxu0
    %v3515 = vadd.f32 0.0, %v3514
    %v3516 = vpop.f32.mrf.mxu0
    %v3517 = vadd.f32 0.0, %v3516
    %3518 = vmatmul.bf16.gmra.mxu0 %v3179
    %v3519 = vpop.f32.mrf.mxu0
    %v3520 = vadd.f32 0.0, %v3519
    %v3521 = vpop.f32.mrf.mxu0
    %v3522 = vadd.f32 0.0, %v3521
    %3523 = vdwg.mxu0
    %3524 = vmatpush.bf16.msra.mxu0 %v3437
    %3525 = vmatpush.bf16.msra.mxu0 %v3433
    %3526 = vmatpush.bf16.msra.mxu0 %v3429
    %3527 = vmatpush.bf16.msra.mxu0 %v3425
    %3528 = vmatpush.bf16.msra.mxu0 %v3421
    %3529 = vmatpush.bf16.msra.mxu0 %v3417
    %3530 = vmatpush.bf16.msra.mxu0 %v3413
    %3531 = vmatpush.bf16.msra.mxu0 %v3409
    %3532 = vmatmul.bf16.gmra.mxu0 %v3178
    %v3533 = vpop.f32.mrf.mxu0
    %v3534 = vadd.f32 %v3515, %v3533
    %v3535 = vpop.f32.mrf.mxu0
    %v3536 = vadd.f32 %v3517, %v3535
    %3537 = vmatmul.bf16.gmra.mxu0 %v3180
    %v3538 = vpop.f32.mrf.mxu0
    %v3539 = vadd.f32 %v3520, %v3538
    %v3540 = vpop.f32.mrf.mxu0
    %v3541 = vadd.f32 %v3522, %v3540
    %3542 = vdwg.mxu0
    %3543 = vmatpush.bf16.msra.mxu0 %v3406
    %3544 = vmatpush.bf16.msra.mxu0 %v3402
    %3545 = vmatpush.bf16.msra.mxu0 %v3398
    %3546 = vmatpush.bf16.msra.mxu0 %v3394
    %3547 = vmatpush.bf16.msra.mxu0 %v3390
    %3548 = vmatpush.bf16.msra.mxu0 %v3386
    %3549 = vmatpush.bf16.msra.mxu0 %v3382
    %3550 = vmatpush.bf16.msra.mxu0 %v3378
    %3551 = vmatmul.bf16.gmra.mxu0 %v3177
    %v3552 = vpop.f32.mrf.mxu0
    %v3553 = vadd.f32 0.0, %v3552
    %v3554 = vpop.f32.mrf.mxu0
    %v3555 = vadd.f32 0.0, %v3554
    %3556 = vmatmul.bf16.gmra.mxu0 %v3179
    %v3557 = vpop.f32.mrf.mxu0
    %v3558 = vadd.f32 0.0, %v3557
    %v3559 = vpop.f32.mrf.mxu0
    %v3560 = vadd.f32 0.0, %v3559
    %3561 = vdwg.mxu0
    %3562 = vmatpush.bf16.msra.mxu0 %v3438
    %3563 = vmatpush.bf16.msra.mxu0 %v3434
    %3564 = vmatpush.bf16.msra.mxu0 %v3430
    %3565 = vmatpush.bf16.msra.mxu0 %v3426
    %3566 = vmatpush.bf16.msra.mxu0 %v3422
    %3567 = vmatpush.bf16.msra.mxu0 %v3418
    %3568 = vmatpush.bf16.msra.mxu0 %v3414
    %3569 = vmatpush.bf16.msra.mxu0 %v3410
    %3570 = vmatmul.bf16.gmra.mxu0 %v3178
    %v3571 = vpop.f32.mrf.mxu0
    %v3572 = vadd.f32 %v3553, %v3571
    %v3573 = vpop.f32.mrf.mxu0
    %v3574 = vadd.f32 %v3555, %v3573
    %3575 = vmatmul.bf16.gmra.mxu0 %v3180
    %v3576 = vpop.f32.mrf.mxu0
    %v3577 = vadd.f32 %v3558, %v3576
    %v3578 = vpop.f32.mrf.mxu0
    %v3579 = vadd.f32 %v3560, %v3578
    %3580 = vdwg.mxu0
    %3581 = vmatpush.bf16.msra.mxu0 %v3407
    %3582 = vmatpush.bf16.msra.mxu0 %v3403
    %3583 = vmatpush.bf16.msra.mxu0 %v3399
    %3584 = vmatpush.bf16.msra.mxu0 %v3395
    %3585 = vmatpush.bf16.msra.mxu0 %v3391
    %3586 = vmatpush.bf16.msra.mxu0 %v3387
    %3587 = vmatpush.bf16.msra.mxu0 %v3383
    %3588 = vmatpush.bf16.msra.mxu0 %v3379
    %3589 = vmatmul.bf16.gmra.mxu0 %v3177
    %v3590 = vpop.f32.mrf.mxu0
    %v3591 = vadd.f32 0.0, %v3590
    %v3592 = vpop.f32.mrf.mxu0
    %v3593 = vadd.f32 0.0, %v3592
    %3594 = vmatmul.bf16.gmra.mxu0 %v3179
    %v3595 = vpop.f32.mrf.mxu0
    %v3596 = vadd.f32 0.0, %v3595
    %v3597 = vpop.f32.mrf.mxu0
    %v3598 = vadd.f32 0.0, %v3597
    %3599 = vdwg.mxu0
    %3600 = vmatpush.bf16.msra.mxu0 %v3439
    %3601 = vmatpush.bf16.msra.mxu0 %v3435
    %3602 = vmatpush.bf16.msra.mxu0 %v3431
    %3603 = vmatpush.bf16.msra.mxu0 %v3427
    %3604 = vmatpush.bf16.msra.mxu0 %v3423
    %3605 = vmatpush.bf16.msra.mxu0 %v3419
    %3606 = vmatpush.bf16.msra.mxu0 %v3415
    %3607 = vmatpush.bf16.msra.mxu0 %v3411
    %3608 = vmatmul.bf16.gmra.mxu0 %v3178
    %v3609 = vpop.f32.mrf.mxu0
    %v3610 = vadd.f32 %v3591, %v3609
    %v3611 = vpop.f32.mrf.mxu0
    %v3612 = vadd.f32 %v3593, %v3611
    %3613 = vmatmul.bf16.gmra.mxu0 %v3180
    %v3614 = vpop.f32.mrf.mxu0
    %v3615 = vadd.f32 %v3596, %v3614
    %v3616 = vpop.f32.mrf.mxu0
    %v3617 = vadd.f32 %v3598, %v3616
    %3618 = vdwg.mxu0
    %3619 = vmatpush.bf16.msra.mxu0 %v3408
    %3620 = vmatpush.bf16.msra.mxu0 %v3404
    %3621 = vmatpush.bf16.msra.mxu0 %v3400
    %3622 = vmatpush.bf16.msra.mxu0 %v3396
    %3623 = vmatpush.bf16.msra.mxu0 %v3392
    %3624 = vmatpush.bf16.msra.mxu0 %v3388
    %3625 = vmatpush.bf16.msra.mxu0 %v3384
    %3626 = vmatpush.bf16.msra.mxu0 %v3380
    %3627 = vmatmul.bf16.gmra.mxu0 %v3177
    %v3628 = vpop.f32.mrf.mxu0
    %v3629 = vadd.f32 0.0, %v3628
    %v3630 = vpop.f32.mrf.mxu0
    %v3631 = vadd.f32 0.0, %v3630
    %3632 = vmatmul.bf16.gmra.mxu0 %v3179
    %v3633 = vpop.f32.mrf.mxu0
    %v3634 = vadd.f32 0.0, %v3633
    %v3635 = vpop.f32.mrf.mxu0
    %v3636 = vadd.f32 0.0, %v3635
    %3637 = vdwg.mxu0
    %3638 = vmatpush.bf16.msra.mxu0 %v3440
    %3639 = vmatpush.bf16.msra.mxu0 %v3436
    %3640 = vmatpush.bf16.msra.mxu0 %v3432
    %3641 = vmatpush.bf16.msra.mxu0 %v3428
    %3642 = vmatpush.bf16.msra.mxu0 %v3424
    %3643 = vmatpush.bf16.msra.mxu0 %v3420
    %3644 = vmatpush.bf16.msra.mxu0 %v3416
    %3645 = vmatpush.bf16.msra.mxu0 %v3412
    %3646 = vmatmul.bf16.gmra.mxu0 %v3178
    %v3647 = vpop.f32.mrf.mxu0
    %v3648 = vadd.f32 %v3629, %v3647
    %v3649 = vpop.f32.mrf.mxu0
    %v3650 = vadd.f32 %v3631, %v3649
    %3651 = vmatmul.bf16.gmra.mxu0 %v3180
    %v3652 = vpop.f32.mrf.mxu0
    %v3653 = vadd.f32 %v3634, %v3652
    %v3654 = vpop.f32.mrf.mxu0
    %v3655 = vadd.f32 %v3636, %v3654
    %3656 = vdwg.mxu0
    %v3657 = vld [vmem:[#allocation7] sm:$0xff]
    %v3658 = vld [vmem:[#allocation7 + $0x8] sm:$0xff]
    %v3659 = vld [vmem:[#allocation7 + $0x10] sm:$0xff]
    %v3660 = vld [vmem:[#allocation7 + $0x18] sm:$0xff]
    %v3661 = vld [vmem:[#allocation7 + $0x20] sm:$0xff]
    %v3662 = vld [vmem:[#allocation7 + $0x28] sm:$0xff]
    %v3663 = vld [vmem:[#allocation7 + $0x30] sm:$0xff]
    %v3664 = vld [vmem:[#allocation7 + $0x38] sm:$0xff]
    %v3665 = vld [vmem:[#allocation7 + $0x40] sm:$0xff]
    %v3666 = vld [vmem:[#allocation7 + $0x48] sm:$0xff]
    %v3667 = vld [vmem:[#allocation7 + $0x50] sm:$0xff]
    %v3668 = vld [vmem:[#allocation7 + $0x58] sm:$0xff]
    %v3669 = vld [vmem:[#allocation7 + $0x60] sm:$0xff]
    %v3670 = vld [vmem:[#allocation7 + $0x68] sm:$0xff]
    %v3671 = vld [vmem:[#allocation7 + $0x70] sm:$0xff]
    %v3672 = vld [vmem:[#allocation7 + $0x78] sm:$0xff]
    %v3673 = vadd.f32 %v3657, %v3534
    %v3674 = vadd.f32 %v3658, %v3572
    %v3675 = vadd.f32 %v3659, %v3610
    %v3676 = vadd.f32 %v3660, %v3648
    %v3677 = vadd.f32 %v3661, %v3536
    %v3678 = vadd.f32 %v3662, %v3574
    %v3679 = vadd.f32 %v3663, %v3612
    %v3680 = vadd.f32 %v3664, %v3650
    %v3681 = vadd.f32 %v3665, %v3539
    %v3682 = vadd.f32 %v3666, %v3577
    %v3683 = vadd.f32 %v3667, %v3615
    %v3684 = vadd.f32 %v3668, %v3653
    %v3685 = vadd.f32 %v3669, %v3541
    %v3686 = vadd.f32 %v3670, %v3579
    %v3687 = vadd.f32 %v3671, %v3617
    %v3688 = vadd.f32 %v3672, %v3655
    %3689 = vst [vmem:[#allocation7] sm:$0xff] %v3673
    %3690 = vst [vmem:[#allocation7 + $0x8] sm:$0xff] %v3674
    %3691 = vst [vmem:[#allocation7 + $0x10] sm:$0xff] %v3675
    %3692 = vst [vmem:[#allocation7 + $0x18] sm:$0xff] %v3676
    %3693 = vst [vmem:[#allocation7 + $0x20] sm:$0xff] %v3677
    %3694 = vst [vmem:[#allocation7 + $0x28] sm:$0xff] %v3678
    %3695 = vst [vmem:[#allocation7 + $0x30] sm:$0xff] %v3679
    %3696 = vst [vmem:[#allocation7 + $0x38] sm:$0xff] %v3680
    %3697 = vst [vmem:[#allocation7 + $0x40] sm:$0xff] %v3681
    %3698 = vst [vmem:[#allocation7 + $0x48] sm:$0xff] %v3682
    %3699 = vst [vmem:[#allocation7 + $0x50] sm:$0xff] %v3683
    %3700 = vst [vmem:[#allocation7 + $0x58] sm:$0xff] %v3684
    %3701 = vst [vmem:[#allocation7 + $0x60] sm:$0xff] %v3685
    %3702 = vst [vmem:[#allocation7 + $0x68] sm:$0xff] %v3686
    %3703 = vst [vmem:[#allocation7 + $0x70] sm:$0xff] %v3687
    %3704 = vst [vmem:[#allocation7 + $0x78] sm:$0xff] %v3688
    %v3705 = vld [vmem:[#allocation3 + $0x10] sm:$0xff]
    %v3706 = vld [vmem:[#allocation3 + $0x18] sm:$0xff]
    %v3707 = vld [vmem:[#allocation3 + $0x20] sm:$0xff]
    %v3708 = vld [vmem:[#allocation3 + $0x28] sm:$0xff]
    %s3709 = scalar_lea.vmem [#allocation10], 1024
    %v3710 = vld [vmem:[%s3709] sm:$0xff]
    %v3711 = vld [vmem:[%s3709 + $0x8] sm:$0xff]
    %v3712 = vld [vmem:[%s3709 + $0x10] sm:$0xff]
    %v3713 = vld [vmem:[%s3709 + $0x18] sm:$0xff]
    %v3714 = vld [vmem:[%s3709 + $0x20] sm:$0xff]
    %v3715 = vld [vmem:[%s3709 + $0x28] sm:$0xff]
    %v3716 = vld [vmem:[%s3709 + $0x30] sm:$0xff]
    %v3717 = vld [vmem:[%s3709 + $0x38] sm:$0xff]
    %v3718 = vld [vmem:[%s3709 + $0x40] sm:$0xff]
    %v3719 = vld [vmem:[%s3709 + $0x48] sm:$0xff]
    %v3720 = vld [vmem:[%s3709 + $0x50] sm:$0xff]
    %v3721 = vld [vmem:[%s3709 + $0x58] sm:$0xff]
    %v3722 = vld [vmem:[%s3709 + $0x60] sm:$0xff]
    %v3723 = vld [vmem:[%s3709 + $0x68] sm:$0xff]
    %v3724 = vld [vmem:[%s3709 + $0x70] sm:$0xff]
    %v3725 = vld [vmem:[%s3709 + $0x78] sm:$0xff]
    %v3726 = vld [vmem:[%s3709 + $0x80] sm:$0xff]
    %v3727 = vld [vmem:[%s3709 + $0x88] sm:$0xff]
    %v3728 = vld [vmem:[%s3709 + $0x90] sm:$0xff]
    %v3729 = vld [vmem:[%s3709 + $0x98] sm:$0xff]
    %v3730 = vld [vmem:[%s3709 + $0xa0] sm:$0xff]
    %v3731 = vld [vmem:[%s3709 + $0xa8] sm:$0xff]
    %v3732 = vld [vmem:[%s3709 + $0xb0] sm:$0xff]
    %v3733 = vld [vmem:[%s3709 + $0xb8] sm:$0xff]
    %v3734 = vld [vmem:[%s3709 + $0xc0] sm:$0xff]
    %v3735 = vld [vmem:[%s3709 + $0xc8] sm:$0xff]
    %v3736 = vld [vmem:[%s3709 + $0xd0] sm:$0xff]
    %v3737 = vld [vmem:[%s3709 + $0xd8] sm:$0xff]
    %v3738 = vld [vmem:[%s3709 + $0xe0] sm:$0xff]
    %v3739 = vld [vmem:[%s3709 + $0xe8] sm:$0xff]
    %v3740 = vld [vmem:[%s3709 + $0xf0] sm:$0xff]
    %v3741 = vld [vmem:[%s3709 + $0xf8] sm:$0xff]
    %v3742 = vld [vmem:[%s3709 + $0x100] sm:$0xff]
    %v3743 = vld [vmem:[%s3709 + $0x108] sm:$0xff]
    %v3744 = vld [vmem:[%s3709 + $0x110] sm:$0xff]
    %v3745 = vld [vmem:[%s3709 + $0x118] sm:$0xff]
    %v3746 = vld [vmem:[%s3709 + $0x120] sm:$0xff]
    %v3747 = vld [vmem:[%s3709 + $0x128] sm:$0xff]
    %v3748 = vld [vmem:[%s3709 + $0x130] sm:$0xff]
    %v3749 = vld [vmem:[%s3709 + $0x138] sm:$0xff]
    %v3750 = vld [vmem:[%s3709 + $0x140] sm:$0xff]
    %v3751 = vld [vmem:[%s3709 + $0x148] sm:$0xff]
    %v3752 = vld [vmem:[%s3709 + $0x150] sm:$0xff]
    %v3753 = vld [vmem:[%s3709 + $0x158] sm:$0xff]
    %v3754 = vld [vmem:[%s3709 + $0x160] sm:$0xff]
    %v3755 = vld [vmem:[%s3709 + $0x168] sm:$0xff]
    %v3756 = vld [vmem:[%s3709 + $0x170] sm:$0xff]
    %v3757 = vld [vmem:[%s3709 + $0x178] sm:$0xff]
    %v3758 = vld [vmem:[%s3709 + $0x180] sm:$0xff]
    %v3759 = vld [vmem:[%s3709 + $0x188] sm:$0xff]
    %v3760 = vld [vmem:[%s3709 + $0x190] sm:$0xff]
    %v3761 = vld [vmem:[%s3709 + $0x198] sm:$0xff]
    %v3762 = vld [vmem:[%s3709 + $0x1a0] sm:$0xff]
    %v3763 = vld [vmem:[%s3709 + $0x1a8] sm:$0xff]
    %v3764 = vld [vmem:[%s3709 + $0x1b0] sm:$0xff]
    %v3765 = vld [vmem:[%s3709 + $0x1b8] sm:$0xff]
    %v3766 = vld [vmem:[%s3709 + $0x1c0] sm:$0xff]
    %v3767 = vld [vmem:[%s3709 + $0x1c8] sm:$0xff]
    %v3768 = vld [vmem:[%s3709 + $0x1d0] sm:$0xff]
    %v3769 = vld [vmem:[%s3709 + $0x1d8] sm:$0xff]
    %v3770 = vld [vmem:[%s3709 + $0x1e0] sm:$0xff]
    %v3771 = vld [vmem:[%s3709 + $0x1e8] sm:$0xff]
    %v3772 = vld [vmem:[%s3709 + $0x1f0] sm:$0xff]
    %v3773 = vld [vmem:[%s3709 + $0x1f8] sm:$0xff]
    %v3778 = vunpack.c.l.b16 %v3705
    %v3779 = vunpack.c.h.b16 %v3705
    %v3780 = vunpack.c.l.b16 %v3706
    %v3781 = vunpack.c.h.b16 %v3706
    %v3782 = vunpack.c.l.b16 %v3707
    %v3783 = vunpack.c.h.b16 %v3707
    %v3784 = vunpack.c.l.b16 %v3708
    %v3785 = vunpack.c.h.b16 %v3708
    %v3786 = vpack.c.b16 %v3780, %v3778
    %v3787 = vpack.c.b16 %v3781, %v3779
    %v3788 = vpack.c.b16 %v3784, %v3782
    %v3789 = vpack.c.b16 %v3785, %v3783
    %v3858 = vunpack.c.l.b16 %v3710
    %v3859 = vunpack.c.h.b16 %v3710
    %v3860 = vunpack.c.l.b16 %v3711
    %v3861 = vunpack.c.h.b16 %v3711
    %v3862 = vunpack.c.l.b16 %v3712
    %v3863 = vunpack.c.h.b16 %v3712
    %v3864 = vunpack.c.l.b16 %v3713
    %v3865 = vunpack.c.h.b16 %v3713
    %v3866 = vunpack.c.l.b16 %v3714
    %v3867 = vunpack.c.h.b16 %v3714
    %v3868 = vunpack.c.l.b16 %v3715
    %v3869 = vunpack.c.h.b16 %v3715
    %v3870 = vunpack.c.l.b16 %v3716
    %v3871 = vunpack.c.h.b16 %v3716
    %v3872 = vunpack.c.l.b16 %v3717
    %v3873 = vunpack.c.h.b16 %v3717
    %v3874 = vunpack.c.l.b16 %v3718
    %v3875 = vunpack.c.h.b16 %v3718
    %v3876 = vunpack.c.l.b16 %v3719
    %v3877 = vunpack.c.h.b16 %v3719
    %v3878 = vunpack.c.l.b16 %v3720
    %v3879 = vunpack.c.h.b16 %v3720
    %v3880 = vunpack.c.l.b16 %v3721
    %v3881 = vunpack.c.h.b16 %v3721
    %v3882 = vunpack.c.l.b16 %v3722
    %v3883 = vunpack.c.h.b16 %v3722
    %v3884 = vunpack.c.l.b16 %v3723
    %v3885 = vunpack.c.h.b16 %v3723
    %v3886 = vunpack.c.l.b16 %v3724
    %v3887 = vunpack.c.h.b16 %v3724
    %v3888 = vunpack.c.l.b16 %v3725
    %v3889 = vunpack.c.h.b16 %v3725
    %v3890 = vunpack.c.l.b16 %v3726
    %v3891 = vunpack.c.h.b16 %v3726
    %v3892 = vunpack.c.l.b16 %v3727
    %v3893 = vunpack.c.h.b16 %v3727
    %v3894 = vunpack.c.l.b16 %v3728
    %v3895 = vunpack.c.h.b16 %v3728
    %v3896 = vunpack.c.l.b16 %v3729
    %v3897 = vunpack.c.h.b16 %v3729
    %v3898 = vunpack.c.l.b16 %v3730
    %v3899 = vunpack.c.h.b16 %v3730
    %v3900 = vunpack.c.l.b16 %v3731
    %v3901 = vunpack.c.h.b16 %v3731
    %v3902 = vunpack.c.l.b16 %v3732
    %v3903 = vunpack.c.h.b16 %v3732
    %v3904 = vunpack.c.l.b16 %v3733
    %v3905 = vunpack.c.h.b16 %v3733
    %v3906 = vunpack.c.l.b16 %v3734
    %v3907 = vunpack.c.h.b16 %v3734
    %v3908 = vunpack.c.l.b16 %v3735
    %v3909 = vunpack.c.h.b16 %v3735
    %v3910 = vunpack.c.l.b16 %v3736
    %v3911 = vunpack.c.h.b16 %v3736
    %v3912 = vunpack.c.l.b16 %v3737
    %v3913 = vunpack.c.h.b16 %v3737
    %v3914 = vunpack.c.l.b16 %v3738
    %v3915 = vunpack.c.h.b16 %v3738
    %v3916 = vunpack.c.l.b16 %v3739
    %v3917 = vunpack.c.h.b16 %v3739
    %v3918 = vunpack.c.l.b16 %v3740
    %v3919 = vunpack.c.h.b16 %v3740
    %v3920 = vunpack.c.l.b16 %v3741
    %v3921 = vunpack.c.h.b16 %v3741
    %v3922 = vunpack.c.l.b16 %v3742
    %v3923 = vunpack.c.h.b16 %v3742
    %v3924 = vunpack.c.l.b16 %v3743
    %v3925 = vunpack.c.h.b16 %v3743
    %v3926 = vunpack.c.l.b16 %v3744
    %v3927 = vunpack.c.h.b16 %v3744
    %v3928 = vunpack.c.l.b16 %v3745
    %v3929 = vunpack.c.h.b16 %v3745
    %v3930 = vunpack.c.l.b16 %v3746
    %v3931 = vunpack.c.h.b16 %v3746
    %v3932 = vunpack.c.l.b16 %v3747
    %v3933 = vunpack.c.h.b16 %v3747
    %v3934 = vunpack.c.l.b16 %v3748
    %v3935 = vunpack.c.h.b16 %v3748
    %v3936 = vunpack.c.l.b16 %v3749
    %v3937 = vunpack.c.h.b16 %v3749
    %v3938 = vunpack.c.l.b16 %v3750
    %v3939 = vunpack.c.h.b16 %v3750
    %v3940 = vunpack.c.l.b16 %v3751
    %v3941 = vunpack.c.h.b16 %v3751
    %v3942 = vunpack.c.l.b16 %v3752
    %v3943 = vunpack.c.h.b16 %v3752
    %v3944 = vunpack.c.l.b16 %v3753
    %v3945 = vunpack.c.h.b16 %v3753
    %v3946 = vunpack.c.l.b16 %v3754
    %v3947 = vunpack.c.h.b16 %v3754
    %v3948 = vunpack.c.l.b16 %v3755
    %v3949 = vunpack.c.h.b16 %v3755
    %v3950 = vunpack.c.l.b16 %v3756
    %v3951 = vunpack.c.h.b16 %v3756
    %v3952 = vunpack.c.l.b16 %v3757
    %v3953 = vunpack.c.h.b16 %v3757
    %v3954 = vunpack.c.l.b16 %v3758
    %v3955 = vunpack.c.h.b16 %v3758
    %v3956 = vunpack.c.l.b16 %v3759
    %v3957 = vunpack.c.h.b16 %v3759
    %v3958 = vunpack.c.l.b16 %v3760
    %v3959 = vunpack.c.h.b16 %v3760
    %v3960 = vunpack.c.l.b16 %v3761
    %v3961 = vunpack.c.h.b16 %v3761
    %v3962 = vunpack.c.l.b16 %v3762
    %v3963 = vunpack.c.h.b16 %v3762
    %v3964 = vunpack.c.l.b16 %v3763
    %v3965 = vunpack.c.h.b16 %v3763
    %v3966 = vunpack.c.l.b16 %v3764
    %v3967 = vunpack.c.h.b16 %v3764
    %v3968 = vunpack.c.l.b16 %v3765
    %v3969 = vunpack.c.h.b16 %v3765
    %v3970 = vunpack.c.l.b16 %v3766
    %v3971 = vunpack.c.h.b16 %v3766
    %v3972 = vunpack.c.l.b16 %v3767
    %v3973 = vunpack.c.h.b16 %v3767
    %v3974 = vunpack.c.l.b16 %v3768
    %v3975 = vunpack.c.h.b16 %v3768
    %v3976 = vunpack.c.l.b16 %v3769
    %v3977 = vunpack.c.h.b16 %v3769
    %v3978 = vunpack.c.l.b16 %v3770
    %v3979 = vunpack.c.h.b16 %v3770
    %v3980 = vunpack.c.l.b16 %v3771
    %v3981 = vunpack.c.h.b16 %v3771
    %v3982 = vunpack.c.l.b16 %v3772
    %v3983 = vunpack.c.h.b16 %v3772
    %v3984 = vunpack.c.l.b16 %v3773
    %v3985 = vunpack.c.h.b16 %v3773
    %v3986 = vpack.c.b16 %v3862, %v3858
    %v3987 = vpack.c.b16 %v3863, %v3859
    %v3988 = vpack.c.b16 %v3864, %v3860
    %v3989 = vpack.c.b16 %v3865, %v3861
    %v3990 = vpack.c.b16 %v3870, %v3866
    %v3991 = vpack.c.b16 %v3871, %v3867
    %v3992 = vpack.c.b16 %v3872, %v3868
    %v3993 = vpack.c.b16 %v3873, %v3869
    %v3994 = vpack.c.b16 %v3878, %v3874
    %v3995 = vpack.c.b16 %v3879, %v3875
    %v3996 = vpack.c.b16 %v3880, %v3876
    %v3997 = vpack.c.b16 %v3881, %v3877
    %v3998 = vpack.c.b16 %v3886, %v3882
    %v3999 = vpack.c.b16 %v3887, %v3883
    %v4000 = vpack.c.b16 %v3888, %v3884
    %v4001 = vpack.c.b16 %v3889, %v3885
    %v4002 = vpack.c.b16 %v3894, %v3890
    %v4003 = vpack.c.b16 %v3895, %v3891
    %v4004 = vpack.c.b16 %v3896, %v3892
    %v4005 = vpack.c.b16 %v3897, %v3893
    %v4006 = vpack.c.b16 %v3902, %v3898
    %v4007 = vpack.c.b16 %v3903, %v3899
    %v4008 = vpack.c.b16 %v3904, %v3900
    %v4009 = vpack.c.b16 %v3905, %v3901
    %v4010 = vpack.c.b16 %v3910, %v3906
    %v4011 = vpack.c.b16 %v3911, %v3907
    %v4012 = vpack.c.b16 %v3912, %v3908
    %v4013 = vpack.c.b16 %v3913, %v3909
    %v4014 = vpack.c.b16 %v3918, %v3914
    %v4015 = vpack.c.b16 %v3919, %v3915
    %v4016 = vpack.c.b16 %v3920, %v3916
    %v4017 = vpack.c.b16 %v3921, %v3917
    %v4018 = vpack.c.b16 %v3926, %v3922
    %v4019 = vpack.c.b16 %v3927, %v3923
    %v4020 = vpack.c.b16 %v3928, %v3924
    %v4021 = vpack.c.b16 %v3929, %v3925
    %v4022 = vpack.c.b16 %v3934, %v3930
    %v4023 = vpack.c.b16 %v3935, %v3931
    %v4024 = vpack.c.b16 %v3936, %v3932
    %v4025 = vpack.c.b16 %v3937, %v3933
    %v4026 = vpack.c.b16 %v3942, %v3938
    %v4027 = vpack.c.b16 %v3943, %v3939
    %v4028 = vpack.c.b16 %v3944, %v3940
    %v4029 = vpack.c.b16 %v3945, %v3941
    %v4030 = vpack.c.b16 %v3950, %v3946
    %v4031 = vpack.c.b16 %v3951, %v3947
    %v4032 = vpack.c.b16 %v3952, %v3948
    %v4033 = vpack.c.b16 %v3953, %v3949
    %v4034 = vpack.c.b16 %v3958, %v3954
    %v4035 = vpack.c.b16 %v3959, %v3955
    %v4036 = vpack.c.b16 %v3960, %v3956
    %v4037 = vpack.c.b16 %v3961, %v3957
    %v4038 = vpack.c.b16 %v3966, %v3962
    %v4039 = vpack.c.b16 %v3967, %v3963
    %v4040 = vpack.c.b16 %v3968, %v3964
    %v4041 = vpack.c.b16 %v3969, %v3965
    %v4042 = vpack.c.b16 %v3974, %v3970
    %v4043 = vpack.c.b16 %v3975, %v3971
    %v4044 = vpack.c.b16 %v3976, %v3972
    %v4045 = vpack.c.b16 %v3977, %v3973
    %v4046 = vpack.c.b16 %v3982, %v3978
    %v4047 = vpack.c.b16 %v3983, %v3979
    %v4048 = vpack.c.b16 %v3984, %v3980
    %v4049 = vpack.c.b16 %v3985, %v3981
    %4114 = vmatpush.bf16.msra.mxu0 %v4014
    %4115 = vmatpush.bf16.msra.mxu0 %v4010
    %4116 = vmatpush.bf16.msra.mxu0 %v4006
    %4117 = vmatpush.bf16.msra.mxu0 %v4002
    %4118 = vmatpush.bf16.msra.mxu0 %v3998
    %4119 = vmatpush.bf16.msra.mxu0 %v3994
    %4120 = vmatpush.bf16.msra.mxu0 %v3990
    %4121 = vmatpush.bf16.msra.mxu0 %v3986
    %4122 = vmatmul.bf16.gmra.mxu0 %v3786
    %v4123 = vpop.f32.mrf.mxu0
    %v4124 = vadd.f32 0.0, %v4123
    %v4125 = vpop.f32.mrf.mxu0
    %v4126 = vadd.f32 0.0, %v4125
    %4127 = vmatmul.bf16.gmra.mxu0 %v3788
    %v4128 = vpop.f32.mrf.mxu0
    %v4129 = vadd.f32 0.0, %v4128
    %v4130 = vpop.f32.mrf.mxu0
    %v4131 = vadd.f32 0.0, %v4130
    %4132 = vdwg.mxu0
    %4133 = vmatpush.bf16.msra.mxu0 %v4046
    %4134 = vmatpush.bf16.msra.mxu0 %v4042
    %4135 = vmatpush.bf16.msra.mxu0 %v4038
    %4136 = vmatpush.bf16.msra.mxu0 %v4034
    %4137 = vmatpush.bf16.msra.mxu0 %v4030
    %4138 = vmatpush.bf16.msra.mxu0 %v4026
    %4139 = vmatpush.bf16.msra.mxu0 %v4022
    %4140 = vmatpush.bf16.msra.mxu0 %v4018
    %4141 = vmatmul.bf16.gmra.mxu0 %v3787
    %v4142 = vpop.f32.mrf.mxu0
    %v4143 = vadd.f32 %v4124, %v4142
    %v4144 = vpop.f32.mrf.mxu0
    %v4145 = vadd.f32 %v4126, %v4144
    %4146 = vmatmul.bf16.gmra.mxu0 %v3789
    %v4147 = vpop.f32.mrf.mxu0
    %v4148 = vadd.f32 %v4129, %v4147
    %v4149 = vpop.f32.mrf.mxu0
    %v4150 = vadd.f32 %v4131, %v4149
    %4151 = vdwg.mxu0
    %4152 = vmatpush.bf16.msra.mxu0 %v4015
    %4153 = vmatpush.bf16.msra.mxu0 %v4011
    %4154 = vmatpush.bf16.msra.mxu0 %v4007
    %4155 = vmatpush.bf16.msra.mxu0 %v4003
    %4156 = vmatpush.bf16.msra.mxu0 %v3999
    %4157 = vmatpush.bf16.msra.mxu0 %v3995
    %4158 = vmatpush.bf16.msra.mxu0 %v3991
    %4159 = vmatpush.bf16.msra.mxu0 %v3987
    %4160 = vmatmul.bf16.gmra.mxu0 %v3786
    %v4161 = vpop.f32.mrf.mxu0
    %v4162 = vadd.f32 0.0, %v4161
    %v4163 = vpop.f32.mrf.mxu0
    %v4164 = vadd.f32 0.0, %v4163
    %4165 = vmatmul.bf16.gmra.mxu0 %v3788
    %v4166 = vpop.f32.mrf.mxu0
    %v4167 = vadd.f32 0.0, %v4166
    %v4168 = vpop.f32.mrf.mxu0
    %v4169 = vadd.f32 0.0, %v4168
    %4170 = vdwg.mxu0
    %4171 = vmatpush.bf16.msra.mxu0 %v4047
    %4172 = vmatpush.bf16.msra.mxu0 %v4043
    %4173 = vmatpush.bf16.msra.mxu0 %v4039
    %4174 = vmatpush.bf16.msra.mxu0 %v4035
    %4175 = vmatpush.bf16.msra.mxu0 %v4031
    %4176 = vmatpush.bf16.msra.mxu0 %v4027
    %4177 = vmatpush.bf16.msra.mxu0 %v4023
    %4178 = vmatpush.bf16.msra.mxu0 %v4019
    %4179 = vmatmul.bf16.gmra.mxu0 %v3787
    %v4180 = vpop.f32.mrf.mxu0
    %v4181 = vadd.f32 %v4162, %v4180
    %v4182 = vpop.f32.mrf.mxu0
    %v4183 = vadd.f32 %v4164, %v4182
    %4184 = vmatmul.bf16.gmra.mxu0 %v3789
    %v4185 = vpop.f32.mrf.mxu0
    %v4186 = vadd.f32 %v4167, %v4185
    %v4187 = vpop.f32.mrf.mxu0
    %v4188 = vadd.f32 %v4169, %v4187
    %4189 = vdwg.mxu0
    %4190 = vmatpush.bf16.msra.mxu0 %v4016
    %4191 = vmatpush.bf16.msra.mxu0 %v4012
    %4192 = vmatpush.bf16.msra.mxu0 %v4008
    %4193 = vmatpush.bf16.msra.mxu0 %v4004
    %4194 = vmatpush.bf16.msra.mxu0 %v4000
    %4195 = vmatpush.bf16.msra.mxu0 %v3996
    %4196 = vmatpush.bf16.msra.mxu0 %v3992
    %4197 = vmatpush.bf16.msra.mxu0 %v3988
    %4198 = vmatmul.bf16.gmra.mxu0 %v3786
    %v4199 = vpop.f32.mrf.mxu0
    %v4200 = vadd.f32 0.0, %v4199
    %v4201 = vpop.f32.mrf.mxu0
    %v4202 = vadd.f32 0.0, %v4201
    %4203 = vmatmul.bf16.gmra.mxu0 %v3788
    %v4204 = vpop.f32.mrf.mxu0
    %v4205 = vadd.f32 0.0, %v4204
    %v4206 = vpop.f32.mrf.mxu0
    %v4207 = vadd.f32 0.0, %v4206
    %4208 = vdwg.mxu0
    %4209 = vmatpush.bf16.msra.mxu0 %v4048
    %4210 = vmatpush.bf16.msra.mxu0 %v4044
    %4211 = vmatpush.bf16.msra.mxu0 %v4040
    %4212 = vmatpush.bf16.msra.mxu0 %v4036
    %4213 = vmatpush.bf16.msra.mxu0 %v4032
    %4214 = vmatpush.bf16.msra.mxu0 %v4028
    %4215 = vmatpush.bf16.msra.mxu0 %v4024
    %4216 = vmatpush.bf16.msra.mxu0 %v4020
    %4217 = vmatmul.bf16.gmra.mxu0 %v3787
    %v4218 = vpop.f32.mrf.mxu0
    %v4219 = vadd.f32 %v4200, %v4218
    %v4220 = vpop.f32.mrf.mxu0
    %v4221 = vadd.f32 %v4202, %v4220
    %4222 = vmatmul.bf16.gmra.mxu0 %v3789
    %v4223 = vpop.f32.mrf.mxu0
    %v4224 = vadd.f32 %v4205, %v4223
    %v4225 = vpop.f32.mrf.mxu0
    %v4226 = vadd.f32 %v4207, %v4225
    %4227 = vdwg.mxu0
    %4228 = vmatpush.bf16.msra.mxu0 %v4017
    %4229 = vmatpush.bf16.msra.mxu0 %v4013
    %4230 = vmatpush.bf16.msra.mxu0 %v4009
    %4231 = vmatpush.bf16.msra.mxu0 %v4005
    %4232 = vmatpush.bf16.msra.mxu0 %v4001
    %4233 = vmatpush.bf16.msra.mxu0 %v3997
    %4234 = vmatpush.bf16.msra.mxu0 %v3993
    %4235 = vmatpush.bf16.msra.mxu0 %v3989
    %4236 = vmatmul.bf16.gmra.mxu0 %v3786
    %v4237 = vpop.f32.mrf.mxu0
    %v4238 = vadd.f32 0.0, %v4237
    %v4239 = vpop.f32.mrf.mxu0
    %v4240 = vadd.f32 0.0, %v4239
    %4241 = vmatmul.bf16.gmra.mxu0 %v3788
    %v4242 = vpop.f32.mrf.mxu0
    %v4243 = vadd.f32 0.0, %v4242
    %v4244 = vpop.f32.mrf.mxu0
    %v4245 = vadd.f32 0.0, %v4244
    %4246 = vdwg.mxu0
    %4247 = vmatpush.bf16.msra.mxu0 %v4049
    %4248 = vmatpush.bf16.msra.mxu0 %v4045
    %4249 = vmatpush.bf16.msra.mxu0 %v4041
    %4250 = vmatpush.bf16.msra.mxu0 %v4037
    %4251 = vmatpush.bf16.msra.mxu0 %v4033
    %4252 = vmatpush.bf16.msra.mxu0 %v4029
    %4253 = vmatpush.bf16.msra.mxu0 %v4025
    %4254 = vmatpush.bf16.msra.mxu0 %v4021
    %4255 = vmatmul.bf16.gmra.mxu0 %v3787
    %v4256 = vpop.f32.mrf.mxu0
    %v4257 = vadd.f32 %v4238, %v4256
    %v4258 = vpop.f32.mrf.mxu0
    %v4259 = vadd.f32 %v4240, %v4258
    %4260 = vmatmul.bf16.gmra.mxu0 %v3789
    %v4261 = vpop.f32.mrf.mxu0
    %v4262 = vadd.f32 %v4243, %v4261
    %v4263 = vpop.f32.mrf.mxu0
    %v4264 = vadd.f32 %v4245, %v4263
    %4265 = vdwg.mxu0
    %v4266 = vld [vmem:[#allocation7] sm:$0xff]
    %v4267 = vld [vmem:[#allocation7 + $0x8] sm:$0xff]
    %v4268 = vld [vmem:[#allocation7 + $0x10] sm:$0xff]
    %v4269 = vld [vmem:[#allocation7 + $0x18] sm:$0xff]
    %v4270 = vld [vmem:[#allocation7 + $0x20] sm:$0xff]
    %v4271 = vld [vmem:[#allocation7 + $0x28] sm:$0xff]
    %v4272 = vld [vmem:[#allocation7 + $0x30] sm:$0xff]
    %v4273 = vld [vmem:[#allocation7 + $0x38] sm:$0xff]
    %v4274 = vld [vmem:[#allocation7 + $0x40] sm:$0xff]
    %v4275 = vld [vmem:[#allocation7 + $0x48] sm:$0xff]
    %v4276 = vld [vmem:[#allocation7 + $0x50] sm:$0xff]
    %v4277 = vld [vmem:[#allocation7 + $0x58] sm:$0xff]
    %v4278 = vld [vmem:[#allocation7 + $0x60] sm:$0xff]
    %v4279 = vld [vmem:[#allocation7 + $0x68] sm:$0xff]
    %v4280 = vld [vmem:[#allocation7 + $0x70] sm:$0xff]
    %v4281 = vld [vmem:[#allocation7 + $0x78] sm:$0xff]
    %v4282 = vadd.f32 %v4266, %v4143
    %v4283 = vadd.f32 %v4267, %v4181
    %v4284 = vadd.f32 %v4268, %v4219
    %v4285 = vadd.f32 %v4269, %v4257
    %v4286 = vadd.f32 %v4270, %v4145
    %v4287 = vadd.f32 %v4271, %v4183
    %v4288 = vadd.f32 %v4272, %v4221
    %v4289 = vadd.f32 %v4273, %v4259
    %v4290 = vadd.f32 %v4274, %v4148
    %v4291 = vadd.f32 %v4275, %v4186
    %v4292 = vadd.f32 %v4276, %v4224
    %v4293 = vadd.f32 %v4277, %v4262
    %v4294 = vadd.f32 %v4278, %v4150
    %v4295 = vadd.f32 %v4279, %v4188
    %v4296 = vadd.f32 %v4280, %v4226
    %v4297 = vadd.f32 %v4281, %v4264
    %4298 = vst [vmem:[#allocation7] sm:$0xff] %v4282
    %4299 = vst [vmem:[#allocation7 + $0x8] sm:$0xff] %v4283
    %4300 = vst [vmem:[#allocation7 + $0x10] sm:$0xff] %v4284
    %4301 = vst [vmem:[#allocation7 + $0x18] sm:$0xff] %v4285
    %4302 = vst [vmem:[#allocation7 + $0x20] sm:$0xff] %v4286
    %4303 = vst [vmem:[#allocation7 + $0x28] sm:$0xff] %v4287
    %4304 = vst [vmem:[#allocation7 + $0x30] sm:$0xff] %v4288
    %4305 = vst [vmem:[#allocation7 + $0x38] sm:$0xff] %v4289
    %4306 = vst [vmem:[#allocation7 + $0x40] sm:$0xff] %v4290
    %4307 = vst [vmem:[#allocation7 + $0x48] sm:$0xff] %v4291
    %4308 = vst [vmem:[#allocation7 + $0x50] sm:$0xff] %v4292
    %4309 = vst [vmem:[#allocation7 + $0x58] sm:$0xff] %v4293
    %4310 = vst [vmem:[#allocation7 + $0x60] sm:$0xff] %v4294
    %4311 = vst [vmem:[#allocation7 + $0x68] sm:$0xff] %v4295
    %4312 = vst [vmem:[#allocation7 + $0x70] sm:$0xff] %v4296
    %4313 = vst [vmem:[#allocation7 + $0x78] sm:$0xff] %v4297
    %v4314 = vld [vmem:[%s6] sm:$0x3]
    %v4315 = vld [vmem:[#allocation7] sm:$0xff]
    %v4316 = vld [vmem:[#allocation7 + $0x8] sm:$0xff]
    %v4317 = vld [vmem:[#allocation7 + $0x10] sm:$0xff]
    %v4318 = vld [vmem:[#allocation7 + $0x18] sm:$0xff]
    %v4319 = vld [vmem:[#allocation7 + $0x20] sm:$0xff]
    %v4320 = vld [vmem:[#allocation7 + $0x28] sm:$0xff]
    %v4321 = vld [vmem:[#allocation7 + $0x30] sm:$0xff]
    %v4322 = vld [vmem:[#allocation7 + $0x38] sm:$0xff]
    %v4323 = vmax.f32 %v4315, %v4319
    %v4324 = vmax.f32 %v4316, %v4320
    %v4325 = vmax.f32 %v4317, %v4321
    %v4326 = vmax.f32 %v4318, %v4322
    %v4327 = vmax.f32 %v4323, %v4325
    %v4328 = vmax.f32 %v4324, %v4326
    %v4330 = vperm.slane %v4314, 0
    %v4331 = vperm.slane %v4314, 1
    %v4334 = vadd.f32 %v4327, %v4330
    %v4335 = vadd.f32 %v4328, %v4331
    %v4336 = vmax.f32 %v4334, 0.0
    %v4337 = vmax.f32 %v4335, 0.0
    %v4338 = vpack.c.bf16 %v4337, %v4336
    %4339 = vst [vmem:[#allocation4] sm:$0xff] %v4338
    %v4340 = vld [vmem:[#allocation7 + $0x40] sm:$0xff]
    %v4341 = vld [vmem:[#allocation7 + $0x48] sm:$0xff]
    %v4342 = vld [vmem:[#allocation7 + $0x50] sm:$0xff]
    %v4343 = vld [vmem:[#allocation7 + $0x58] sm:$0xff]
    %v4344 = vld [vmem:[#allocation7 + $0x60] sm:$0xff]
    %v4345 = vld [vmem:[#allocation7 + $0x68] sm:$0xff]
    %v4346 = vld [vmem:[#allocation7 + $0x70] sm:$0xff]
    %v4347 = vld [vmem:[#allocation7 + $0x78] sm:$0xff]
    %v4348 = vmax.f32 %v4340, %v4344
    %v4349 = vmax.f32 %v4341, %v4345
    %v4350 = vmax.f32 %v4342, %v4346
    %v4351 = vmax.f32 %v4343, %v4347
    %v4352 = vmax.f32 %v4348, %v4350
    %v4353 = vmax.f32 %v4349, %v4351
    %v4354 = vadd.f32 %v4352, %v4330
    %v4355 = vadd.f32 %v4353, %v4331
    %v4356 = vmax.f32 %v4354, 0.0
    %v4357 = vmax.f32 %v4355, 0.0
    %v4358 = vpack.c.bf16 %v4357, %v4356
    %4359 = vst [vmem:[#allocation4 + $0x8] sm:$0xff] %v4358
    %v4360 = vld [vmem:[#allocation4] sm:$0xff]
    %v4361 = vld [vmem:[#allocation4 + $0x8] sm:$0xff]
    %v4363 = vunpack.c.l.b16 %v4360
    %v4364 = vunpack.c.h.b16 %v4360
    %v4365 = vpack.c.b16 %v4363, %v4363
    %v4366 = vpack.c.b16 %v4364, %v4364
    %v4370 = vunpack.c.l.b16 %v4361
    %v4371 = vunpack.c.h.b16 %v4361
    %v4372 = vpack.c.b16 %v4370, %v4370
    %v4373 = vpack.c.b16 %v4371, %v4371
    %v4376 = vld [vmem:[%s7] sm:$0xff]
    %v4377 = vld [vmem:[%s7 + $0x8] sm:$0xff]
    %v4378 = vld [vmem:[%s7 + $0x10] sm:$0xff]
    %v4379 = vld [vmem:[%s7 + $0x18] sm:$0xff]
    %v4380 = vld [vmem:[%s7 + $0x20] sm:$0xff]
    %v4381 = vld [vmem:[%s7 + $0x28] sm:$0xff]
    %v4382 = vld [vmem:[%s7 + $0x30] sm:$0xff]
    %v4383 = vld [vmem:[%s7 + $0x38] sm:$0xff]
    %v4384 = vld [vmem:[%s7 + $0x40] sm:$0xff]
    %v4385 = vld [vmem:[%s7 + $0x48] sm:$0xff]
    %v4386 = vld [vmem:[%s7 + $0x50] sm:$0xff]
    %v4387 = vld [vmem:[%s7 + $0x58] sm:$0xff]
    %v4388 = vld [vmem:[%s7 + $0x60] sm:$0xff]
    %v4389 = vld [vmem:[%s7 + $0x68] sm:$0xff]
    %v4390 = vld [vmem:[%s7 + $0x70] sm:$0xff]
    %v4391 = vld [vmem:[%s7 + $0x78] sm:$0xff]
    %v4392 = vld [vmem:[%s7 + $0x80] sm:$0xff]
    %v4393 = vld [vmem:[%s7 + $0x88] sm:$0xff]
    %v4394 = vld [vmem:[%s7 + $0x90] sm:$0xff]
    %v4395 = vld [vmem:[%s7 + $0x98] sm:$0xff]
    %v4396 = vld [vmem:[%s7 + $0xa0] sm:$0xff]
    %v4397 = vld [vmem:[%s7 + $0xa8] sm:$0xff]
    %v4398 = vld [vmem:[%s7 + $0xb0] sm:$0xff]
    %v4399 = vld [vmem:[%s7 + $0xb8] sm:$0xff]
    %v4400 = vld [vmem:[%s7 + $0xc0] sm:$0xff]
    %v4401 = vld [vmem:[%s7 + $0xc8] sm:$0xff]
    %v4402 = vld [vmem:[%s7 + $0xd0] sm:$0xff]
    %v4403 = vld [vmem:[%s7 + $0xd8] sm:$0xff]
    %v4404 = vld [vmem:[%s7 + $0xe0] sm:$0xff]
    %v4405 = vld [vmem:[%s7 + $0xe8] sm:$0xff]
    %v4406 = vld [vmem:[%s7 + $0xf0] sm:$0xff]
    %v4407 = vld [vmem:[%s7 + $0xf8] sm:$0xff]
    %v4408 = vld [vmem:[%s7 + $0x100] sm:$0xff]
    %v4409 = vld [vmem:[%s7 + $0x108] sm:$0xff]
    %v4410 = vld [vmem:[%s7 + $0x110] sm:$0xff]
    %v4411 = vld [vmem:[%s7 + $0x118] sm:$0xff]
    %v4412 = vld [vmem:[%s7 + $0x120] sm:$0xff]
    %v4413 = vld [vmem:[%s7 + $0x128] sm:$0xff]
    %v4414 = vld [vmem:[%s7 + $0x130] sm:$0xff]
    %v4415 = vld [vmem:[%s7 + $0x138] sm:$0xff]
    %v4416 = vld [vmem:[%s7 + $0x140] sm:$0xff]
    %v4417 = vld [vmem:[%s7 + $0x148] sm:$0xff]
    %v4418 = vld [vmem:[%s7 + $0x150] sm:$0xff]
    %v4419 = vld [vmem:[%s7 + $0x158] sm:$0xff]
    %v4420 = vld [vmem:[%s7 + $0x160] sm:$0xff]
    %v4421 = vld [vmem:[%s7 + $0x168] sm:$0xff]
    %v4422 = vld [vmem:[%s7 + $0x170] sm:$0xff]
    %v4423 = vld [vmem:[%s7 + $0x178] sm:$0xff]
    %v4424 = vld [vmem:[%s7 + $0x180] sm:$0xff]
    %v4425 = vld [vmem:[%s7 + $0x188] sm:$0xff]
    %v4426 = vld [vmem:[%s7 + $0x190] sm:$0xff]
    %v4427 = vld [vmem:[%s7 + $0x198] sm:$0xff]
    %v4428 = vld [vmem:[%s7 + $0x1a0] sm:$0xff]
    %v4429 = vld [vmem:[%s7 + $0x1a8] sm:$0xff]
    %v4430 = vld [vmem:[%s7 + $0x1b0] sm:$0xff]
    %v4431 = vld [vmem:[%s7 + $0x1b8] sm:$0xff]
    %v4432 = vld [vmem:[%s7 + $0x1c0] sm:$0xff]
    %v4433 = vld [vmem:[%s7 + $0x1c8] sm:$0xff]
    %v4434 = vld [vmem:[%s7 + $0x1d0] sm:$0xff]
    %v4435 = vld [vmem:[%s7 + $0x1d8] sm:$0xff]
    %v4436 = vld [vmem:[%s7 + $0x1e0] sm:$0xff]
    %v4437 = vld [vmem:[%s7 + $0x1e8] sm:$0xff]
    %v4438 = vld [vmem:[%s7 + $0x1f0] sm:$0xff]
    %v4439 = vld [vmem:[%s7 + $0x1f8] sm:$0xff]
    %v4440 = vld [vmem:[%s8] sm:$0x3]
    %v4442 = vperm.slane %v4440, 0
    %v4443 = vperm.slane %v4440, 1
    %v4510 = vunpack.c.l.b16 %v4376
    %v4511 = vunpack.c.h.b16 %v4376
    %v4512 = vunpack.c.l.b16 %v4377
    %v4513 = vunpack.c.h.b16 %v4377
    %v4514 = vunpack.c.l.b16 %v4378
    %v4515 = vunpack.c.h.b16 %v4378
    %v4516 = vunpack.c.l.b16 %v4379
    %v4517 = vunpack.c.h.b16 %v4379
    %v4518 = vunpack.c.l.b16 %v4380
    %v4519 = vunpack.c.h.b16 %v4380
    %v4520 = vunpack.c.l.b16 %v4381
    %v4521 = vunpack.c.h.b16 %v4381
    %v4522 = vunpack.c.l.b16 %v4382
    %v4523 = vunpack.c.h.b16 %v4382
    %v4524 = vunpack.c.l.b16 %v4383
    %v4525 = vunpack.c.h.b16 %v4383
    %v4526 = vunpack.c.l.b16 %v4384
    %v4527 = vunpack.c.h.b16 %v4384
    %v4528 = vunpack.c.l.b16 %v4385
    %v4529 = vunpack.c.h.b16 %v4385
    %v4530 = vunpack.c.l.b16 %v4386
    %v4531 = vunpack.c.h.b16 %v4386
    %v4532 = vunpack.c.l.b16 %v4387
    %v4533 = vunpack.c.h.b16 %v4387
    %v4534 = vunpack.c.l.b16 %v4388
    %v4535 = vunpack.c.h.b16 %v4388
    %v4536 = vunpack.c.l.b16 %v4389
    %v4537 = vunpack.c.h.b16 %v4389
    %v4538 = vunpack.c.l.b16 %v4390
    %v4539 = vunpack.c.h.b16 %v4390
    %v4540 = vunpack.c.l.b16 %v4391
    %v4541 = vunpack.c.h.b16 %v4391
    %v4542 = vunpack.c.l.b16 %v4392
    %v4543 = vunpack.c.h.b16 %v4392
    %v4544 = vunpack.c.l.b16 %v4393
    %v4545 = vunpack.c.h.b16 %v4393
    %v4546 = vunpack.c.l.b16 %v4394
    %v4547 = vunpack.c.h.b16 %v4394
    %v4548 = vunpack.c.l.b16 %v4395
    %v4549 = vunpack.c.h.b16 %v4395
    %v4550 = vunpack.c.l.b16 %v4396
    %v4551 = vunpack.c.h.b16 %v4396
    %v4552 = vunpack.c.l.b16 %v4397
    %v4553 = vunpack.c.h.b16 %v4397
    %v4554 = vunpack.c.l.b16 %v4398
    %v4555 = vunpack.c.h.b16 %v4398
    %v4556 = vunpack.c.l.b16 %v4399
    %v4557 = vunpack.c.h.b16 %v4399
    %v4558 = vunpack.c.l.b16 %v4400
    %v4559 = vunpack.c.h.b16 %v4400
    %v4560 = vunpack.c.l.b16 %v4401
    %v4561 = vunpack.c.h.b16 %v4401
    %v4562 = vunpack.c.l.b16 %v4402
    %v4563 = vunpack.c.h.b16 %v4402
    %v4564 = vunpack.c.l.b16 %v4403
    %v4565 = vunpack.c.h.b16 %v4403
    %v4566 = vunpack.c.l.b16 %v4404
    %v4567 = vunpack.c.h.b16 %v4404
    %v4568 = vunpack.c.l.b16 %v4405
    %v4569 = vunpack.c.h.b16 %v4405
    %v4570 = vunpack.c.l.b16 %v4406
    %v4571 = vunpack.c.h.b16 %v4406
    %v4572 = vunpack.c.l.b16 %v4407
    %v4573 = vunpack.c.h.b16 %v4407
    %v4574 = vunpack.c.l.b16 %v4408
    %v4575 = vunpack.c.h.b16 %v4408
    %v4576 = vunpack.c.l.b16 %v4409
    %v4577 = vunpack.c.h.b16 %v4409
    %v4578 = vunpack.c.l.b16 %v4410
    %v4579 = vunpack.c.h.b16 %v4410
    %v4580 = vunpack.c.l.b16 %v4411
    %v4581 = vunpack.c.h.b16 %v4411
    %v4582 = vunpack.c.l.b16 %v4412
    %v4583 = vunpack.c.h.b16 %v4412
    %v4584 = vunpack.c.l.b16 %v4413
    %v4585 = vunpack.c.h.b16 %v4413
    %v4586 = vunpack.c.l.b16 %v4414
    %v4587 = vunpack.c.h.b16 %v4414
    %v4588 = vunpack.c.l.b16 %v4415
    %v4589 = vunpack.c.h.b16 %v4415
    %v4590 = vunpack.c.l.b16 %v4416
    %v4591 = vunpack.c.h.b16 %v4416
    %v4592 = vunpack.c.l.b16 %v4417
    %v4593 = vunpack.c.h.b16 %v4417
    %v4594 = vunpack.c.l.b16 %v4418
    %v4595 = vunpack.c.h.b16 %v4418
    %v4596 = vunpack.c.l.b16 %v4419
    %v4597 = vunpack.c.h.b16 %v4419
    %v4598 = vunpack.c.l.b16 %v4420
    %v4599 = vunpack.c.h.b16 %v4420
    %v4600 = vunpack.c.l.b16 %v4421
    %v4601 = vunpack.c.h.b16 %v4421
    %v4602 = vunpack.c.l.b16 %v4422
    %v4603 = vunpack.c.h.b16 %v4422
    %v4604 = vunpack.c.l.b16 %v4423
    %v4605 = vunpack.c.h.b16 %v4423
    %v4606 = vunpack.c.l.b16 %v4424
    %v4607 = vunpack.c.h.b16 %v4424
    %v4608 = vunpack.c.l.b16 %v4425
    %v4609 = vunpack.c.h.b16 %v4425
    %v4610 = vunpack.c.l.b16 %v4426
    %v4611 = vunpack.c.h.b16 %v4426
    %v4612 = vunpack.c.l.b16 %v4427
    %v4613 = vunpack.c.h.b16 %v4427
    %v4614 = vunpack.c.l.b16 %v4428
    %v4615 = vunpack.c.h.b16 %v4428
    %v4616 = vunpack.c.l.b16 %v4429
    %v4617 = vunpack.c.h.b16 %v4429
    %v4618 = vunpack.c.l.b16 %v4430
    %v4619 = vunpack.c.h.b16 %v4430
    %v4620 = vunpack.c.l.b16 %v4431
    %v4621 = vunpack.c.h.b16 %v4431
    %v4622 = vunpack.c.l.b16 %v4432
    %v4623 = vunpack.c.h.b16 %v4432
    %v4624 = vunpack.c.l.b16 %v4433
    %v4625 = vunpack.c.h.b16 %v4433
    %v4626 = vunpack.c.l.b16 %v4434
    %v4627 = vunpack.c.h.b16 %v4434
    %v4628 = vunpack.c.l.b16 %v4435
    %v4629 = vunpack.c.h.b16 %v4435
    %v4630 = vunpack.c.l.b16 %v4436
    %v4631 = vunpack.c.h.b16 %v4436
    %v4632 = vunpack.c.l.b16 %v4437
    %v4633 = vunpack.c.h.b16 %v4437
    %v4634 = vunpack.c.l.b16 %v4438
    %v4635 = vunpack.c.h.b16 %v4438
    %v4636 = vunpack.c.l.b16 %v4439
    %v4637 = vunpack.c.h.b16 %v4439
    %v4638 = vpack.c.b16 %v4512, %v4510
    %v4639 = vpack.c.b16 %v4513, %v4511
    %v4640 = vpack.c.b16 %v4516, %v4514
    %v4641 = vpack.c.b16 %v4517, %v4515
    %v4642 = vpack.c.b16 %v4520, %v4518
    %v4643 = vpack.c.b16 %v4521, %v4519
    %v4644 = vpack.c.b16 %v4524, %v4522
    %v4645 = vpack.c.b16 %v4525, %v4523
    %v4646 = vpack.c.b16 %v4528, %v4526
    %v4647 = vpack.c.b16 %v4529, %v4527
    %v4648 = vpack.c.b16 %v4532, %v4530
    %v4649 = vpack.c.b16 %v4533, %v4531
    %v4650 = vpack.c.b16 %v4536, %v4534
    %v4651 = vpack.c.b16 %v4537, %v4535
    %v4652 = vpack.c.b16 %v4540, %v4538
    %v4653 = vpack.c.b16 %v4541, %v4539
    %v4654 = vpack.c.b16 %v4544, %v4542
    %v4655 = vpack.c.b16 %v4545, %v4543
    %v4656 = vpack.c.b16 %v4548, %v4546
    %v4657 = vpack.c.b16 %v4549, %v4547
    %v4658 = vpack.c.b16 %v4552, %v4550
    %v4659 = vpack.c.b16 %v4553, %v4551
    %v4660 = vpack.c.b16 %v4556, %v4554
    %v4661 = vpack.c.b16 %v4557, %v4555
    %v4662 = vpack.c.b16 %v4560, %v4558
    %v4663 = vpack.c.b16 %v4561, %v4559
    %v4664 = vpack.c.b16 %v4564, %v4562
    %v4665 = vpack.c.b16 %v4565, %v4563
    %v4666 = vpack.c.b16 %v4568, %v4566
    %v4667 = vpack.c.b16 %v4569, %v4567
    %v4668 = vpack.c.b16 %v4572, %v4570
    %v4669 = vpack.c.b16 %v4573, %v4571
    %v4670 = vpack.c.b16 %v4576, %v4574
    %v4671 = vpack.c.b16 %v4577, %v4575
    %v4672 = vpack.c.b16 %v4580, %v4578
    %v4673 = vpack.c.b16 %v4581, %v4579
    %v4674 = vpack.c.b16 %v4584, %v4582
    %v4675 = vpack.c.b16 %v4585, %v4583
    %v4676 = vpack.c.b16 %v4588, %v4586
    %v4677 = vpack.c.b16 %v4589, %v4587
    %v4678 = vpack.c.b16 %v4592, %v4590
    %v4679 = vpack.c.b16 %v4593, %v4591
    %v4680 = vpack.c.b16 %v4596, %v4594
    %v4681 = vpack.c.b16 %v4597, %v4595
    %v4682 = vpack.c.b16 %v4600, %v4598
    %v4683 = vpack.c.b16 %v4601, %v4599
    %v4684 = vpack.c.b16 %v4604, %v4602
    %v4685 = vpack.c.b16 %v4605, %v4603
    %v4686 = vpack.c.b16 %v4608, %v4606
    %v4687 = vpack.c.b16 %v4609, %v4607
    %v4688 = vpack.c.b16 %v4612, %v4610
    %v4689 = vpack.c.b16 %v4613, %v4611
    %v4690 = vpack.c.b16 %v4616, %v4614
    %v4691 = vpack.c.b16 %v4617, %v4615
    %v4692 = vpack.c.b16 %v4620, %v4618
    %v4693 = vpack.c.b16 %v4621, %v4619
    %v4694 = vpack.c.b16 %v4624, %v4622
    %v4695 = vpack.c.b16 %v4625, %v4623
    %v4696 = vpack.c.b16 %v4628, %v4626
    %v4697 = vpack.c.b16 %v4629, %v4627
    %v4698 = vpack.c.b16 %v4632, %v4630
    %v4699 = vpack.c.b16 %v4633, %v4631
    %v4700 = vpack.c.b16 %v4636, %v4634
    %v4701 = vpack.c.b16 %v4637, %v4635
    %4766 = vmatpush.bf16.msra.mxu0 %v4652
    %4767 = vmatpush.bf16.msra.mxu0 %v4650
    %4768 = vmatpush.bf16.msra.mxu0 %v4648
    %4769 = vmatpush.bf16.msra.mxu0 %v4646
    %4770 = vmatpush.bf16.msra.mxu0 %v4644
    %4771 = vmatpush.bf16.msra.mxu0 %v4642
    %4772 = vmatpush.bf16.msra.mxu0 %v4640
    %4773 = vmatpush.bf16.msra.mxu0 %v4638
    %4774 = vmatmul.bf16.gmra.mxu0 %v4365
    %v4775 = vpop.f32.mrf.mxu0
    %v4776 = vadd.f32 %v4442, %v4775
    %v4777 = vpop.f32.mrf.mxu0
    %4778 = vdwg.mxu0
    %4779 = vmatpush.bf16.msra.mxu0 %v4668
    %4780 = vmatpush.bf16.msra.mxu0 %v4666
    %4781 = vmatpush.bf16.msra.mxu0 %v4664
    %4782 = vmatpush.bf16.msra.mxu0 %v4662
    %4783 = vmatpush.bf16.msra.mxu0 %v4660
    %4784 = vmatpush.bf16.msra.mxu0 %v4658
    %4785 = vmatpush.bf16.msra.mxu0 %v4656
    %4786 = vmatpush.bf16.msra.mxu0 %v4654
    %4787 = vmatmul.bf16.gmra.mxu0 %v4366
    %v4788 = vpop.f32.mrf.mxu0
    %v4789 = vadd.f32 %v4776, %v4788
    %v4790 = vpop.f32.mrf.mxu0
    %4791 = vdwg.mxu0
    %4792 = vmatpush.bf16.msra.mxu0 %v4684
    %4793 = vmatpush.bf16.msra.mxu0 %v4682
    %4794 = vmatpush.bf16.msra.mxu0 %v4680
    %4795 = vmatpush.bf16.msra.mxu0 %v4678
    %4796 = vmatpush.bf16.msra.mxu0 %v4676
    %4797 = vmatpush.bf16.msra.mxu0 %v4674
    %4798 = vmatpush.bf16.msra.mxu0 %v4672
    %4799 = vmatpush.bf16.msra.mxu0 %v4670
    %4800 = vmatmul.bf16.gmra.mxu0 %v4372
    %v4801 = vpop.f32.mrf.mxu0
    %v4802 = vadd.f32 %v4789, %v4801
    %v4803 = vpop.f32.mrf.mxu0
    %4804 = vdwg.mxu0
    %4805 = vmatpush.bf16.msra.mxu0 %v4700
    %4806 = vmatpush.bf16.msra.mxu0 %v4698
    %4807 = vmatpush.bf16.msra.mxu0 %v4696
    %4808 = vmatpush.bf16.msra.mxu0 %v4694
    %4809 = vmatpush.bf16.msra.mxu0 %v4692
    %4810 = vmatpush.bf16.msra.mxu0 %v4690
    %4811 = vmatpush.bf16.msra.mxu0 %v4688
    %4812 = vmatpush.bf16.msra.mxu0 %v4686
    %4813 = vmatmul.bf16.gmra.mxu0 %v4373
    %v4814 = vpop.f32.mrf.mxu0
    %v4815 = vadd.f32 %v4802, %v4814
    %v4816 = vpop.f32.mrf.mxu0
    %4817 = vdwg.mxu0
    %4818 = vmatpush.bf16.msra.mxu0 %v4653
    %4819 = vmatpush.bf16.msra.mxu0 %v4651
    %4820 = vmatpush.bf16.msra.mxu0 %v4649
    %4821 = vmatpush.bf16.msra.mxu0 %v4647
    %4822 = vmatpush.bf16.msra.mxu0 %v4645
    %4823 = vmatpush.bf16.msra.mxu0 %v4643
    %4824 = vmatpush.bf16.msra.mxu0 %v4641
    %4825 = vmatpush.bf16.msra.mxu0 %v4639
    %4826 = vmatmul.bf16.gmra.mxu0 %v4365
    %v4827 = vpop.f32.mrf.mxu0
    %v4828 = vadd.f32 %v4443, %v4827
    %v4829 = vpop.f32.mrf.mxu0
    %4830 = vdwg.mxu0
    %4831 = vmatpush.bf16.msra.mxu0 %v4669
    %4832 = vmatpush.bf16.msra.mxu0 %v4667
    %4833 = vmatpush.bf16.msra.mxu0 %v4665
    %4834 = vmatpush.bf16.msra.mxu0 %v4663
    %4835 = vmatpush.bf16.msra.mxu0 %v4661
    %4836 = vmatpush.bf16.msra.mxu0 %v4659
    %4837 = vmatpush.bf16.msra.mxu0 %v4657
    %4838 = vmatpush.bf16.msra.mxu0 %v4655
    %4839 = vmatmul.bf16.gmra.mxu0 %v4366
    %v4840 = vpop.f32.mrf.mxu0
    %v4841 = vadd.f32 %v4828, %v4840
    %v4842 = vpop.f32.mrf.mxu0
    %4843 = vdwg.mxu0
    %4844 = vmatpush.bf16.msra.mxu0 %v4685
    %4845 = vmatpush.bf16.msra.mxu0 %v4683
    %4846 = vmatpush.bf16.msra.mxu0 %v4681
    %4847 = vmatpush.bf16.msra.mxu0 %v4679
    %4848 = vmatpush.bf16.msra.mxu0 %v4677
    %4849 = vmatpush.bf16.msra.mxu0 %v4675
    %4850 = vmatpush.bf16.msra.mxu0 %v4673
    %4851 = vmatpush.bf16.msra.mxu0 %v4671
    %4852 = vmatmul.bf16.gmra.mxu0 %v4372
    %v4853 = vpop.f32.mrf.mxu0
    %v4854 = vadd.f32 %v4841, %v4853
    %v4855 = vpop.f32.mrf.mxu0
    %4856 = vdwg.mxu0
    %4857 = vmatpush.bf16.msra.mxu0 %v4701
    %4858 = vmatpush.bf16.msra.mxu0 %v4699
    %4859 = vmatpush.bf16.msra.mxu0 %v4697
    %4860 = vmatpush.bf16.msra.mxu0 %v4695
    %4861 = vmatpush.bf16.msra.mxu0 %v4693
    %4862 = vmatpush.bf16.msra.mxu0 %v4691
    %4863 = vmatpush.bf16.msra.mxu0 %v4689
    %4864 = vmatpush.bf16.msra.mxu0 %v4687
    %4865 = vmatmul.bf16.gmra.mxu0 %v4373
    %v4866 = vpop.f32.mrf.mxu0
    %v4867 = vadd.f32 %v4854, %v4866
    %v4868 = vpop.f32.mrf.mxu0
    %4869 = vdwg.mxu0
    %v4870 = vmax.f32 %v4815, 0.0
    %v4871 = vmax.f32 %v4867, 0.0
    %v4872 = vpack.c.bf16 %v4870, %v4870
    %v4873 = vpack.c.bf16 %v4871, %v4871
    %v4874 = vld [vmem:[#allocation12] sm:$0xf]
    %v4875 = vld [vmem:[#allocation12 + $0x4] sm:$0xf]
    %v4876 = vld [vmem:[#allocation12 + $0x8] sm:$0xf]
    %v4877 = vld [vmem:[#allocation12 + $0xc] sm:$0xf]
    %v4878 = vld [vmem:[#allocation12 + $0x10] sm:$0xf]
    %v4879 = vld [vmem:[#allocation12 + $0x14] sm:$0xf]
    %v4880 = vld [vmem:[#allocation12 + $0x18] sm:$0xf]
    %v4881 = vld [vmem:[#allocation12 + $0x1c] sm:$0xf]
    %v4882 = vld [vmem:[#allocation12 + $0x20] sm:$0xf]
    %v4883 = vld [vmem:[#allocation12 + $0x24] sm:$0xf]
    %v4884 = vld [vmem:[#allocation12 + $0x28] sm:$0xf]
    %v4885 = vld [vmem:[#allocation12 + $0x2c] sm:$0xf]
    %v4886 = vld [vmem:[#allocation12 + $0x30] sm:$0xf]
    %v4887 = vld [vmem:[#allocation12 + $0x34] sm:$0xf]
    %v4888 = vld [vmem:[#allocation12 + $0x38] sm:$0xf]
    %v4889 = vld [vmem:[#allocation12 + $0x3c] sm:$0xf]
    %v4890 = vld [vmem:[#allocation12 + $0x40] sm:$0xf]
    %v4891 = vld [vmem:[#allocation12 + $0x44] sm:$0xf]
    %v4892 = vld [vmem:[#allocation12 + $0x48] sm:$0xf]
    %v4893 = vld [vmem:[#allocation12 + $0x4c] sm:$0xf]
    %v4894 = vld [vmem:[#allocation12 + $0x50] sm:$0xf]
    %v4895 = vld [vmem:[#allocation12 + $0x54] sm:$0xf]
    %v4896 = vld [vmem:[#allocation12 + $0x58] sm:$0xf]
    %v4897 = vld [vmem:[#allocation12 + $0x5c] sm:$0xf]
    %v4898 = vld [vmem:[#allocation12 + $0x60] sm:$0xf]
    %v4899 = vld [vmem:[#allocation12 + $0x64] sm:$0xf]
    %v4900 = vld [vmem:[#allocation12 + $0x68] sm:$0xf]
    %v4901 = vld [vmem:[#allocation12 + $0x6c] sm:$0xf]
    %v4902 = vld [vmem:[#allocation12 + $0x70] sm:$0xf]
    %v4903 = vld [vmem:[#allocation12 + $0x74] sm:$0xf]
    %v4904 = vld [vmem:[#allocation12 + $0x78] sm:$0xf]
    %v4905 = vld [vmem:[#allocation12 + $0x7c] sm:$0xf]
    %v4906 = vld [vmem:[%s10] sm:$0x1]
    %v4908 = vperm.slane %v4906, 0
    %v4942 = vunpack.c.l.b16 %v4874
    %v4943 = vunpack.c.l.b16 %v4875
    %v4944 = vunpack.c.l.b16 %v4876
    %v4945 = vunpack.c.l.b16 %v4877
    %v4946 = vunpack.c.l.b16 %v4878
    %v4947 = vunpack.c.l.b16 %v4879
    %v4948 = vunpack.c.l.b16 %v4880
    %v4949 = vunpack.c.l.b16 %v4881
    %v4950 = vunpack.c.l.b16 %v4882
    %v4951 = vunpack.c.l.b16 %v4883
    %v4952 = vunpack.c.l.b16 %v4884
    %v4953 = vunpack.c.l.b16 %v4885
    %v4954 = vunpack.c.l.b16 %v4886
    %v4955 = vunpack.c.l.b16 %v4887
    %v4956 = vunpack.c.l.b16 %v4888
    %v4957 = vunpack.c.l.b16 %v4889
    %v4958 = vunpack.c.l.b16 %v4890
    %v4959 = vunpack.c.l.b16 %v4891
    %v4960 = vunpack.c.l.b16 %v4892
    %v4961 = vunpack.c.l.b16 %v4893
    %v4962 = vunpack.c.l.b16 %v4894
    %v4963 = vunpack.c.l.b16 %v4895
    %v4964 = vunpack.c.l.b16 %v4896
    %v4965 = vunpack.c.l.b16 %v4897
    %v4966 = vunpack.c.l.b16 %v4898
    %v4967 = vunpack.c.l.b16 %v4899
    %v4968 = vunpack.c.l.b16 %v4900
    %v4969 = vunpack.c.l.b16 %v4901
    %v4970 = vunpack.c.l.b16 %v4902
    %v4971 = vunpack.c.l.b16 %v4903
    %v4972 = vunpack.c.l.b16 %v4904
    %v4973 = vunpack.c.l.b16 %v4905
    %v4974 = vpack.c.b16 %v4943, %v4942
    %v4975 = vpack.c.b16 %v4945, %v4944
    %v4976 = vpack.c.b16 %v4947, %v4946
    %v4977 = vpack.c.b16 %v4949, %v4948
    %v4978 = vpack.c.b16 %v4951, %v4950
    %v4979 = vpack.c.b16 %v4953, %v4952
    %v4980 = vpack.c.b16 %v4955, %v4954
    %v4981 = vpack.c.b16 %v4957, %v4956
    %v4982 = vpack.c.b16 %v4959, %v4958
    %v4983 = vpack.c.b16 %v4961, %v4960
    %v4984 = vpack.c.b16 %v4963, %v4962
    %v4985 = vpack.c.b16 %v4965, %v4964
    %v4986 = vpack.c.b16 %v4967, %v4966
    %v4987 = vpack.c.b16 %v4969, %v4968
    %v4988 = vpack.c.b16 %v4971, %v4970
    %v4989 = vpack.c.b16 %v4973, %v4972
    %5006 = vmatpush.bf16.msra.mxu0 %v4981
    %5007 = vmatpush.bf16.msra.mxu0 %v4980
    %5008 = vmatpush.bf16.msra.mxu0 %v4979
    %5009 = vmatpush.bf16.msra.mxu0 %v4978
    %5010 = vmatpush.bf16.msra.mxu0 %v4977
    %5011 = vmatpush.bf16.msra.mxu0 %v4976
    %5012 = vmatpush.bf16.msra.mxu0 %v4975
    %5013 = vmatpush.bf16.msra.mxu0 %v4974
    %5014 = vmatmul.bf16.gmra.mxu0 %v4872
    %v5015 = vpop.f32.mrf.mxu0
    %v5016 = vadd.f32 %v4908, %v5015
    %v5017 = vpop.f32.mrf.mxu0
    %5018 = vdwg.mxu0
    %5019 = vmatpush.bf16.msra.mxu0 %v4989
    %5020 = vmatpush.bf16.msra.mxu0 %v4988
    %5021 = vmatpush.bf16.msra.mxu0 %v4987
    %5022 = vmatpush.bf16.msra.mxu0 %v4986
    %5023 = vmatpush.bf16.msra.mxu0 %v4985
    %5024 = vmatpush.bf16.msra.mxu0 %v4984
    %5025 = vmatpush.bf16.msra.mxu0 %v4983
    %5026 = vmatpush.bf16.msra.mxu0 %v4982
    %5027 = vmatmul.bf16.gmra.mxu0 %v4873
    %v5028 = vpop.f32.mrf.mxu0
    %v5029 = vadd.f32 %v5016, %v5028
    %v5030 = vpop.f32.mrf.mxu0
    %5031 = vdwg.mxu0
    %v5032 = vmax.f32 %v5029, 0.0
    %v5033 = vpack.c.bf16 %v5032, %v5032
    %v5034 = vld [vmem:[%s11] sm:$0xf]
    %v5035 = vld [vmem:[%s11 + $0x4] sm:$0xf]
    %v5036 = vld [vmem:[%s11 + $0x8] sm:$0xf]
    %v5037 = vld [vmem:[%s11 + $0xc] sm:$0xf]
    %v5038 = vld [vmem:[%s11 + $0x10] sm:$0xf]
    %v5039 = vld [vmem:[%s11 + $0x14] sm:$0xf]
    %v5040 = vld [vmem:[%s11 + $0x18] sm:$0xf]
    %v5041 = vld [vmem:[%s11 + $0x1c] sm:$0xf]
    %v5042 = vld [vmem:[%s11 + $0x20] sm:$0xf]
    %v5043 = vld [vmem:[%s11 + $0x24] sm:$0xf]
    %v5044 = vld [vmem:[%s11 + $0x28] sm:$0xf]
    %v5045 = vld [vmem:[%s11 + $0x2c] sm:$0xf]
    %v5046 = vld [vmem:[%s11 + $0x30] sm:$0xf]
    %v5047 = vld [vmem:[%s11 + $0x34] sm:$0xf]
    %v5048 = vld [vmem:[%s11 + $0x38] sm:$0xf]
    %v5049 = vld [vmem:[%s11 + $0x3c] sm:$0xf]
    %v5050 = vld [vmem:[%s12] sm:$0x1]
    %v5052 = vperm.slane %v5050, 0
    %v5070 = vunpack.c.l.b16 %v5034
    %v5071 = vunpack.c.l.b16 %v5035
    %v5072 = vunpack.c.l.b16 %v5036
    %v5073 = vunpack.c.l.b16 %v5037
    %v5074 = vunpack.c.l.b16 %v5038
    %v5075 = vunpack.c.l.b16 %v5039
    %v5076 = vunpack.c.l.b16 %v5040
    %v5077 = vunpack.c.l.b16 %v5041
    %v5078 = vunpack.c.l.b16 %v5042
    %v5079 = vunpack.c.l.b16 %v5043
    %v5080 = vunpack.c.l.b16 %v5044
    %v5081 = vunpack.c.l.b16 %v5045
    %v5082 = vunpack.c.l.b16 %v5046
    %v5083 = vunpack.c.l.b16 %v5047
    %v5084 = vunpack.c.l.b16 %v5048
    %v5085 = vunpack.c.l.b16 %v5049
    %v5086 = vpack.c.b16 %v5071, %v5070
    %v5087 = vpack.c.b16 %v5073, %v5072
    %v5088 = vpack.c.b16 %v5075, %v5074
    %v5089 = vpack.c.b16 %v5077, %v5076
    %v5090 = vpack.c.b16 %v5079, %v5078
    %v5091 = vpack.c.b16 %v5081, %v5080
    %v5092 = vpack.c.b16 %v5083, %v5082
    %v5093 = vpack.c.b16 %v5085, %v5084
    %5102 = vmatpush.bf16.msra.mxu0 %v5093
    %5103 = vmatpush.bf16.msra.mxu0 %v5092
    %5104 = vmatpush.bf16.msra.mxu0 %v5091
    %5105 = vmatpush.bf16.msra.mxu0 %v5090
    %5106 = vmatpush.bf16.msra.mxu0 %v5089
    %5107 = vmatpush.bf16.msra.mxu0 %v5088
    %5108 = vmatpush.bf16.msra.mxu0 %v5087
    %5109 = vmatpush.bf16.msra.mxu0 %v5086
    %5110 = vmatmul.bf16.gmra.mxu0 %v5033
    %v5111 = vpop.f32.mrf.mxu0
    %v5112 = vadd.f32 %v5052, %v5111
    %v5113 = vpop.f32.mrf.mxu0
    %5114 = vdwg.mxu0
    %v5115 = vsub.f32 0.0, %v5112
    %v5116 = vmul.f32 %v5115, 1.442695
    %v5117 = vpow.pop %v5116
    %v5118 = vadd.f32 %v5117, 1.0
    %v5119 = vrcp.pop %v5118
    %5120 = vst [vmem:[%s13] sm:$0xff] %v5119
    // Predicated region
    $region66: #{cnn_forward.1} parent=1 // pred_check
      _
    $region67: #{cnn_forward.1} parent=1 // pred_check_branch
      %5122 = sbr.rel (0) target = $region69
    $region68: #{cnn_forward.1} parent=1 // pred_region
      _
    $region69: #{cnn_forward.1} parent=1 // pred_fallthru
      _
    // Predicated region
    $region70: #{cnn_forward.1} parent=1 // pred_check
      _
    $region71: #{cnn_forward.1} parent=1 // pred_check_branch
      %5124 = sbr.rel (0) target = $region73
    $region72: #{cnn_forward.1} parent=1 // pred_region
      _
    $region73: #{cnn_forward.1} parent=1 // pred_fallthru
      _
    %5125 = vsyncpa [#allocation9], 1
    %5126 = vsyncpa [#allocation11], 1

</llo_original>
